<compile_context>
chip_gen: v7x
topology: tpu7x:2x2x1
jax: 0.10.0
libtpu: 0.0.40
codegen_flags: <defaults>
</compile_context>

<pallas_src>
import math
import functools

import jax
import jax.numpy as jnp
from jax.experimental import pallas as pl
from jax.experimental.pallas import tpu as pltpu

# ---- config (mirrors the PyTorch Config) ----
D_MODEL = 20
N_HEADS = 2
DIM_K = D_MODEL // N_HEADS            # 10
DIM_V = D_MODEL // N_HEADS            # 10
HEAD_DIM = DIM_K // N_HEADS           # 5
FFN_HIDDEN = 2048
NORM_FACT = 1.0 / math.sqrt(D_MODEL)
LN_EPS = 1e-5

_CP = pltpu.CompilerParams(dimension_semantics=("arbitrary",))


def _full_spec(shape):
    zeros = (0,) * len(shape)
    return pl.BlockSpec(shape, lambda i: zeros)


# ---------------------------------------------------------------------------
# Pallas kernels
# ---------------------------------------------------------------------------
def _qkv_proj_kernel(x_ref, y_ref, wqk_ref, bqk_ref, wv_ref, bv_ref,
                     qk_ref, v_ref):
    # Q|K = x @ [Wq|Wk] + [bq|bk]   (fused),   V = y @ Wv + bv
    qk_ref[...] = (
        jnp.dot(x_ref[...], wqk_ref[...], preferred_element_type=jnp.float32)
        + bqk_ref[...]
    )
    v_ref[...] = (
        jnp.dot(y_ref[...], wv_ref[...], preferred_element_type=jnp.float32)
        + bv_ref[...]
    )


def _attn_kernel(q_ref, k_ref, v_ref, o_ref, *, scale, n_tiles):
    # All (head, batch) tiles in one program; static unroll (n_tiles = H*B = 4).
    for n in range(n_tiles):
        q = q_ref[n]                      # (S, hd)
        k = k_ref[n]                      # (S, hd)
        v = v_ref[n]                      # (S, hd)
        # contract last dims directly: no explicit k.T materialization.
        s = jax.lax.dot_general(
            q, k, (((1,), (1,)), ((), ())),
            preferred_element_type=jnp.float32) * scale        # (S, S)
        s = s - jnp.max(s, axis=-1, keepdims=True)
        p = jnp.exp(s)
        p = p / jnp.sum(p, axis=-1, keepdims=True)
        o_ref[n] = jnp.dot(p, v, preferred_element_type=jnp.float32)


def _oproj_add_norm_kernel(ctx_ref, wo_ref, bo_ref, res_ref, o_ref, *, batch, seq):
    # out = LayerNorm_{(S,D)}( residual + (ctx @ Wo + bo) )  per batch element
    proj = (
        jnp.dot(ctx_ref[...], wo_ref[...], preferred_element_type=jnp.float32)
        + bo_ref[...]
    )
    z = res_ref[...] + proj                                   # (B*S, D)
    for b in range(batch):                                    # static unroll
        zb = z[b * seq:(b + 1) * seq, :]
        mean = jnp.mean(zb)
        var = jnp.mean((zb - mean) ** 2)
        o_ref[b * seq:(b + 1) * seq, :] = (zb - mean) * jax.lax.rsqrt(var + LN_EPS)


def _ffn_add_norm_kernel(x_ref, w1_ref, b1_ref, w2_ref, b2_ref, o_ref, *, batch, seq):
    # out = LayerNorm_{(S,D)}( x + (relu(x @ W1 + b1) @ W2 + b2) )
    x = x_ref[...]
    h = jnp.dot(x, w1_ref[...], preferred_element_type=jnp.float32) + b1_ref[...]
    h = jnp.maximum(h, 0.0)
    f = jnp.dot(h, w2_ref[...], preferred_element_type=jnp.float32) + b2_ref[...]
    z = x + f
    for b in range(batch):
        zb = z[b * seq:(b + 1) * seq, :]
        mean = jnp.mean(zb)
        var = jnp.mean((zb - mean) ** 2)
        o_ref[b * seq:(b + 1) * seq, :] = (zb - mean) * jax.lax.rsqrt(var + LN_EPS)


# ---------------------------------------------------------------------------
# Pallas wrappers (all grid=(1,), everything resident in VMEM; total < 1 MiB)
# ---------------------------------------------------------------------------
def qkv_projection(x2, y2, wqk, bqk, wv, bv):
    M = x2.shape[0]
    return pl.pallas_call(
        _qkv_proj_kernel,
        out_shape=(jax.ShapeDtypeStruct((M, 2 * DIM_K), jnp.float32),
                   jax.ShapeDtypeStruct((M, DIM_V), jnp.float32)),
        grid=(1,),
        in_specs=[_full_spec((M, D_MODEL)), _full_spec((M, D_MODEL)),
                  _full_spec((D_MODEL, 2 * DIM_K)), _full_spec((1, 2 * DIM_K)),
                  _full_spec((D_MODEL, DIM_V)), _full_spec((1, DIM_V))],
        out_specs=(_full_spec((M, 2 * DIM_K)), _full_spec((M, DIM_V))),
        compiler_params=_CP,
    )(x2, y2, wqk, bqk.reshape(1, -1), wv, bv.reshape(1, -1))


def attention(q3, k3, v3):
    n, S, hd = q3.shape
    spec = _full_spec((n, S, hd))
    return pl.pallas_call(
        functools.partial(_attn_kernel, scale=NORM_FACT, n_tiles=n),
        out_shape=jax.ShapeDtypeStruct((n, S, hd), jnp.float32),
        grid=(1,),
        in_specs=[spec, spec, spec],
        out_specs=spec,
        compiler_params=_CP,
    )(q3, k3, v3)


def out_proj_add_norm(ctx2, wo, bo, resid2, batch, seq):
    M = ctx2.shape[0]
    return pl.pallas_call(
        functools.partial(_oproj_add_norm_kernel, batch=batch, seq=seq),
        out_shape=jax.ShapeDtypeStruct((M, D_MODEL), jnp.float32),
        grid=(1,),
        in_specs=[_full_spec((M, DIM_V)), _full_spec((DIM_V, D_MODEL)),
                  _full_spec((1, D_MODEL)), _full_spec((M, D_MODEL))],
        out_specs=_full_spec((M, D_MODEL)),
        compiler_params=_CP,
    )(ctx2, wo, bo.reshape(1, -1), resid2)


def ffn_add_norm(p, x2, batch, seq):
    M = x2.shape[0]
    H = p["w1"].shape[1]
    return pl.pallas_call(
        functools.partial(_ffn_add_norm_kernel, batch=batch, seq=seq),
        out_shape=jax.ShapeDtypeStruct((M, D_MODEL), jnp.float32),
        grid=(1,),
        in_specs=[_full_spec((M, D_MODEL)),
                  _full_spec((D_MODEL, H)), _full_spec((1, H)),
                  _full_spec((H, D_MODEL)), _full_spec((1, D_MODEL))],
        out_specs=_full_spec((M, D_MODEL)),
        compiler_params=_CP,
    )(x2, p["w1"], p["b1"].reshape(1, H), p["w2"], p["b2"].reshape(1, D_MODEL))


# ---------------------------------------------------------------------------
# Model pieces (glue in plain JAX under jit; hot paths in the kernels above)
# ---------------------------------------------------------------------------
def positional_encoding(seq_len, d_model):
    # literal value formula from the reference:
    #   pe[p, i] = sin( sin(p / 10000**(2i/d)) )  if i even
    #              sin( cos(p / 10000**(2i/d)) )  if i odd
    pos = jnp.arange(seq_len, dtype=jnp.float32)[:, None]
    i = jnp.arange(d_model, dtype=jnp.float32)[None, :]
    angle = pos / jnp.power(10000.0, 2.0 * i / float(d_model))
    inner = jnp.where((jnp.arange(d_model)[None, :] % 2) == 0,
                      jnp.sin(angle), jnp.cos(angle))
    return jnp.sin(inner)


def mha_add_norm(p, x2, y2, batch, seq):
    # Reference MHA: Q = q(x), K = k(x), V = v(y); then buggy-verbatim reshapes.
    qk, v = qkv_projection(x2, y2, p["wqk"], p["bqk"], p["wv"], p["bv"])
    # (B*S, dim_k) -> (-1, B, S, dim_k // n_heads), flattened as (H*B, S, hd):
    q3 = qk[:, :DIM_K].reshape(N_HEADS * batch, seq, HEAD_DIM)
    k3 = qk[:, DIM_K:].reshape(N_HEADS * batch, seq, HEAD_DIM)
    v3 = v.reshape(N_HEADS * batch, seq, HEAD_DIM)
    ctx = attention(q3, k3, v3)                               # (H*B, S, hd)
    # reference: .reshape(B, S, -1) then o(); identical row-major reinterpretation:
    ctx2 = ctx.reshape(batch * seq, DIM_V)
    # fused: output projection + residual add + LayerNorm over (S, D) per batch
    return out_proj_add_norm(ctx2, p["wo"], p["bo"], x2, batch, seq)


def decoder_forward(params, x, encoder_output, pe):
    B, S, D = x.shape
    x = x + pe[None]                                          # x += positional_encoding
    x2 = x.reshape(B * S, D)
    enc2 = encoder_output.reshape(B * S, D)
    mha = params["mha"]
    out2 = mha_add_norm(mha, x2, x2, B, S)        # self-attn (ref mask is a no-op)
    out2 = mha_add_norm(mha, out2, enc2, B, S)    # cross-attn (shared weights, as in ref)
    out2 = ffn_add_norm(params["ffn"], out2, B, S)
    return out2.reshape(B, S, D)


# ---------------------------------------------------------------------------
# Deterministic parameter init (torch.nn.Linear-style uniform bounds)
# ---------------------------------------------------------------------------
def init_linear(key, fan_in, fan_out):
    kw, kb = jax.random.split(key)
    bound = 1.0 / math.sqrt(fan_in)
    w = jax.random.uniform(kw, (fan_in, fan_out), jnp.float32, -bound, bound)
    b = jax.random.uniform(kb, (fan_out,), jnp.float32, -bound, bound)
    return w, b


def init_params(key):
    ks = jax.random.split(key, 6)
    wq, bq = init_linear(ks[0], D_MODEL, DIM_K)
    wk, bk = init_linear(ks[1], D_MODEL, DIM_K)
    wv, bv = init_linear(ks[2], D_MODEL, DIM_V)
    wo, bo = init_linear(ks[3], DIM_V, D_MODEL)
    w1, b1 = init_linear(ks[4], D_MODEL, FFN_HIDDEN)
    w2, b2 = init_linear(ks[5], FFN_HIDDEN, D_MODEL)
    return {
        "mha": {
            "wqk": jnp.concatenate([wq, wk], axis=1),   # fused Q|K projection weight
            "bqk": jnp.concatenate([bq, bk], axis=0),
            "wv": wv, "bv": bv, "wo": wo, "bo": bo,
        },
        "ffn": {"w1": w1, "b1": b1, "w2": w2, "b2": b2},
    }


if __name__ == "__main__":
    B, S = 2, 8
    key = jax.random.PRNGKey(0)
    kx, ke = jax.random.split(key)
    x = jax.random.normal(kx, (B, S, D_MODEL), jnp.float32)
    encoder_output = jax.random.normal(ke, (B, S, D_MODEL), jnp.float32)

    params = init_params(jax.random.PRNGKey(42))
    pe = positional_encoding(S, D_MODEL)          # input-independent, computed once

    fwd = jax.jit(decoder_forward)
    out = fwd(params, x, encoder_output, pe)
    jax.block_until_ready(out)
    assert out.shape == (B, S, D_MODEL)
    print("KERNEL_OK")
</pallas_src>

<mosaic_0001>
module attributes {stable_mosaic.version = 11 : i64} {
  func.func @_qkv_proj_kernel(%arg0: i32, %arg1: memref<16x20xf32, #tpu.memory_space<vmem>>, %arg2: memref<16x20xf32, #tpu.memory_space<vmem>>, %arg3: memref<20x20xf32, #tpu.memory_space<vmem>>, %arg4: memref<1x20xf32, #tpu.memory_space<vmem>>, %arg5: memref<20x10xf32, #tpu.memory_space<vmem>>, %arg6: memref<1x10xf32, #tpu.memory_space<vmem>>, %arg7: memref<16x20xf32, #tpu.memory_space<vmem>>, %arg8: memref<16x10xf32, #tpu.memory_space<vmem>>) attributes {dimension_semantics = [#tpu.dimension_semantics<arbitrary>], iteration_bounds = array<i64: 1>, scalar_prefetch = 0 : i64, scratch_operands = 0 : i64, tpu.core_type = #tpu.core_type<tc>, window_params = [{pipeline_mode = #tpu.pipeline_mode<synchronous>, transform_indices = @transform_0, window_bounds = array<i64: 16, 20>}, {pipeline_mode = #tpu.pipeline_mode<synchronous>, transform_indices = @transform_1, window_bounds = array<i64: 16, 20>}, {pipeline_mode = #tpu.pipeline_mode<synchronous>, transform_indices = @transform_2, window_bounds = array<i64: 20, 20>}, {pipeline_mode = #tpu.pipeline_mode<synchronous>, transform_indices = @transform_3, window_bounds = array<i64: 1, 20>}, {pipeline_mode = #tpu.pipeline_mode<synchronous>, transform_indices = @transform_4, window_bounds = array<i64: 20, 10>}, {pipeline_mode = #tpu.pipeline_mode<synchronous>, transform_indices = @transform_5, window_bounds = array<i64: 1, 10>}, {pipeline_mode = #tpu.pipeline_mode<synchronous>, transform_indices = @transform_6, window_bounds = array<i64: 16, 20>}, {pipeline_mode = #tpu.pipeline_mode<synchronous>, transform_indices = @transform_7, window_bounds = array<i64: 16, 10>}]} {
    %c0 = arith.constant 0 : index
    %c0_0 = arith.constant 0 : index
    %0 = vector.load %arg1[%c0, %c0_0] : memref<16x20xf32, #tpu.memory_space<vmem>>, vector<16x20xf32>
    %c0_1 = arith.constant 0 : index
    %c0_2 = arith.constant 0 : index
    %1 = vector.load %arg3[%c0_1, %c0_2] : memref<20x20xf32, #tpu.memory_space<vmem>>, vector<20x20xf32>
    %cst = arith.constant dense<0.000000e+00> : vector<16x20xf32>
    %2 = tpu.matmul %0, %1, %cst {dimension_numbers = #tpu.dot_dimension_numbers<[1], [0], [0], [1], [0, 0, 1, 1], [], []>} : vector<16x20xf32>, vector<20x20xf32>, vector<16x20xf32> -> vector<16x20xf32>
    %c0_3 = arith.constant 0 : index
    %c0_4 = arith.constant 0 : index
    %3 = vector.load %arg4[%c0_3, %c0_4] : memref<1x20xf32, #tpu.memory_space<vmem>>, vector<1x20xf32>
    %4 = vector.broadcast %3 : vector<1x20xf32> to vector<16x20xf32>
    %5 = arith.addf %2, %4 : vector<16x20xf32>
    %c0_5 = arith.constant 0 : index
    %c0_6 = arith.constant 0 : index
    %6 = vector.load %arg7[%c0_5, %c0_6] : memref<16x20xf32, #tpu.memory_space<vmem>>, vector<16x20xf32>
    tpu.vector_store %arg7[%c0_5, %c0_6], %5 {strides = array<i32>} : memref<16x20xf32, #tpu.memory_space<vmem>>, vector<16x20xf32>,
    %c0_7 = arith.constant 0 : index
    %c0_8 = arith.constant 0 : index
    %7 = vector.load %arg2[%c0_7, %c0_8] : memref<16x20xf32, #tpu.memory_space<vmem>>, vector<16x20xf32>
    %c0_9 = arith.constant 0 : index
    %c0_10 = arith.constant 0 : index
    %8 = vector.load %arg5[%c0_9, %c0_10] : memref<20x10xf32, #tpu.memory_space<vmem>>, vector<20x10xf32>
    %cst_11 = arith.constant dense<0.000000e+00> : vector<16x10xf32>
    %9 = tpu.matmul %7, %8, %cst_11 {dimension_numbers = #tpu.dot_dimension_numbers<[1], [0], [0], [1], [0, 0, 1, 1], [], []>} : vector<16x20xf32>, vector<20x10xf32>, vector<16x10xf32> -> vector<16x10xf32>
    %c0_12 = arith.constant 0 : index
    %c0_13 = arith.constant 0 : index
    %10 = vector.load %arg6[%c0_12, %c0_13] : memref<1x10xf32, #tpu.memory_space<vmem>>, vector<1x10xf32>
    %11 = vector.broadcast %10 : vector<1x10xf32> to vector<16x10xf32>
    %12 = arith.addf %9, %11 : vector<16x10xf32>
    %c0_14 = arith.constant 0 : index
    %c0_15 = arith.constant 0 : index
    %13 = vector.load %arg8[%c0_14, %c0_15] : memref<16x10xf32, #tpu.memory_space<vmem>>, vector<16x10xf32>
    tpu.vector_store %arg8[%c0_14, %c0_15], %12 {strides = array<i32>} : memref<16x10xf32, #tpu.memory_space<vmem>>, vector<16x10xf32>,
    return
  }
  func.func @transform_0(%arg0: i32) -> (i32, i32) {
    %c0_i32 = arith.constant 0 : i32
    %c0_i32_0 = arith.constant 0 : i32
    %c0_i32_1 = arith.constant 0 : i32
    return %c0_i32, %c0_i32_0 : i32, i32
  }
  func.func @transform_1(%arg0: i32) -> (i32, i32) {
    %c0_i32 = arith.constant 0 : i32
    %c0_i32_0 = arith.constant 0 : i32
    %c0_i32_1 = arith.constant 0 : i32
    return %c0_i32, %c0_i32_0 : i32, i32
  }
  func.func @transform_2(%arg0: i32) -> (i32, i32) {
    %c0_i32 = arith.constant 0 : i32
    %c0_i32_0 = arith.constant 0 : i32
    %c0_i32_1 = arith.constant 0 : i32
    return %c0_i32, %c0_i32_0 : i32, i32
  }
  func.func @transform_3(%arg0: i32) -> (i32, i32) {
    %c0_i32 = arith.constant 0 : i32
    %c0_i32_0 = arith.constant 0 : i32
    %c0_i32_1 = arith.constant 0 : i32
    return %c0_i32, %c0_i32_0 : i32, i32
  }
  func.func @transform_4(%arg0: i32) -> (i32, i32) {
    %c0_i32 = arith.constant 0 : i32
    %c0_i32_0 = arith.constant 0 : i32
    %c0_i32_1 = arith.constant 0 : i32
    return %c0_i32, %c0_i32_0 : i32, i32
  }
  func.func @transform_5(%arg0: i32) -> (i32, i32) {
    %c0_i32 = arith.constant 0 : i32
    %c0_i32_0 = arith.constant 0 : i32
    %c0_i32_1 = arith.constant 0 : i32
    return %c0_i32, %c0_i32_0 : i32, i32
  }
  func.func @transform_6(%arg0: i32) -> (i32, i32) {
    %c0_i32 = arith.constant 0 : i32
    %c0_i32_0 = arith.constant 0 : i32
    %c0_i32_1 = arith.constant 0 : i32
    return %c0_i32, %c0_i32_0 : i32, i32
  }
  func.func @transform_7(%arg0: i32) -> (i32, i32) {
    %c0_i32 = arith.constant 0 : i32
    %c0_i32_0 = arith.constant 0 : i32
    %c0_i32_1 = arith.constant 0 : i32
    return %c0_i32, %c0_i32_0 : i32, i32
  }
}

module attributes {stable_mosaic.version = 11 : i64} {
  func.func @_attn_kernel(%arg0: i32, %arg1: memref<4x8x5xf32, #tpu.memory_space<vmem>>, %arg2: memref<4x8x5xf32, #tpu.memory_space<vmem>>, %arg3: memref<4x8x5xf32, #tpu.memory_space<vmem>>, %arg4: memref<4x8x5xf32, #tpu.memory_space<vmem>>) attributes {dimension_semantics = [#tpu.dimension_semantics<arbitrary>], iteration_bounds = array<i64: 1>, scalar_prefetch = 0 : i64, scratch_operands = 0 : i64, tpu.core_type = #tpu.core_type<tc>, window_params = [{pipeline_mode = #tpu.pipeline_mode<synchronous>, transform_indices = @transform_0, window_bounds = array<i64: 4, 8, 5>}, {pipeline_mode = #tpu.pipeline_mode<synchronous>, transform_indices = @transform_1, window_bounds = array<i64: 4, 8, 5>}, {pipeline_mode = #tpu.pipeline_mode<synchronous>, transform_indices = @transform_2, window_bounds = array<i64: 4, 8, 5>}, {pipeline_mode = #tpu.pipeline_mode<synchronous>, transform_indices = @transform_3, window_bounds = array<i64: 4, 8, 5>}]} {
    %c0 = arith.constant 0 : index
    %c0_0 = arith.constant 0 : index
    %c0_1 = arith.constant 0 : index
    %0 = vector.load %arg1[%c0, %c0_0, %c0_1] : memref<4x8x5xf32, #tpu.memory_space<vmem>>, vector<1x8x5xf32>
    %1 = vector.shape_cast %0 : vector<1x8x5xf32> to vector<8x5xf32>
    %c0_2 = arith.constant 0 : index
    %c0_3 = arith.constant 0 : index
    %c0_4 = arith.constant 0 : index
    %2 = vector.load %arg2[%c0_2, %c0_3, %c0_4] : memref<4x8x5xf32, #tpu.memory_space<vmem>>, vector<1x8x5xf32>
    %3 = vector.shape_cast %2 : vector<1x8x5xf32> to vector<8x5xf32>
    %c0_5 = arith.constant 0 : index
    %c0_6 = arith.constant 0 : index
    %c0_7 = arith.constant 0 : index
    %4 = vector.load %arg3[%c0_5, %c0_6, %c0_7] : memref<4x8x5xf32, #tpu.memory_space<vmem>>, vector<1x8x5xf32>
    %5 = vector.shape_cast %4 : vector<1x8x5xf32> to vector<8x5xf32>
    %cst = arith.constant dense<0.000000e+00> : vector<8x8xf32>
    %6 = tpu.matmul %1, %3, %cst {dimension_numbers = #tpu.dot_dimension_numbers<[1], [1], [0], [0], [0, 0, 1, 0], [], []>} : vector<8x5xf32>, vector<8x5xf32>, vector<8x8xf32> -> vector<8x8xf32>
    %cst_8 = arith.constant 0.223606795 : f32
    %7 = vector.broadcast %cst_8 : f32 to vector<8x8xf32>
    %8 = arith.mulf %6, %7 : vector<8x8xf32>
    %cst_9 = arith.constant dense<0xFF800000> : vector<8xf32>
    %9 = vector.multi_reduction <maximumf>, %8, %cst_9 [1] : vector<8x8xf32> to vector<8xf32>
    %10 = vector.shape_cast %9 : vector<8xf32> to vector<8x1xf32>
    %11 = vector.broadcast %10 : vector<8x1xf32> to vector<8x8xf32>
    %12 = arith.subf %8, %11 : vector<8x8xf32>
    %13 = math.exp %12 : vector<8x8xf32>
    %cst_10 = arith.constant dense<0.000000e+00> : vector<8xf32>
    %14 = vector.multi_reduction <add>, %13, %cst_10 [1] : vector<8x8xf32> to vector<8xf32>
    %15 = vector.shape_cast %14 : vector<8xf32> to vector<8x1xf32>
    %16 = vector.broadcast %15 : vector<8x1xf32> to vector<8x8xf32>
    %17 = arith.divf %13, %16 : vector<8x8xf32>
    %cst_11 = arith.constant dense<0.000000e+00> : vector<8x5xf32>
    %18 = tpu.matmul %17, %5, %cst_11 {dimension_numbers = #tpu.dot_dimension_numbers<[1], [0], [0], [1], [0, 0, 1, 1], [], []>} : vector<8x8xf32>, vector<8x5xf32>, vector<8x5xf32> -> vector<8x5xf32>
    %c0_12 = arith.constant 0 : index
    %c0_13 = arith.constant 0 : index
    %c0_14 = arith.constant 0 : index
    %19 = vector.load %arg4[%c0_12, %c0_13, %c0_14] : memref<4x8x5xf32, #tpu.memory_space<vmem>>, vector<1x8x5xf32>
    %20 = vector.shape_cast %19 : vector<1x8x5xf32> to vector<8x5xf32>
    %21 = vector.shape_cast %18 : vector<8x5xf32> to vector<1x8x5xf32>
    tpu.vector_store %arg4[%c0_12, %c0_13, %c0_14], %21 {strides = array<i32>} : memref<4x8x5xf32, #tpu.memory_space<vmem>>, vector<1x8x5xf32>,
    %c1 = arith.constant 1 : index
    %c0_15 = arith.constant 0 : index
    %c0_16 = arith.constant 0 : index
    %22 = vector.load %arg1[%c1, %c0_15, %c0_16] : memref<4x8x5xf32, #tpu.memory_space<vmem>>, vector<1x8x5xf32>
    %23 = vector.shape_cast %22 : vector<1x8x5xf32> to vector<8x5xf32>
    %c1_17 = arith.constant 1 : index
    %c0_18 = arith.constant 0 : index
    %c0_19 = arith.constant 0 : index
    %24 = vector.load %arg2[%c1_17, %c0_18, %c0_19] : memref<4x8x5xf32, #tpu.memory_space<vmem>>, vector<1x8x5xf32>
    %25 = vector.shape_cast %24 : vector<1x8x5xf32> to vector<8x5xf32>
    %c1_20 = arith.constant 1 : index
    %c0_21 = arith.constant 0 : index
    %c0_22 = arith.constant 0 : index
    %26 = vector.load %arg3[%c1_20, %c0_21, %c0_22] : memref<4x8x5xf32, #tpu.memory_space<vmem>>, vector<1x8x5xf32>
    %27 = vector.shape_cast %26 : vector<1x8x5xf32> to vector<8x5xf32>
    %cst_23 = arith.constant dense<0.000000e+00> : vector<8x8xf32>
    %28 = tpu.matmul %23, %25, %cst_23 {dimension_numbers = #tpu.dot_dimension_numbers<[1], [1], [0], [0], [0, 0, 1, 0], [], []>} : vector<8x5xf32>, vector<8x5xf32>, vector<8x8xf32> -> vector<8x8xf32>
    %cst_24 = arith.constant 0.223606795 : f32
    %29 = vector.broadcast %cst_24 : f32 to vector<8x8xf32>
    %30 = arith.mulf %28, %29 : vector<8x8xf32>
    %cst_25 = arith.constant dense<0xFF800000> : vector<8xf32>
    %31 = vector.multi_reduction <maximumf>, %30, %cst_25 [1] : vector<8x8xf32> to vector<8xf32>
    %32 = vector.shape_cast %31 : vector<8xf32> to vector<8x1xf32>
    %33 = vector.broadcast %32 : vector<8x1xf32> to vector<8x8xf32>
    %34 = arith.subf %30, %33 : vector<8x8xf32>
    %35 = math.exp %34 : vector<8x8xf32>
    %cst_26 = arith.constant dense<0.000000e+00> : vector<8xf32>
    %36 = vector.multi_reduction <add>, %35, %cst_26 [1] : vector<8x8xf32> to vector<8xf32>
    %37 = vector.shape_cast %36 : vector<8xf32> to vector<8x1xf32>
    %38 = vector.broadcast %37 : vector<8x1xf32> to vector<8x8xf32>
    %39 = arith.divf %35, %38 : vector<8x8xf32>
    %cst_27 = arith.constant dense<0.000000e+00> : vector<8x5xf32>
    %40 = tpu.matmul %39, %27, %cst_27 {dimension_numbers = #tpu.dot_dimension_numbers<[1], [0], [0], [1], [0, 0, 1, 1], [], []>} : vector<8x8xf32>, vector<8x5xf32>, vector<8x5xf32> -> vector<8x5xf32>
    %c1_28 = arith.constant 1 : index
    %c0_29 = arith.constant 0 : index
    %c0_30 = arith.constant 0 : index
    %41 = vector.load %arg4[%c1_28, %c0_29, %c0_30] : memref<4x8x5xf32, #tpu.memory_space<vmem>>, vector<1x8x5xf32>
    %42 = vector.shape_cast %41 : vector<1x8x5xf32> to vector<8x5xf32>
    %43 = vector.shape_cast %40 : vector<8x5xf32> to vector<1x8x5xf32>
    tpu.vector_store %arg4[%c1_28, %c0_29, %c0_30], %43 {strides = array<i32>} : memref<4x8x5xf32, #tpu.memory_space<vmem>>, vector<1x8x5xf32>,
    %c2 = arith.constant 2 : index
    %c0_31 = arith.constant 0 : index
    %c0_32 = arith.constant 0 : index
    %44 = vector.load %arg1[%c2, %c0_31, %c0_32] : memref<4x8x5xf32, #tpu.memory_space<vmem>>, vector<1x8x5xf32>
    %45 = vector.shape_cast %44 : vector<1x8x5xf32> to vector<8x5xf32>
    %c2_33 = arith.constant 2 : index
    %c0_34 = arith.constant 0 : index
    %c0_35 = arith.constant 0 : index
    %46 = vector.load %arg2[%c2_33, %c0_34, %c0_35] : memref<4x8x5xf32, #tpu.memory_space<vmem>>, vector<1x8x5xf32>
    %47 = vector.shape_cast %46 : vector<1x8x5xf32> to vector<8x5xf32>
    %c2_36 = arith.constant 2 : index
    %c0_37 = arith.constant 0 : index
    %c0_38 = arith.constant 0 : index
    %48 = vector.load %arg3[%c2_36, %c0_37, %c0_38] : memref<4x8x5xf32, #tpu.memory_space<vmem>>, vector<1x8x5xf32>
    %49 = vector.shape_cast %48 : vector<1x8x5xf32> to vector<8x5xf32>
    %cst_39 = arith.constant dense<0.000000e+00> : vector<8x8xf32>
    %50 = tpu.matmul %45, %47, %cst_39 {dimension_numbers = #tpu.dot_dimension_numbers<[1], [1], [0], [0], [0, 0, 1, 0], [], []>} : vector<8x5xf32>, vector<8x5xf32>, vector<8x8xf32> -> vector<8x8xf32>
    %cst_40 = arith.constant 0.223606795 : f32
    %51 = vector.broadcast %cst_40 : f32 to vector<8x8xf32>
    %52 = arith.mulf %50, %51 : vector<8x8xf32>
    %cst_41 = arith.constant dense<0xFF800000> : vector<8xf32>
    %53 = vector.multi_reduction <maximumf>, %52, %cst_41 [1] : vector<8x8xf32> to vector<8xf32>
    %54 = vector.shape_cast %53 : vector<8xf32> to vector<8x1xf32>
    %55 = vector.broadcast %54 : vector<8x1xf32> to vector<8x8xf32>
    %56 = arith.subf %52, %55 : vector<8x8xf32>
    %57 = math.exp %56 : vector<8x8xf32>
    %cst_42 = arith.constant dense<0.000000e+00> : vector<8xf32>
    %58 = vector.multi_reduction <add>, %57, %cst_42 [1] : vector<8x8xf32> to vector<8xf32>
    %59 = vector.shape_cast %58 : vector<8xf32> to vector<8x1xf32>
    %60 = vector.broadcast %59 : vector<8x1xf32> to vector<8x8xf32>
    %61 = arith.divf %57, %60 : vector<8x8xf32>
    %cst_43 = arith.constant dense<0.000000e+00> : vector<8x5xf32>
    %62 = tpu.matmul %61, %49, %cst_43 {dimension_numbers = #tpu.dot_dimension_numbers<[1], [0], [0], [1], [0, 0, 1, 1], [], []>} : vector<8x8xf32>, vector<8x5xf32>, vector<8x5xf32> -> vector<8x5xf32>
    %c2_44 = arith.constant 2 : index
    %c0_45 = arith.constant 0 : index
    %c0_46 = arith.constant 0 : index
    %63 = vector.load %arg4[%c2_44, %c0_45, %c0_46] : memref<4x8x5xf32, #tpu.memory_space<vmem>>, vector<1x8x5xf32>
    %64 = vector.shape_cast %63 : vector<1x8x5xf32> to vector<8x5xf32>
    %65 = vector.shape_cast %62 : vector<8x5xf32> to vector<1x8x5xf32>
    tpu.vector_store %arg4[%c2_44, %c0_45, %c0_46], %65 {strides = array<i32>} : memref<4x8x5xf32, #tpu.memory_space<vmem>>, vector<1x8x5xf32>,
    %c3 = arith.constant 3 : index
    %c0_47 = arith.constant 0 : index
    %c0_48 = arith.constant 0 : index
    %66 = vector.load %arg1[%c3, %c0_47, %c0_48] : memref<4x8x5xf32, #tpu.memory_space<vmem>>, vector<1x8x5xf32>
    %67 = vector.shape_cast %66 : vector<1x8x5xf32> to vector<8x5xf32>
    %c3_49 = arith.constant 3 : index
    %c0_50 = arith.constant 0 : index
    %c0_51 = arith.constant 0 : index
    %68 = vector.load %arg2[%c3_49, %c0_50, %c0_51] : memref<4x8x5xf32, #tpu.memory_space<vmem>>, vector<1x8x5xf32>
    %69 = vector.shape_cast %68 : vector<1x8x5xf32> to vector<8x5xf32>
    %c3_52 = arith.constant 3 : index
    %c0_53 = arith.constant 0 : index
    %c0_54 = arith.constant 0 : index
    %70 = vector.load %arg3[%c3_52, %c0_53, %c0_54] : memref<4x8x5xf32, #tpu.memory_space<vmem>>, vector<1x8x5xf32>
    %71 = vector.shape_cast %70 : vector<1x8x5xf32> to vector<8x5xf32>
    %cst_55 = arith.constant dense<0.000000e+00> : vector<8x8xf32>
    %72 = tpu.matmul %67, %69, %cst_55 {dimension_numbers = #tpu.dot_dimension_numbers<[1], [1], [0], [0], [0, 0, 1, 0], [], []>} : vector<8x5xf32>, vector<8x5xf32>, vector<8x8xf32> -> vector<8x8xf32>
    %cst_56 = arith.constant 0.223606795 : f32
    %73 = vector.broadcast %cst_56 : f32 to vector<8x8xf32>
    %74 = arith.mulf %72, %73 : vector<8x8xf32>
    %cst_57 = arith.constant dense<0xFF800000> : vector<8xf32>
    %75 = vector.multi_reduction <maximumf>, %74, %cst_57 [1] : vector<8x8xf32> to vector<8xf32>
    %76 = vector.shape_cast %75 : vector<8xf32> to vector<8x1xf32>
    %77 = vector.broadcast %76 : vector<8x1xf32> to vector<8x8xf32>
    %78 = arith.subf %74, %77 : vector<8x8xf32>
    %79 = math.exp %78 : vector<8x8xf32>
    %cst_58 = arith.constant dense<0.000000e+00> : vector<8xf32>
    %80 = vector.multi_reduction <add>, %79, %cst_58 [1] : vector<8x8xf32> to vector<8xf32>
    %81 = vector.shape_cast %80 : vector<8xf32> to vector<8x1xf32>
    %82 = vector.broadcast %81 : vector<8x1xf32> to vector<8x8xf32>
    %83 = arith.divf %79, %82 : vector<8x8xf32>
    %cst_59 = arith.constant dense<0.000000e+00> : vector<8x5xf32>
    %84 = tpu.matmul %83, %71, %cst_59 {dimension_numbers = #tpu.dot_dimension_numbers<[1], [0], [0], [1], [0, 0, 1, 1], [], []>} : vector<8x8xf32>, vector<8x5xf32>, vector<8x5xf32> -> vector<8x5xf32>
    %c3_60 = arith.constant 3 : index
    %c0_61 = arith.constant 0 : index
    %c0_62 = arith.constant 0 : index
    %85 = vector.load %arg4[%c3_60, %c0_61, %c0_62] : memref<4x8x5xf32, #tpu.memory_space<vmem>>, vector<1x8x5xf32>
    %86 = vector.shape_cast %85 : vector<1x8x5xf32> to vector<8x5xf32>
    %87 = vector.shape_cast %84 : vector<8x5xf32> to vector<1x8x5xf32>
    tpu.vector_store %arg4[%c3_60, %c0_61, %c0_62], %87 {strides = array<i32>} : memref<4x8x5xf32, #tpu.memory_space<vmem>>, vector<1x8x5xf32>,
    return
  }
  func.func @transform_0(%arg0: i32) -> (i32, i32, i32) {
    %c0_i32 = arith.constant 0 : i32
    %c0_i32_0 = arith.constant 0 : i32
    %c0_i32_1 = arith.constant 0 : i32
    %c0_i32_2 = arith.constant 0 : i32
    return %c0_i32, %c0_i32_0, %c0_i32_1 : i32, i32, i32
  }
  func.func @transform_1(%arg0: i32) -> (i32, i32, i32) {
    %c0_i32 = arith.constant 0 : i32
    %c0_i32_0 = arith.constant 0 : i32
    %c0_i32_1 = arith.constant 0 : i32
    %c0_i32_2 = arith.constant 0 : i32
    return %c0_i32, %c0_i32_0, %c0_i32_1 : i32, i32, i32
  }
  func.func @transform_2(%arg0: i32) -> (i32, i32, i32) {
    %c0_i32 = arith.constant 0 : i32
    %c0_i32_0 = arith.constant 0 : i32
    %c0_i32_1 = arith.constant 0 : i32
    %c0_i32_2 = arith.constant 0 : i32
    return %c0_i32, %c0_i32_0, %c0_i32_1 : i32, i32, i32
  }
  func.func @transform_3(%arg0: i32) -> (i32, i32, i32) {
    %c0_i32 = arith.constant 0 : i32
    %c0_i32_0 = arith.constant 0 : i32
    %c0_i32_1 = arith.constant 0 : i32
    %c0_i32_2 = arith.constant 0 : i32
    return %c0_i32, %c0_i32_0, %c0_i32_1 : i32, i32, i32
  }
}

module attributes {stable_mosaic.version = 11 : i64} {
  func.func @_oproj_add_norm_kernel(%arg0: i32, %arg1: memref<16x10xf32, #tpu.memory_space<vmem>>, %arg2: memref<10x20xf32, #tpu.memory_space<vmem>>, %arg3: memref<1x20xf32, #tpu.memory_space<vmem>>, %arg4: memref<16x20xf32, #tpu.memory_space<vmem>>, %arg5: memref<16x20xf32, #tpu.memory_space<vmem>>) attributes {dimension_semantics = [#tpu.dimension_semantics<arbitrary>], iteration_bounds = array<i64: 1>, scalar_prefetch = 0 : i64, scratch_operands = 0 : i64, tpu.core_type = #tpu.core_type<tc>, window_params = [{pipeline_mode = #tpu.pipeline_mode<synchronous>, transform_indices = @transform_0, window_bounds = array<i64: 16, 10>}, {pipeline_mode = #tpu.pipeline_mode<synchronous>, transform_indices = @transform_1, window_bounds = array<i64: 10, 20>}, {pipeline_mode = #tpu.pipeline_mode<synchronous>, transform_indices = @transform_2, window_bounds = array<i64: 1, 20>}, {pipeline_mode = #tpu.pipeline_mode<synchronous>, transform_indices = @transform_3, window_bounds = array<i64: 16, 20>}, {pipeline_mode = #tpu.pipeline_mode<synchronous>, transform_indices = @transform_4, window_bounds = array<i64: 16, 20>}]} {
    %c0 = arith.constant 0 : index
    %c0_0 = arith.constant 0 : index
    %0 = vector.load %arg1[%c0, %c0_0] : memref<16x10xf32, #tpu.memory_space<vmem>>, vector<16x10xf32>
    %c0_1 = arith.constant 0 : index
    %c0_2 = arith.constant 0 : index
    %1 = vector.load %arg2[%c0_1, %c0_2] : memref<10x20xf32, #tpu.memory_space<vmem>>, vector<10x20xf32>
    %cst = arith.constant dense<0.000000e+00> : vector<16x20xf32>
    %2 = tpu.matmul %0, %1, %cst {dimension_numbers = #tpu.dot_dimension_numbers<[1], [0], [0], [1], [0, 0, 1, 1], [], []>} : vector<16x10xf32>, vector<10x20xf32>, vector<16x20xf32> -> vector<16x20xf32>
    %c0_3 = arith.constant 0 : index
    %c0_4 = arith.constant 0 : index
    %3 = vector.load %arg3[%c0_3, %c0_4] : memref<1x20xf32, #tpu.memory_space<vmem>>, vector<1x20xf32>
    %4 = vector.broadcast %3 : vector<1x20xf32> to vector<16x20xf32>
    %5 = arith.addf %2, %4 : vector<16x20xf32>
    %c0_5 = arith.constant 0 : index
    %c0_6 = arith.constant 0 : index
    %6 = vector.load %arg4[%c0_5, %c0_6] : memref<16x20xf32, #tpu.memory_space<vmem>>, vector<16x20xf32>
    %7 = arith.addf %6, %5 : vector<16x20xf32>
    %8 = vector.extract_strided_slice %7 {offsets = [0, 0], sizes = [8, 20], strides = [1, 1]} : vector<16x20xf32> to vector<8x20xf32>
    %9 = vector.shape_cast %8 : vector<8x20xf32> to vector<1x8x20xf32>
    %cst_7 = arith.constant dense<0.000000e+00> : vector<1xf32>
    %10 = vector.multi_reduction <add>, %9, %cst_7 [1, 2] : vector<1x8x20xf32> to vector<1xf32>
    %11 = vector.shape_cast %10 : vector<1xf32> to vector<1x1x1xf32>
    %12 = vector.extract %11[0, 0, 0] : f32 from vector<1x1x1xf32>
    %cst_8 = arith.constant 1.600000e+02 : f32
    %13 = arith.divf %12, %cst_8 : f32
    %14 = vector.broadcast %13 : f32 to vector<8x20xf32>
    %15 = arith.subf %8, %14 : vector<8x20xf32>
    %16 = arith.mulf %15, %15 : vector<8x20xf32>
    %17 = vector.shape_cast %16 : vector<8x20xf32> to vector<1x8x20xf32>
    %cst_9 = arith.constant dense<0.000000e+00> : vector<1xf32>
    %18 = vector.multi_reduction <add>, %17, %cst_9 [1, 2] : vector<1x8x20xf32> to vector<1xf32>
    %19 = vector.shape_cast %18 : vector<1xf32> to vector<1x1x1xf32>
    %20 = vector.extract %19[0, 0, 0] : f32 from vector<1x1x1xf32>
    %cst_10 = arith.constant 1.600000e+02 : f32
    %21 = arith.divf %20, %cst_10 : f32
    %22 = vector.broadcast %13 : f32 to vector<8x20xf32>
    %23 = arith.subf %8, %22 : vector<8x20xf32>
    %cst_11 = arith.constant 9.99999974E-6 : f32
    %24 = arith.addf %21, %cst_11 : f32
    %25 = math.rsqrt %24 : f32
    %26 = vector.broadcast %25 : f32 to vector<8x20xf32>
    %27 = arith.mulf %23, %26 : vector<8x20xf32>
    %c0_12 = arith.constant 0 : index
    %c0_13 = arith.constant 0 : index
    %28 = vector.load %arg5[%c0_12, %c0_13] : memref<16x20xf32, #tpu.memory_space<vmem>>, vector<8x20xf32>
    tpu.vector_store %arg5[%c0_12, %c0_13], %27 {strides = array<i32>} : memref<16x20xf32, #tpu.memory_space<vmem>>, vector<8x20xf32>,
    %29 = vector.extract_strided_slice %7 {offsets = [8, 0], sizes = [8, 20], strides = [1, 1]} : vector<16x20xf32> to vector<8x20xf32>
    %30 = vector.shape_cast %29 : vector<8x20xf32> to vector<1x8x20xf32>
    %cst_14 = arith.constant dense<0.000000e+00> : vector<1xf32>
    %31 = vector.multi_reduction <add>, %30, %cst_14 [1, 2] : vector<1x8x20xf32> to vector<1xf32>
    %32 = vector.shape_cast %31 : vector<1xf32> to vector<1x1x1xf32>
    %33 = vector.extract %32[0, 0, 0] : f32 from vector<1x1x1xf32>
    %cst_15 = arith.constant 1.600000e+02 : f32
    %34 = arith.divf %33, %cst_15 : f32
    %35 = vector.broadcast %34 : f32 to vector<8x20xf32>
    %36 = arith.subf %29, %35 : vector<8x20xf32>
    %37 = arith.mulf %36, %36 : vector<8x20xf32>
    %38 = vector.shape_cast %37 : vector<8x20xf32> to vector<1x8x20xf32>
    %cst_16 = arith.constant dense<0.000000e+00> : vector<1xf32>
    %39 = vector.multi_reduction <add>, %38, %cst_16 [1, 2] : vector<1x8x20xf32> to vector<1xf32>
    %40 = vector.shape_cast %39 : vector<1xf32> to vector<1x1x1xf32>
    %41 = vector.extract %40[0, 0, 0] : f32 from vector<1x1x1xf32>
    %cst_17 = arith.constant 1.600000e+02 : f32
    %42 = arith.divf %41, %cst_17 : f32
    %43 = vector.broadcast %34 : f32 to vector<8x20xf32>
    %44 = arith.subf %29, %43 : vector<8x20xf32>
    %cst_18 = arith.constant 9.99999974E-6 : f32
    %45 = arith.addf %42, %cst_18 : f32
    %46 = math.rsqrt %45 : f32
    %47 = vector.broadcast %46 : f32 to vector<8x20xf32>
    %48 = arith.mulf %44, %47 : vector<8x20xf32>
    %c8 = arith.constant 8 : index
    %c0_19 = arith.constant 0 : index
    %49 = vector.load %arg5[%c8, %c0_19] : memref<16x20xf32, #tpu.memory_space<vmem>>, vector<8x20xf32>
    tpu.vector_store %arg5[%c8, %c0_19], %48 {strides = array<i32>} : memref<16x20xf32, #tpu.memory_space<vmem>>, vector<8x20xf32>,
    return
  }
  func.func @transform_0(%arg0: i32) -> (i32, i32) {
    %c0_i32 = arith.constant 0 : i32
    %c0_i32_0 = arith.constant 0 : i32
    %c0_i32_1 = arith.constant 0 : i32
    return %c0_i32, %c0_i32_0 : i32, i32
  }
  func.func @transform_1(%arg0: i32) -> (i32, i32) {
    %c0_i32 = arith.constant 0 : i32
    %c0_i32_0 = arith.constant 0 : i32
    %c0_i32_1 = arith.constant 0 : i32
    return %c0_i32, %c0_i32_0 : i32, i32
  }
  func.func @transform_2(%arg0: i32) -> (i32, i32) {
    %c0_i32 = arith.constant 0 : i32
    %c0_i32_0 = arith.constant 0 : i32
    %c0_i32_1 = arith.constant 0 : i32
    return %c0_i32, %c0_i32_0 : i32, i32
  }
  func.func @transform_3(%arg0: i32) -> (i32, i32) {
    %c0_i32 = arith.constant 0 : i32
    %c0_i32_0 = arith.constant 0 : i32
    %c0_i32_1 = arith.constant 0 : i32
    return %c0_i32, %c0_i32_0 : i32, i32
  }
  func.func @transform_4(%arg0: i32) -> (i32, i32) {
    %c0_i32 = arith.constant 0 : i32
    %c0_i32_0 = arith.constant 0 : i32
    %c0_i32_1 = arith.constant 0 : i32
    return %c0_i32, %c0_i32_0 : i32, i32
  }
}

module attributes {stable_mosaic.version = 11 : i64} {
  func.func @_ffn_add_norm_kernel(%arg0: i32, %arg1: memref<16x20xf32, #tpu.memory_space<vmem>>, %arg2: memref<20x2048xf32, #tpu.memory_space<vmem>>, %arg3: memref<1x2048xf32, #tpu.memory_space<vmem>>, %arg4: memref<2048x20xf32, #tpu.memory_space<vmem>>, %arg5: memref<1x20xf32, #tpu.memory_space<vmem>>, %arg6: memref<16x20xf32, #tpu.memory_space<vmem>>) attributes {dimension_semantics = [#tpu.dimension_semantics<arbitrary>], iteration_bounds = array<i64: 1>, scalar_prefetch = 0 : i64, scratch_operands = 0 : i64, tpu.core_type = #tpu.core_type<tc>, window_params = [{pipeline_mode = #tpu.pipeline_mode<synchronous>, transform_indices = @transform_0, window_bounds = array<i64: 16, 20>}, {pipeline_mode = #tpu.pipeline_mode<synchronous>, transform_indices = @transform_1, window_bounds = array<i64: 20, 2048>}, {pipeline_mode = #tpu.pipeline_mode<synchronous>, transform_indices = @transform_2, window_bounds = array<i64: 1, 2048>}, {pipeline_mode = #tpu.pipeline_mode<synchronous>, transform_indices = @transform_3, window_bounds = array<i64: 2048, 20>}, {pipeline_mode = #tpu.pipeline_mode<synchronous>, transform_indices = @transform_4, window_bounds = array<i64: 1, 20>}, {pipeline_mode = #tpu.pipeline_mode<synchronous>, transform_indices = @transform_5, window_bounds = array<i64: 16, 20>}]} {
    %c0 = arith.constant 0 : index
    %c0_0 = arith.constant 0 : index
    %0 = vector.load %arg1[%c0, %c0_0] : memref<16x20xf32, #tpu.memory_space<vmem>>, vector<16x20xf32>
    %c0_1 = arith.constant 0 : index
    %c0_2 = arith.constant 0 : index
    %1 = vector.load %arg2[%c0_1, %c0_2] : memref<20x2048xf32, #tpu.memory_space<vmem>>, vector<20x2048xf32>
    %cst = arith.constant dense<0.000000e+00> : vector<16x2048xf32>
    %2 = tpu.matmul %0, %1, %cst {dimension_numbers = #tpu.dot_dimension_numbers<[1], [0], [0], [1], [0, 0, 1, 1], [], []>} : vector<16x20xf32>, vector<20x2048xf32>, vector<16x2048xf32> -> vector<16x2048xf32>
    %c0_3 = arith.constant 0 : index
    %c0_4 = arith.constant 0 : index
    %3 = vector.load %arg3[%c0_3, %c0_4] : memref<1x2048xf32, #tpu.memory_space<vmem>>, vector<1x2048xf32>
    %4 = vector.broadcast %3 : vector<1x2048xf32> to vector<16x2048xf32>
    %5 = arith.addf %2, %4 : vector<16x2048xf32>
    %cst_5 = arith.constant 0.000000e+00 : f32
    %6 = vector.broadcast %cst_5 : f32 to vector<16x2048xf32>
    %7 = arith.maximumf %5, %6 : vector<16x2048xf32>
    %c0_6 = arith.constant 0 : index
    %c0_7 = arith.constant 0 : index
    %8 = vector.load %arg4[%c0_6, %c0_7] : memref<2048x20xf32, #tpu.memory_space<vmem>>, vector<2048x20xf32>
    %cst_8 = arith.constant dense<0.000000e+00> : vector<16x20xf32>
    %9 = tpu.matmul %7, %8, %cst_8 {dimension_numbers = #tpu.dot_dimension_numbers<[1], [0], [0], [1], [0, 0, 1, 1], [], []>} : vector<16x2048xf32>, vector<2048x20xf32>, vector<16x20xf32> -> vector<16x20xf32>
    %c0_9 = arith.constant 0 : index
    %c0_10 = arith.constant 0 : index
    %10 = vector.load %arg5[%c0_9, %c0_10] : memref<1x20xf32, #tpu.memory_space<vmem>>, vector<1x20xf32>
    %11 = vector.broadcast %10 : vector<1x20xf32> to vector<16x20xf32>
    %12 = arith.addf %9, %11 : vector<16x20xf32>
    %13 = arith.addf %0, %12 : vector<16x20xf32>
    %14 = vector.extract_strided_slice %13 {offsets = [0, 0], sizes = [8, 20], strides = [1, 1]} : vector<16x20xf32> to vector<8x20xf32>
    %15 = vector.shape_cast %14 : vector<8x20xf32> to vector<1x8x20xf32>
    %cst_11 = arith.constant dense<0.000000e+00> : vector<1xf32>
    %16 = vector.multi_reduction <add>, %15, %cst_11 [1, 2] : vector<1x8x20xf32> to vector<1xf32>
    %17 = vector.shape_cast %16 : vector<1xf32> to vector<1x1x1xf32>
    %18 = vector.extract %17[0, 0, 0] : f32 from vector<1x1x1xf32>
    %cst_12 = arith.constant 1.600000e+02 : f32
    %19 = arith.divf %18, %cst_12 : f32
    %20 = vector.broadcast %19 : f32 to vector<8x20xf32>
    %21 = arith.subf %14, %20 : vector<8x20xf32>
    %22 = arith.mulf %21, %21 : vector<8x20xf32>
    %23 = vector.shape_cast %22 : vector<8x20xf32> to vector<1x8x20xf32>
    %cst_13 = arith.constant dense<0.000000e+00> : vector<1xf32>
    %24 = vector.multi_reduction <add>, %23, %cst_13 [1, 2] : vector<1x8x20xf32> to vector<1xf32>
    %25 = vector.shape_cast %24 : vector<1xf32> to vector<1x1x1xf32>
    %26 = vector.extract %25[0, 0, 0] : f32 from vector<1x1x1xf32>
    %cst_14 = arith.constant 1.600000e+02 : f32
    %27 = arith.divf %26, %cst_14 : f32
    %28 = vector.broadcast %19 : f32 to vector<8x20xf32>
    %29 = arith.subf %14, %28 : vector<8x20xf32>
    %cst_15 = arith.constant 9.99999974E-6 : f32
    %30 = arith.addf %27, %cst_15 : f32
    %31 = math.rsqrt %30 : f32
    %32 = vector.broadcast %31 : f32 to vector<8x20xf32>
    %33 = arith.mulf %29, %32 : vector<8x20xf32>
    %c0_16 = arith.constant 0 : index
    %c0_17 = arith.constant 0 : index
    %34 = vector.load %arg6[%c0_16, %c0_17] : memref<16x20xf32, #tpu.memory_space<vmem>>, vector<8x20xf32>
    tpu.vector_store %arg6[%c0_16, %c0_17], %33 {strides = array<i32>} : memref<16x20xf32, #tpu.memory_space<vmem>>, vector<8x20xf32>,
    %35 = vector.extract_strided_slice %13 {offsets = [8, 0], sizes = [8, 20], strides = [1, 1]} : vector<16x20xf32> to vector<8x20xf32>
    %36 = vector.shape_cast %35 : vector<8x20xf32> to vector<1x8x20xf32>
    %cst_18 = arith.constant dense<0.000000e+00> : vector<1xf32>
    %37 = vector.multi_reduction <add>, %36, %cst_18 [1, 2] : vector<1x8x20xf32> to vector<1xf32>
    %38 = vector.shape_cast %37 : vector<1xf32> to vector<1x1x1xf32>
    %39 = vector.extract %38[0, 0, 0] : f32 from vector<1x1x1xf32>
    %cst_19 = arith.constant 1.600000e+02 : f32
    %40 = arith.divf %39, %cst_19 : f32
    %41 = vector.broadcast %40 : f32 to vector<8x20xf32>
    %42 = arith.subf %35, %41 : vector<8x20xf32>
    %43 = arith.mulf %42, %42 : vector<8x20xf32>
    %44 = vector.shape_cast %43 : vector<8x20xf32> to vector<1x8x20xf32>
    %cst_20 = arith.constant dense<0.000000e+00> : vector<1xf32>
    %45 = vector.multi_reduction <add>, %44, %cst_20 [1, 2] : vector<1x8x20xf32> to vector<1xf32>
    %46 = vector.shape_cast %45 : vector<1xf32> to vector<1x1x1xf32>
    %47 = vector.extract %46[0, 0, 0] : f32 from vector<1x1x1xf32>
    %cst_21 = arith.constant 1.600000e+02 : f32
    %48 = arith.divf %47, %cst_21 : f32
    %49 = vector.broadcast %40 : f32 to vector<8x20xf32>
    %50 = arith.subf %35, %49 : vector<8x20xf32>
    %cst_22 = arith.constant 9.99999974E-6 : f32
    %51 = arith.addf %48, %cst_22 : f32
    %52 = math.rsqrt %51 : f32
    %53 = vector.broadcast %52 : f32 to vector<8x20xf32>
    %54 = arith.mulf %50, %53 : vector<8x20xf32>
    %c8 = arith.constant 8 : index
    %c0_23 = arith.constant 0 : index
    %55 = vector.load %arg6[%c8, %c0_23] : memref<16x20xf32, #tpu.memory_space<vmem>>, vector<8x20xf32>
    tpu.vector_store %arg6[%c8, %c0_23], %54 {strides = array<i32>} : memref<16x20xf32, #tpu.memory_space<vmem>>, vector<8x20xf32>,
    return
  }
  func.func @transform_0(%arg0: i32) -> (i32, i32) {
    %c0_i32 = arith.constant 0 : i32
    %c0_i32_0 = arith.constant 0 : i32
    %c0_i32_1 = arith.constant 0 : i32
    return %c0_i32, %c0_i32_0 : i32, i32
  }
  func.func @transform_1(%arg0: i32) -> (i32, i32) {
    %c0_i32 = arith.constant 0 : i32
    %c0_i32_0 = arith.constant 0 : i32
    %c0_i32_1 = arith.constant 0 : i32
    return %c0_i32, %c0_i32_0 : i32, i32
  }
  func.func @transform_2(%arg0: i32) -> (i32, i32) {
    %c0_i32 = arith.constant 0 : i32
    %c0_i32_0 = arith.constant 0 : i32
    %c0_i32_1 = arith.constant 0 : i32
    return %c0_i32, %c0_i32_0 : i32, i32
  }
  func.func @transform_3(%arg0: i32) -> (i32, i32) {
    %c0_i32 = arith.constant 0 : i32
    %c0_i32_0 = arith.constant 0 : i32
    %c0_i32_1 = arith.constant 0 : i32
    return %c0_i32, %c0_i32_0 : i32, i32
  }
  func.func @transform_4(%arg0: i32) -> (i32, i32) {
    %c0_i32 = arith.constant 0 : i32
    %c0_i32_0 = arith.constant 0 : i32
    %c0_i32_1 = arith.constant 0 : i32
    return %c0_i32, %c0_i32_0 : i32, i32
  }
  func.func @transform_5(%arg0: i32) -> (i32, i32) {
    %c0_i32 = arith.constant 0 : i32
    %c0_i32_0 = arith.constant 0 : i32
    %c0_i32_1 = arith.constant 0 : i32
    return %c0_i32, %c0_i32_0 : i32, i32
  }
}

</mosaic_0001>

<llo_original>
// kernel: decoder_forward.7
$region0: #{decoder_forward.7}
  #allocation0 [shape = 'u32[]', space=smem, size = 0x4, offset = 0x4, fixed_abs, tag = 'smem constant byte address 0x4 - core index']
  #allocation1 [shape = 'u32[144,128]{1,0:T(1,128)}', space=vmem, size = 0x12000, scoped, tag = 'internal scratch']
  %s0 = inlined_call_operand.vmem [shape: f32[16,20], index: 0, kind: input, shape index: {}, may-alias: {0,1}]
  %s1 = inlined_call_operand.vmem [shape: f32[16,20], index: 1, kind: input, shape index: {}, may-alias: {0,1}]
  %s2 = inlined_call_operand.vmem [shape: f32[20,20], index: 2, kind: input, shape index: {}]
  %s3 = inlined_call_operand.vmem [shape: f32[1,20], index: 3, kind: input, shape index: {}]
  %s4 = inlined_call_operand.vmem [shape: f32[20,10], index: 4, kind: input, shape index: {}]
  %s5 = inlined_call_operand.vmem [shape: f32[1,10], index: 5, kind: input, shape index: {}]
  %s6 = inlined_call_operand.vmem [shape: f32[16,20], index: 6, kind: output, shape index: {0}]
  %s7 = inlined_call_operand.vmem [shape: f32[16,10], index: 7, kind: output, shape index: {1}]
  %8 = xla_tuple %s6, %s7
  %s9 = sld [smem:[#allocation0]]
  $region42: #{decoder_forward.7} parent=0
    _
  %s11 = ssub.s32 1, %s9
  %s12 = scalar_select 0, %s11, %s9
  // Predicated region
  $region2: #{decoder_forward.7} parent=0 // pred_check
    _
  $region3: #{decoder_forward.7} parent=0 // pred_check_branch
    %14 = sbr.rel (0) target = $region5
  $region4: #{decoder_forward.7} parent=0 // pred_region
    _
  $region5: #{decoder_forward.7} parent=0 // pred_fallthru
    _
  // Predicated region
  $region6: #{decoder_forward.7} parent=0 // pred_check
    _
  $region7: #{decoder_forward.7} parent=0 // pred_check_branch
    %16 = sbr.rel (0) target = $region9
  $region8: #{decoder_forward.7} parent=0 // pred_region
    _
  $region9: #{decoder_forward.7} parent=0 // pred_fallthru
    _
  // Predicated region
  $region10: #{decoder_forward.7} parent=0 // pred_check
    _
  $region11: #{decoder_forward.7} parent=0 // pred_check_branch
    %18 = sbr.rel (0) target = $region13
  $region12: #{decoder_forward.7} parent=0 // pred_region
    _
  $region13: #{decoder_forward.7} parent=0 // pred_fallthru
    _
  // Predicated region
  $region14: #{decoder_forward.7} parent=0 // pred_check
    _
  $region15: #{decoder_forward.7} parent=0 // pred_check_branch
    %20 = sbr.rel (0) target = $region17
  $region16: #{decoder_forward.7} parent=0 // pred_region
    _
  $region17: #{decoder_forward.7} parent=0 // pred_fallthru
    _
  // Predicated region
  $region18: #{decoder_forward.7} parent=0 // pred_check
    _
  $region19: #{decoder_forward.7} parent=0 // pred_check_branch
    %22 = sbr.rel (0) target = $region21
  $region20: #{decoder_forward.7} parent=0 // pred_region
    _
  $region21: #{decoder_forward.7} parent=0 // pred_fallthru
    _
  // Predicated region
  $region22: #{decoder_forward.7} parent=0 // pred_check
    _
  $region23: #{decoder_forward.7} parent=0 // pred_check_branch
    %24 = sbr.rel (0) target = $region25
  $region24: #{decoder_forward.7} parent=0 // pred_region
    _
  $region25: #{decoder_forward.7} parent=0 // pred_fallthru
    _
  %v25 = vld [vmem:[%s0] sm:$0xff]
  %v26 = vld [vmem:[%s0 + $0x8] sm:$0xff]
  %v27 = vld [vmem:[%s2] sm:$0xff]
  %v28 = vld [vmem:[%s2 + $0x8] sm:$0xff]
  %v29 = vld [vmem:[%s2 + $0x10] sm:$0xf]
  %v30 = vld [vmem:[%s3] sm:$0x1]
  %v32 = vlaneseq
  %v33 = vshrl.u32 %v32, 7
  %v34 = vsub.s32 0, %v33
  %v35 = vrot.slane %v30, %v34
  %vm37 = vcmask 162816
  %v39 = vsel %vm37, %v25, 0
  %v42 = vsel %vm37, %v26, 0
  %vm44 = vcmask 1043456
  %v46 = vsel %vm44, %v29, 0
  %48 = vmatprep.subr.mxu0 0.0
  %49 = vmatpush1.msra.mxu0 %v27
  %50 = vmatprep.subr.mxu0 0.0
  %51 = vmatpush1.msra.mxu0 %v28
  %52 = vmatprep.subr.mxu0 0.0
  %53 = vmatpush1.msra.mxu0 %v46
  %54 = vmatprep.subr.mxu0 0.0
  %55 = vmatpush1.msra.mxu0 0.0
  %56 = vmatprep.subr.mxu0 0.0
  %57 = vmatpush1.msra.mxu0 0.0
  %58 = vmatprep.subr.mxu0 0.0
  %59 = vmatpush1.msra.mxu0 0.0
  %60 = vmatprep.subr.mxu0 0.0
  %61 = vmatpush1.msra.mxu0 0.0
  %62 = vmatprep.subr.mxu0 0.0
  %63 = vmatpush1.msra.mxu0 0.0
  %64 = vmatprep.subr.mxu0 0.0
  %65 = vmatpush1.msra.mxu0 0.0
  %66 = vmatprep.subr.mxu0 0.0
  %67 = vmatpush1.msra.mxu0 0.0
  %68 = vmatprep.subr.mxu0 0.0
  %69 = vmatpush1.msra.mxu0 0.0
  %70 = vmatprep.subr.mxu0 0.0
  %71 = vmatpush1.msra.mxu0 0.0
  %72 = vmatprep.subr.mxu0 0.0
  %73 = vmatpush1.msra.mxu0 0.0
  %74 = vmatprep.subr.mxu0 0.0
  %75 = vmatpush1.msra.mxu0 0.0
  %76 = vmatprep.subr.mxu0 0.0
  %77 = vmatpush1.msra.mxu0 0.0
  %78 = vmatprep.subr.mxu0 0.0
  %79 = vmatpush1.msra.mxu0 0.0
  %80 = vmatprep.subr.mxu0 0.0
  %81 = vmatpush1.msra.mxu0 0.0
  %82 = vmatprep.subr.mxu0 0.0
  %83 = vmatpush1.msra.mxu0 0.0
  %84 = vmatprep.subr.mxu0 0.0
  %85 = vmatpush1.msra.mxu0 0.0
  %86 = vmatprep.subr.mxu0 0.0
  %87 = vmatpush1.msra.mxu0 0.0
  %88 = vmatprep.subr.mxu0 0.0
  %89 = vmatpush1.msra.mxu0 0.0
  %90 = vmatprep.subr.mxu0 0.0
  %91 = vmatpush1.msra.mxu0 0.0
  %92 = vmatprep.subr.mxu0 0.0
  %93 = vmatpush1.msra.mxu0 0.0
  %94 = vmatprep.subr.mxu0 0.0
  %95 = vmatpush1.msra.mxu0 0.0
  %96 = vmatprep.subr.mxu0 0.0
  %97 = vmatpush1.msra.mxu0 0.0
  %98 = vmatprep.subr.mxu0 0.0
  %99 = vmatpush1.msra.mxu0 0.0
  %100 = vmatprep.subr.mxu0 0.0
  %101 = vmatpush1.msra.mxu0 0.0
  %102 = vmatprep.subr.mxu0 0.0
  %103 = vmatpush1.msra.mxu0 0.0
  %104 = vmatprep.subr.mxu0 0.0
  %105 = vmatpush1.msra.mxu0 0.0
  %106 = vmatprep.subr.mxu0 0.0
  %107 = vmatpush1.msra.mxu0 0.0
  %108 = vmatprep.subr.mxu0 0.0
  %109 = vmatpush1.msra.mxu0 0.0
  %110 = vmatprep.subr.mxu0 0.0
  %111 = vmatpush1.msra.mxu0 0.0
  %112 = vmatprep.mubr.f32.mxu0 0.0
  %113 = vmatmul.mubr.f32.gmra.mrb[0].mxu0 %v39
  %v114 = vpop.f32.mrb[0].mxu0
  %v115 = vadd.f32 %v35, %v114
  %v116 = vpop.f32.mrb[0].mxu0
  %117 = vmatprep.mubr.f32.mxu0 0.0
  %118 = vmatmul.mubr.f32.gmra.mrb[0].mxu0 %v42
  %v119 = vpop.f32.mrb[0].mxu0
  %v120 = vadd.f32 %v35, %v119
  %v121 = vpop.f32.mrb[0].mxu0
  %122 = vdwg.mxu0
  %123 = vst.msk [vmem:[%s6] sm:$0xff] %vm37, %v115
  %124 = vst.msk [vmem:[%s6 + $0x8] sm:$0xff] %vm37, %v120
  %v125 = vld [vmem:[%s1] sm:$0xff]
  %v126 = vld [vmem:[%s1 + $0x8] sm:$0xff]
  %v127 = vld [vmem:[%s4] sm:$0xff]
  %v128 = vld [vmem:[%s4 + $0x8] sm:$0xff]
  %v129 = vld [vmem:[%s4 + $0x10] sm:$0xf]
  %v130 = vld [vmem:[%s5] sm:$0x1]
  %v132 = vlaneseq
  %v133 = vshrl.u32 %v132, 7
  %v134 = vsub.s32 0, %v133
  %v135 = vrot.slane %v130, %v134
  %v138 = vsel %vm37, %v125, 0
  %v141 = vsel %vm37, %v126, 0
  %v144 = vsel %vm44, %v129, 0
  %146 = vmatprep.subr.mxu0 0.0
  %147 = vmatpush1.msra.mxu0 %v127
  %148 = vmatprep.subr.mxu0 0.0
  %149 = vmatpush1.msra.mxu0 %v128
  %150 = vmatprep.subr.mxu0 0.0
  %151 = vmatpush1.msra.mxu0 %v144
  %152 = vmatprep.subr.mxu0 0.0
  %153 = vmatpush1.msra.mxu0 0.0
  %154 = vmatprep.subr.mxu0 0.0
  %155 = vmatpush1.msra.mxu0 0.0
  %156 = vmatprep.subr.mxu0 0.0
  %157 = vmatpush1.msra.mxu0 0.0
  %158 = vmatprep.subr.mxu0 0.0
  %159 = vmatpush1.msra.mxu0 0.0
  %160 = vmatprep.subr.mxu0 0.0
  %161 = vmatpush1.msra.mxu0 0.0
  %162 = vmatprep.subr.mxu0 0.0
  %163 = vmatpush1.msra.mxu0 0.0
  %164 = vmatprep.subr.mxu0 0.0
  %165 = vmatpush1.msra.mxu0 0.0
  %166 = vmatprep.subr.mxu0 0.0
  %167 = vmatpush1.msra.mxu0 0.0
  %168 = vmatprep.subr.mxu0 0.0
  %169 = vmatpush1.msra.mxu0 0.0
  %170 = vmatprep.subr.mxu0 0.0
  %171 = vmatpush1.msra.mxu0 0.0
  %172 = vmatprep.subr.mxu0 0.0
  %173 = vmatpush1.msra.mxu0 0.0
  %174 = vmatprep.subr.mxu0 0.0
  %175 = vmatpush1.msra.mxu0 0.0
  %176 = vmatprep.subr.mxu0 0.0
  %177 = vmatpush1.msra.mxu0 0.0
  %178 = vmatprep.subr.mxu0 0.0
  %179 = vmatpush1.msra.mxu0 0.0
  %180 = vmatprep.subr.mxu0 0.0
  %181 = vmatpush1.msra.mxu0 0.0
  %182 = vmatprep.subr.mxu0 0.0
  %183 = vmatpush1.msra.mxu0 0.0
  %184 = vmatprep.subr.mxu0 0.0
  %185 = vmatpush1.msra.mxu0 0.0
  %186 = vmatprep.subr.mxu0 0.0
  %187 = vmatpush1.msra.mxu0 0.0
  %188 = vmatprep.subr.mxu0 0.0
  %189 = vmatpush1.msra.mxu0 0.0
  %190 = vmatprep.subr.mxu0 0.0
  %191 = vmatpush1.msra.mxu0 0.0
  %192 = vmatprep.subr.mxu0 0.0
  %193 = vmatpush1.msra.mxu0 0.0
  %194 = vmatprep.subr.mxu0 0.0
  %195 = vmatpush1.msra.mxu0 0.0
  %196 = vmatprep.subr.mxu0 0.0
  %197 = vmatpush1.msra.mxu0 0.0
  %198 = vmatprep.subr.mxu0 0.0
  %199 = vmatpush1.msra.mxu0 0.0
  %200 = vmatprep.subr.mxu0 0.0
  %201 = vmatpush1.msra.mxu0 0.0
  %202 = vmatprep.subr.mxu0 0.0
  %203 = vmatpush1.msra.mxu0 0.0
  %204 = vmatprep.subr.mxu0 0.0
  %205 = vmatpush1.msra.mxu0 0.0
  %206 = vmatprep.subr.mxu0 0.0
  %207 = vmatpush1.msra.mxu0 0.0
  %208 = vmatprep.subr.mxu0 0.0
  %209 = vmatpush1.msra.mxu0 0.0
  %210 = vmatprep.mubr.f32.mxu0 0.0
  %211 = vmatmul.mubr.f32.gmra.mrb[0].mxu0 %v138
  %v212 = vpop.f32.mrb[0].mxu0
  %v213 = vadd.f32 %v135, %v212
  %v214 = vpop.f32.mrb[0].mxu0
  %215 = vmatprep.mubr.f32.mxu0 0.0
  %216 = vmatmul.mubr.f32.gmra.mrb[0].mxu0 %v141
  %v217 = vpop.f32.mrb[0].mxu0
  %v218 = vadd.f32 %v135, %v217
  %v219 = vpop.f32.mrb[0].mxu0
  %220 = vdwg.mxu0
  %vm221 = vcmask 80896
  %222 = vst.msk [vmem:[%s7] sm:$0xff] %vm221, %v213
  %223 = vst.msk [vmem:[%s7 + $0x8] sm:$0xff] %vm221, %v218
  // Predicated region
  $region26: #{decoder_forward.7} parent=0 // pred_check
    _
  $region27: #{decoder_forward.7} parent=0 // pred_check_branch
    %225 = sbr.rel (0) target = $region29
  $region28: #{decoder_forward.7} parent=0 // pred_region
    _
  $region29: #{decoder_forward.7} parent=0 // pred_fallthru
    _
  // Predicated region
  $region30: #{decoder_forward.7} parent=0 // pred_check
    _
  $region31: #{decoder_forward.7} parent=0 // pred_check_branch
    %227 = sbr.rel (0) target = $region33
  $region32: #{decoder_forward.7} parent=0 // pred_region
    _
  $region33: #{decoder_forward.7} parent=0 // pred_fallthru
    _
  // Predicated region
  $region34: #{decoder_forward.7} parent=0 // pred_check
    _
  $region35: #{decoder_forward.7} parent=0 // pred_check_branch
    %229 = sbr.rel (0) target = $region37
  $region36: #{decoder_forward.7} parent=0 // pred_region
    _
  $region37: #{decoder_forward.7} parent=0 // pred_fallthru
    _
  // Predicated region
  $region38: #{decoder_forward.7} parent=0 // pred_check
    _
  $region39: #{decoder_forward.7} parent=0 // pred_check_branch
    %231 = sbr.rel (0) target = $region41
  $region40: #{decoder_forward.7} parent=0 // pred_region
    _
  $region41: #{decoder_forward.7} parent=0 // pred_fallthru
    _

// kernel: decoder_forward.9
$region0: #{decoder_forward.9}
  #allocation0 [shape = 'u32[]', space=smem, size = 0x4, offset = 0x4, fixed_abs, tag = 'smem constant byte address 0x4 - core index']
  #allocation1 [shape = 'u32[144,128]{1,0:T(1,128)}', space=vmem, size = 0x12000, scoped, tag = 'internal scratch']
  %s0 = inlined_call_operand.vmem [shape: f32[16,10], index: 0, kind: input, shape index: {}]
  %s1 = inlined_call_operand.vmem [shape: f32[10,20], index: 1, kind: input, shape index: {}]
  %s2 = inlined_call_operand.vmem [shape: f32[1,20], index: 2, kind: input, shape index: {}]
  %s3 = inlined_call_operand.vmem [shape: f32[16,20], index: 3, kind: input, shape index: {}]
  %s4 = inlined_call_operand.vmem [shape: f32[16,20], index: 4, kind: output, shape index: {}]
  %s5 = sld [smem:[#allocation0]]
  $region26: #{decoder_forward.9} parent=0
    _
  %s7 = ssub.s32 1, %s5
  %s8 = scalar_select 0, %s7, %s5
  // Predicated region
  $region2: #{decoder_forward.9} parent=0 // pred_check
    _
  $region3: #{decoder_forward.9} parent=0 // pred_check_branch
    %10 = sbr.rel (0) target = $region5
  $region4: #{decoder_forward.9} parent=0 // pred_region
    _
  $region5: #{decoder_forward.9} parent=0 // pred_fallthru
    _
  // Predicated region
  $region6: #{decoder_forward.9} parent=0 // pred_check
    _
  $region7: #{decoder_forward.9} parent=0 // pred_check_branch
    %12 = sbr.rel (0) target = $region9
  $region8: #{decoder_forward.9} parent=0 // pred_region
    _
  $region9: #{decoder_forward.9} parent=0 // pred_fallthru
    _
  // Predicated region
  $region10: #{decoder_forward.9} parent=0 // pred_check
    _
  $region11: #{decoder_forward.9} parent=0 // pred_check_branch
    %14 = sbr.rel (0) target = $region13
  $region12: #{decoder_forward.9} parent=0 // pred_region
    _
  $region13: #{decoder_forward.9} parent=0 // pred_fallthru
    _
  // Predicated region
  $region14: #{decoder_forward.9} parent=0 // pred_check
    _
  $region15: #{decoder_forward.9} parent=0 // pred_check_branch
    %16 = sbr.rel (0) target = $region17
  $region16: #{decoder_forward.9} parent=0 // pred_region
    _
  $region17: #{decoder_forward.9} parent=0 // pred_fallthru
    _
  %v17 = vld [vmem:[%s0] sm:$0xff]
  %v18 = vld [vmem:[%s0 + $0x8] sm:$0xff]
  %v19 = vld [vmem:[%s1] sm:$0xff]
  %v20 = vld [vmem:[%s1 + $0x8] sm:$0x3]
  %v21 = vld [vmem:[%s2] sm:$0x1]
  %v23 = vlaneseq
  %v24 = vshrl.u32 %v23, 7
  %v25 = vsub.s32 0, %v24
  %v26 = vrot.slane %v21, %v25
  %vm28 = vcmask 80896
  %v30 = vsel %vm28, %v17, 0
  %v33 = vsel %vm28, %v18, 0
  %vm35 = vcmask 1041408
  %v37 = vsel %vm35, %v20, 0
  %39 = vmatprep.subr.mxu0 0.0
  %40 = vmatpush1.msra.mxu0 %v19
  %41 = vmatprep.subr.mxu0 0.0
  %42 = vmatpush1.msra.mxu0 %v37
  %43 = vmatprep.subr.mxu0 0.0
  %44 = vmatpush1.msra.mxu0 0.0
  %45 = vmatprep.subr.mxu0 0.0
  %46 = vmatpush1.msra.mxu0 0.0
  %47 = vmatprep.subr.mxu0 0.0
  %48 = vmatpush1.msra.mxu0 0.0
  %49 = vmatprep.subr.mxu0 0.0
  %50 = vmatpush1.msra.mxu0 0.0
  %51 = vmatprep.subr.mxu0 0.0
  %52 = vmatpush1.msra.mxu0 0.0
  %53 = vmatprep.subr.mxu0 0.0
  %54 = vmatpush1.msra.mxu0 0.0
  %55 = vmatprep.subr.mxu0 0.0
  %56 = vmatpush1.msra.mxu0 0.0
  %57 = vmatprep.subr.mxu0 0.0
  %58 = vmatpush1.msra.mxu0 0.0
  %59 = vmatprep.subr.mxu0 0.0
  %60 = vmatpush1.msra.mxu0 0.0
  %61 = vmatprep.subr.mxu0 0.0
  %62 = vmatpush1.msra.mxu0 0.0
  %63 = vmatprep.subr.mxu0 0.0
  %64 = vmatpush1.msra.mxu0 0.0
  %65 = vmatprep.subr.mxu0 0.0
  %66 = vmatpush1.msra.mxu0 0.0
  %67 = vmatprep.subr.mxu0 0.0
  %68 = vmatpush1.msra.mxu0 0.0
  %69 = vmatprep.subr.mxu0 0.0
  %70 = vmatpush1.msra.mxu0 0.0
  %71 = vmatprep.subr.mxu0 0.0
  %72 = vmatpush1.msra.mxu0 0.0
  %73 = vmatprep.subr.mxu0 0.0
  %74 = vmatpush1.msra.mxu0 0.0
  %75 = vmatprep.subr.mxu0 0.0
  %76 = vmatpush1.msra.mxu0 0.0
  %77 = vmatprep.subr.mxu0 0.0
  %78 = vmatpush1.msra.mxu0 0.0
  %79 = vmatprep.subr.mxu0 0.0
  %80 = vmatpush1.msra.mxu0 0.0
  %81 = vmatprep.subr.mxu0 0.0
  %82 = vmatpush1.msra.mxu0 0.0
  %83 = vmatprep.subr.mxu0 0.0
  %84 = vmatpush1.msra.mxu0 0.0
  %85 = vmatprep.subr.mxu0 0.0
  %86 = vmatpush1.msra.mxu0 0.0
  %87 = vmatprep.subr.mxu0 0.0
  %88 = vmatpush1.msra.mxu0 0.0
  %89 = vmatprep.subr.mxu0 0.0
  %90 = vmatpush1.msra.mxu0 0.0
  %91 = vmatprep.subr.mxu0 0.0
  %92 = vmatpush1.msra.mxu0 0.0
  %93 = vmatprep.subr.mxu0 0.0
  %94 = vmatpush1.msra.mxu0 0.0
  %95 = vmatprep.subr.mxu0 0.0
  %96 = vmatpush1.msra.mxu0 0.0
  %97 = vmatprep.subr.mxu0 0.0
  %98 = vmatpush1.msra.mxu0 0.0
  %99 = vmatprep.subr.mxu0 0.0
  %100 = vmatpush1.msra.mxu0 0.0
  %101 = vmatprep.subr.mxu0 0.0
  %102 = vmatpush1.msra.mxu0 0.0
  %103 = vmatprep.mubr.f32.mxu0 0.0
  %104 = vmatmul.mubr.f32.gmra.mrb[0].mxu0 %v30
  %v105 = vpop.f32.mrb[0].mxu0
  %v106 = vadd.f32 %v26, %v105
  %v107 = vpop.f32.mrb[0].mxu0
  %108 = vmatprep.mubr.f32.mxu0 0.0
  %109 = vmatmul.mubr.f32.gmra.mrb[0].mxu0 %v33
  %v110 = vpop.f32.mrb[0].mxu0
  %v111 = vadd.f32 %v26, %v110
  %v112 = vpop.f32.mrb[0].mxu0
  %113 = vdwg.mxu0
  %v114 = vld [vmem:[%s3] sm:$0xff]
  %v115 = vld [vmem:[%s3 + $0x8] sm:$0xff]
  %v116 = vadd.f32 %v114, %v106
  %v117 = vadd.f32 %v115, %v111
  %vm118 = vcmask 162816
  %v119 = vsel %vm118, %v116, 0.0
  %120 = vadd.xlane.f32.xlu0 %v119
  %v121 = vpop.xlane.xlu0 %120
  %v122 = vrot.slane %v121, 4
  %v123 = vadd.f32 %v121, %v122
  %v124 = vrot.slane %v123, 2
  %v125 = vadd.f32 %v123, %v124
  %v126 = vrot.slane %v125, 1
  %v127 = vadd.f32 %v125, %v126
  %s128 = vtos %v127
  %v129 = vrcp.pop 160.0
  %s130 = vtos %v129
  %s131 = smul.f32 %s128, %s130
  %v132 = vstv %s131
  %v133 = vsub.f32 %v116, %v132
  %v134 = vmul.f32 %v133, %v133
  %v135 = vsel %vm118, %v134, 0.0
  %136 = vadd.xlane.f32.xlu0 %v135
  %v137 = vpop.xlane.xlu0 %136
  %v138 = vrot.slane %v137, 4
  %v139 = vadd.f32 %v137, %v138
  %v140 = vrot.slane %v139, 2
  %v141 = vadd.f32 %v139, %v140
  %v142 = vrot.slane %v141, 1
  %v143 = vadd.f32 %v141, %v142
  %s144 = vtos %v143
  %v145 = vrcp.pop 160.0
  %s146 = vtos %v145
  %s147 = smul.f32 %s144, %s146
  %s148 = sadd.f32 %s147, 1e-05
  %v149 = vstv %s148
  %v150 = vrsqrt.pop %v149
  %s151 = vtos %v150
  %v152 = vstv %s151
  %v153 = vmul.f32 %v133, %v152
  %154 = vst.msk [vmem:[%s4] sm:$0xff] %vm118, %v153
  %v155 = vsel %vm118, %v117, 0.0
  %156 = vadd.xlane.f32.xlu0 %v155
  %v157 = vpop.xlane.xlu0 %156
  %v158 = vrot.slane %v157, 4
  %v159 = vadd.f32 %v157, %v158
  %v160 = vrot.slane %v159, 2
  %v161 = vadd.f32 %v159, %v160
  %v162 = vrot.slane %v161, 1
  %v163 = vadd.f32 %v161, %v162
  %s164 = vtos %v163
  %v165 = vrcp.pop 160.0
  %s166 = vtos %v165
  %s167 = smul.f32 %s164, %s166
  %v168 = vstv %s167
  %v169 = vsub.f32 %v117, %v168
  %v170 = vmul.f32 %v169, %v169
  %v171 = vsel %vm118, %v170, 0.0
  %172 = vadd.xlane.f32.xlu0 %v171
  %v173 = vpop.xlane.xlu0 %172
  %v174 = vrot.slane %v173, 4
  %v175 = vadd.f32 %v173, %v174
  %v176 = vrot.slane %v175, 2
  %v177 = vadd.f32 %v175, %v176
  %v178 = vrot.slane %v177, 1
  %v179 = vadd.f32 %v177, %v178
  %s180 = vtos %v179
  %v181 = vrcp.pop 160.0
  %s182 = vtos %v181
  %s183 = smul.f32 %s180, %s182
  %s184 = sadd.f32 %s183, 1e-05
  %v185 = vstv %s184
  %v186 = vrsqrt.pop %v185
  %s187 = vtos %v186
  %v188 = vstv %s187
  %v189 = vmul.f32 %v169, %v188
  %190 = vst.msk [vmem:[%s4 + $0x8] sm:$0xff] %vm118, %v189
  // Predicated region
  $region18: #{decoder_forward.9} parent=0 // pred_check
    _
  $region19: #{decoder_forward.9} parent=0 // pred_check_branch
    %192 = sbr.rel (0) target = $region21
  $region20: #{decoder_forward.9} parent=0 // pred_region
    _
  $region21: #{decoder_forward.9} parent=0 // pred_fallthru
    _
  // Predicated region
  $region22: #{decoder_forward.9} parent=0 // pred_check
    _
  $region23: #{decoder_forward.9} parent=0 // pred_check_branch
    %194 = sbr.rel (0) target = $region25
  $region24: #{decoder_forward.9} parent=0 // pred_region
    _
  $region25: #{decoder_forward.9} parent=0 // pred_fallthru
    _

// kernel: decoder_forward.8
$region0: #{decoder_forward.8}
  #allocation0 [shape = 'u32[]', space=smem, size = 0x4, offset = 0x4, fixed_abs, tag = 'smem constant byte address 0x4 - core index']
  #allocation1 [shape = 'u32[144,128]{1,0:T(1,128)}', space=vmem, size = 0x12000, scoped, tag = 'internal scratch']
  %s0 = inlined_call_operand.vmem [shape: f32[4,8,5], index: 0, kind: input, shape index: {}]
  %s1 = inlined_call_operand.vmem [shape: f32[4,8,5], index: 1, kind: input, shape index: {}]
  %s2 = inlined_call_operand.vmem [shape: f32[4,8,5], index: 2, kind: input, shape index: {}]
  %s3 = inlined_call_operand.vmem [shape: f32[4,8,5], index: 3, kind: output, shape index: {}]
  %s4 = sld [smem:[#allocation0]]
  $region22: #{decoder_forward.8} parent=0
    _
  %s6 = ssub.s32 1, %s4
  %s7 = scalar_select 0, %s6, %s4
  // Predicated region
  $region2: #{decoder_forward.8} parent=0 // pred_check
    _
  $region3: #{decoder_forward.8} parent=0 // pred_check_branch
    %9 = sbr.rel (0) target = $region5
  $region4: #{decoder_forward.8} parent=0 // pred_region
    _
  $region5: #{decoder_forward.8} parent=0 // pred_fallthru
    _
  // Predicated region
  $region6: #{decoder_forward.8} parent=0 // pred_check
    _
  $region7: #{decoder_forward.8} parent=0 // pred_check_branch
    %11 = sbr.rel (0) target = $region9
  $region8: #{decoder_forward.8} parent=0 // pred_region
    _
  $region9: #{decoder_forward.8} parent=0 // pred_fallthru
    _
  // Predicated region
  $region10: #{decoder_forward.8} parent=0 // pred_check
    _
  $region11: #{decoder_forward.8} parent=0 // pred_check_branch
    %13 = sbr.rel (0) target = $region13
  $region12: #{decoder_forward.8} parent=0 // pred_region
    _
  $region13: #{decoder_forward.8} parent=0 // pred_fallthru
    _
  %v14 = vld [vmem:[%s0] sm:$0xff]
  %v15 = vld [vmem:[%s1] sm:$0xff]
  %v16 = vld [vmem:[%s2] sm:$0xff]
  %vm17 = vcmask 39936
  %v19 = vsel %vm17, %v14, 0
  %v22 = vsel %vm17, %v15, 0
  %24 = vmatprep.subr.mxu0 0.0
  %25 = vmatpush1.xpose.msra.mxu0 %v22
  %26 = vmatprep.subr.mxu0 0.0
  %27 = vmatpush1.xpose.msra.mxu0 0.0
  %28 = vmatprep.subr.mxu0 0.0
  %29 = vmatpush1.xpose.msra.mxu0 0.0
  %30 = vmatprep.subr.mxu0 0.0
  %31 = vmatpush1.xpose.msra.mxu0 0.0
  %32 = vmatprep.subr.mxu0 0.0
  %33 = vmatpush1.xpose.msra.mxu0 0.0
  %34 = vmatprep.subr.mxu0 0.0
  %35 = vmatpush1.xpose.msra.mxu0 0.0
  %36 = vmatprep.subr.mxu0 0.0
  %37 = vmatpush1.xpose.msra.mxu0 0.0
  %38 = vmatprep.subr.mxu0 0.0
  %39 = vmatpush1.xpose.msra.mxu0 0.0
  %40 = vmatprep.subr.mxu0 0.0
  %41 = vmatpush1.xpose.msra.mxu0 0.0
  %42 = vmatprep.subr.mxu0 0.0
  %43 = vmatpush1.xpose.msra.mxu0 0.0
  %44 = vmatprep.subr.mxu0 0.0
  %45 = vmatpush1.xpose.msra.mxu0 0.0
  %46 = vmatprep.subr.mxu0 0.0
  %47 = vmatpush1.xpose.msra.mxu0 0.0
  %48 = vmatprep.subr.mxu0 0.0
  %49 = vmatpush1.xpose.msra.mxu0 0.0
  %50 = vmatprep.subr.mxu0 0.0
  %51 = vmatpush1.xpose.msra.mxu0 0.0
  %52 = vmatprep.subr.mxu0 0.0
  %53 = vmatpush1.xpose.msra.mxu0 0.0
  %54 = vmatprep.subr.mxu0 0.0
  %55 = vmatpush1.xpose.msra.mxu0 0.0
  %56 = vmatprep.subr.mxu0 0.0
  %57 = vmatpush1.xpose.msra.mxu0 0.0
  %58 = vmatprep.subr.mxu0 0.0
  %59 = vmatpush1.xpose.msra.mxu0 0.0
  %60 = vmatprep.subr.mxu0 0.0
  %61 = vmatpush1.xpose.msra.mxu0 0.0
  %62 = vmatprep.subr.mxu0 0.0
  %63 = vmatpush1.xpose.msra.mxu0 0.0
  %64 = vmatprep.subr.mxu0 0.0
  %65 = vmatpush1.xpose.msra.mxu0 0.0
  %66 = vmatprep.subr.mxu0 0.0
  %67 = vmatpush1.xpose.msra.mxu0 0.0
  %68 = vmatprep.subr.mxu0 0.0
  %69 = vmatpush1.xpose.msra.mxu0 0.0
  %70 = vmatprep.subr.mxu0 0.0
  %71 = vmatpush1.xpose.msra.mxu0 0.0
  %72 = vmatprep.subr.mxu0 0.0
  %73 = vmatpush1.xpose.msra.mxu0 0.0
  %74 = vmatprep.subr.mxu0 0.0
  %75 = vmatpush1.xpose.msra.mxu0 0.0
  %76 = vmatprep.subr.mxu0 0.0
  %77 = vmatpush1.xpose.msra.mxu0 0.0
  %78 = vmatprep.subr.mxu0 0.0
  %79 = vmatpush1.xpose.msra.mxu0 0.0
  %80 = vmatprep.subr.mxu0 0.0
  %81 = vmatpush1.xpose.msra.mxu0 0.0
  %82 = vmatprep.subr.mxu0 0.0
  %83 = vmatpush1.xpose.msra.mxu0 0.0
  %84 = vmatprep.subr.mxu0 0.0
  %85 = vmatpush1.xpose.msra.mxu0 0.0
  %86 = vmatprep.subr.mxu0 0.0
  %87 = vmatpush1.xpose.msra.mxu0 0.0
  %88 = vmatprep.mubr.f32.mxu0 0.0
  %89 = vmatmul.mubr.f32.gmra.mrb[0].mxu0 %v19
  %v90 = vpop.f32.mrb[0].mxu0
  %v91 = vadd.f32 0.0, %v90
  %v92 = vpop.f32.mrb[0].mxu0
  %93 = vdwg.mxu0
  %v94 = vmul.f32 %v91, 0.2236068
  %vm95 = vcmask 64512
  %v96 = vsel %vm95, %v94, -inf
  %97 = vmax.xlane.f32.xlu0 %v96
  %v98 = vpop.xlane.xlu0 %97
  %v99 = vsub.f32 %v94, %v98
  %v100 = vmul.f32 %v99, 1.442695
  %v101 = vpow.pop %v100
  %v102 = vsel %vm95, %v101, 0.0
  %103 = vadd.xlane.f32.xlu0 %v102
  %v104 = vpop.xlane.xlu0 %103
  %v105 = vrcp.pop %v104
  %v106 = vmul.f32 %v101, %v105
  %v108 = vsel %vm95, %v106, 0
  %110 = vmatprep.subr.mxu0 0.0
  %111 = vmatpush1.msra.mxu0 %v16
  %112 = vmatprep.subr.mxu0 0.0
  %113 = vmatpush1.msra.mxu0 0.0
  %114 = vmatprep.subr.mxu0 0.0
  %115 = vmatpush1.msra.mxu0 0.0
  %116 = vmatprep.subr.mxu0 0.0
  %117 = vmatpush1.msra.mxu0 0.0
  %118 = vmatprep.subr.mxu0 0.0
  %119 = vmatpush1.msra.mxu0 0.0
  %120 = vmatprep.subr.mxu0 0.0
  %121 = vmatpush1.msra.mxu0 0.0
  %122 = vmatprep.subr.mxu0 0.0
  %123 = vmatpush1.msra.mxu0 0.0
  %124 = vmatprep.subr.mxu0 0.0
  %125 = vmatpush1.msra.mxu0 0.0
  %126 = vmatprep.subr.mxu0 0.0
  %127 = vmatpush1.msra.mxu0 0.0
  %128 = vmatprep.subr.mxu0 0.0
  %129 = vmatpush1.msra.mxu0 0.0
  %130 = vmatprep.subr.mxu0 0.0
  %131 = vmatpush1.msra.mxu0 0.0
  %132 = vmatprep.subr.mxu0 0.0
  %133 = vmatpush1.msra.mxu0 0.0
  %134 = vmatprep.subr.mxu0 0.0
  %135 = vmatpush1.msra.mxu0 0.0
  %136 = vmatprep.subr.mxu0 0.0
  %137 = vmatpush1.msra.mxu0 0.0
  %138 = vmatprep.subr.mxu0 0.0
  %139 = vmatpush1.msra.mxu0 0.0
  %140 = vmatprep.subr.mxu0 0.0
  %141 = vmatpush1.msra.mxu0 0.0
  %142 = vmatprep.subr.mxu0 0.0
  %143 = vmatpush1.msra.mxu0 0.0
  %144 = vmatprep.subr.mxu0 0.0
  %145 = vmatpush1.msra.mxu0 0.0
  %146 = vmatprep.subr.mxu0 0.0
  %147 = vmatpush1.msra.mxu0 0.0
  %148 = vmatprep.subr.mxu0 0.0
  %149 = vmatpush1.msra.mxu0 0.0
  %150 = vmatprep.subr.mxu0 0.0
  %151 = vmatpush1.msra.mxu0 0.0
  %152 = vmatprep.subr.mxu0 0.0
  %153 = vmatpush1.msra.mxu0 0.0
  %154 = vmatprep.subr.mxu0 0.0
  %155 = vmatpush1.msra.mxu0 0.0
  %156 = vmatprep.subr.mxu0 0.0
  %157 = vmatpush1.msra.mxu0 0.0
  %158 = vmatprep.subr.mxu0 0.0
  %159 = vmatpush1.msra.mxu0 0.0
  %160 = vmatprep.subr.mxu0 0.0
  %161 = vmatpush1.msra.mxu0 0.0
  %162 = vmatprep.subr.mxu0 0.0
  %163 = vmatpush1.msra.mxu0 0.0
  %164 = vmatprep.subr.mxu0 0.0
  %165 = vmatpush1.msra.mxu0 0.0
  %166 = vmatprep.subr.mxu0 0.0
  %167 = vmatpush1.msra.mxu0 0.0
  %168 = vmatprep.subr.mxu0 0.0
  %169 = vmatpush1.msra.mxu0 0.0
  %170 = vmatprep.subr.mxu0 0.0
  %171 = vmatpush1.msra.mxu0 0.0
  %172 = vmatprep.subr.mxu0 0.0
  %173 = vmatpush1.msra.mxu0 0.0
  %174 = vmatprep.mubr.f32.mxu0 0.0
  %175 = vmatmul.mubr.f32.gmra.mrb[0].mxu0 %v108
  %v176 = vpop.f32.mrb[0].mxu0
  %v177 = vadd.f32 0.0, %v176
  %v178 = vpop.f32.mrb[0].mxu0
  %179 = vdwg.mxu0
  %180 = vst.msk [vmem:[%s3] sm:$0xff] %vm17, %v177
  %s181 = scalar_lea.vmem %s0, 8
  %v182 = vld [vmem:[%s181] sm:$0xff]
  %s183 = scalar_lea.vmem %s1, 8
  %v184 = vld [vmem:[%s183] sm:$0xff]
  %s185 = scalar_lea.vmem %s2, 8
  %v186 = vld [vmem:[%s185] sm:$0xff]
  %v188 = vsel %vm17, %v182, 0
  %v191 = vsel %vm17, %v184, 0
  %193 = vmatprep.subr.mxu0 0.0
  %194 = vmatpush1.xpose.msra.mxu0 %v191
  %195 = vmatprep.subr.mxu0 0.0
  %196 = vmatpush1.xpose.msra.mxu0 0.0
  %197 = vmatprep.subr.mxu0 0.0
  %198 = vmatpush1.xpose.msra.mxu0 0.0
  %199 = vmatprep.subr.mxu0 0.0
  %200 = vmatpush1.xpose.msra.mxu0 0.0
  %201 = vmatprep.subr.mxu0 0.0
  %202 = vmatpush1.xpose.msra.mxu0 0.0
  %203 = vmatprep.subr.mxu0 0.0
  %204 = vmatpush1.xpose.msra.mxu0 0.0
  %205 = vmatprep.subr.mxu0 0.0
  %206 = vmatpush1.xpose.msra.mxu0 0.0
  %207 = vmatprep.subr.mxu0 0.0
  %208 = vmatpush1.xpose.msra.mxu0 0.0
  %209 = vmatprep.subr.mxu0 0.0
  %210 = vmatpush1.xpose.msra.mxu0 0.0
  %211 = vmatprep.subr.mxu0 0.0
  %212 = vmatpush1.xpose.msra.mxu0 0.0
  %213 = vmatprep.subr.mxu0 0.0
  %214 = vmatpush1.xpose.msra.mxu0 0.0
  %215 = vmatprep.subr.mxu0 0.0
  %216 = vmatpush1.xpose.msra.mxu0 0.0
  %217 = vmatprep.subr.mxu0 0.0
  %218 = vmatpush1.xpose.msra.mxu0 0.0
  %219 = vmatprep.subr.mxu0 0.0
  %220 = vmatpush1.xpose.msra.mxu0 0.0
  %221 = vmatprep.subr.mxu0 0.0
  %222 = vmatpush1.xpose.msra.mxu0 0.0
  %223 = vmatprep.subr.mxu0 0.0
  %224 = vmatpush1.xpose.msra.mxu0 0.0
  %225 = vmatprep.subr.mxu0 0.0
  %226 = vmatpush1.xpose.msra.mxu0 0.0
  %227 = vmatprep.subr.mxu0 0.0
  %228 = vmatpush1.xpose.msra.mxu0 0.0
  %229 = vmatprep.subr.mxu0 0.0
  %230 = vmatpush1.xpose.msra.mxu0 0.0
  %231 = vmatprep.subr.mxu0 0.0
  %232 = vmatpush1.xpose.msra.mxu0 0.0
  %233 = vmatprep.subr.mxu0 0.0
  %234 = vmatpush1.xpose.msra.mxu0 0.0
  %235 = vmatprep.subr.mxu0 0.0
  %236 = vmatpush1.xpose.msra.mxu0 0.0
  %237 = vmatprep.subr.mxu0 0.0
  %238 = vmatpush1.xpose.msra.mxu0 0.0
  %239 = vmatprep.subr.mxu0 0.0
  %240 = vmatpush1.xpose.msra.mxu0 0.0
  %241 = vmatprep.subr.mxu0 0.0
  %242 = vmatpush1.xpose.msra.mxu0 0.0
  %243 = vmatprep.subr.mxu0 0.0
  %244 = vmatpush1.xpose.msra.mxu0 0.0
  %245 = vmatprep.subr.mxu0 0.0
  %246 = vmatpush1.xpose.msra.mxu0 0.0
  %247 = vmatprep.subr.mxu0 0.0
  %248 = vmatpush1.xpose.msra.mxu0 0.0
  %249 = vmatprep.subr.mxu0 0.0
  %250 = vmatpush1.xpose.msra.mxu0 0.0
  %251 = vmatprep.subr.mxu0 0.0
  %252 = vmatpush1.xpose.msra.mxu0 0.0
  %253 = vmatprep.subr.mxu0 0.0
  %254 = vmatpush1.xpose.msra.mxu0 0.0
  %255 = vmatprep.subr.mxu0 0.0
  %256 = vmatpush1.xpose.msra.mxu0 0.0
  %257 = vmatprep.mubr.f32.mxu0 0.0
  %258 = vmatmul.mubr.f32.gmra.mrb[0].mxu0 %v188
  %v259 = vpop.f32.mrb[0].mxu0
  %v260 = vadd.f32 0.0, %v259
  %v261 = vpop.f32.mrb[0].mxu0
  %262 = vdwg.mxu0
  %v263 = vmul.f32 %v260, 0.2236068
  %v264 = vsel %vm95, %v263, -inf
  %265 = vmax.xlane.f32.xlu0 %v264
  %v266 = vpop.xlane.xlu0 %265
  %v267 = vsub.f32 %v263, %v266
  %v268 = vmul.f32 %v267, 1.442695
  %v269 = vpow.pop %v268
  %v270 = vsel %vm95, %v269, 0.0
  %271 = vadd.xlane.f32.xlu0 %v270
  %v272 = vpop.xlane.xlu0 %271
  %v273 = vrcp.pop %v272
  %v274 = vmul.f32 %v269, %v273
  %v276 = vsel %vm95, %v274, 0
  %278 = vmatprep.subr.mxu0 0.0
  %279 = vmatpush1.msra.mxu0 %v186
  %280 = vmatprep.subr.mxu0 0.0
  %281 = vmatpush1.msra.mxu0 0.0
  %282 = vmatprep.subr.mxu0 0.0
  %283 = vmatpush1.msra.mxu0 0.0
  %284 = vmatprep.subr.mxu0 0.0
  %285 = vmatpush1.msra.mxu0 0.0
  %286 = vmatprep.subr.mxu0 0.0
  %287 = vmatpush1.msra.mxu0 0.0
  %288 = vmatprep.subr.mxu0 0.0
  %289 = vmatpush1.msra.mxu0 0.0
  %290 = vmatprep.subr.mxu0 0.0
  %291 = vmatpush1.msra.mxu0 0.0
  %292 = vmatprep.subr.mxu0 0.0
  %293 = vmatpush1.msra.mxu0 0.0
  %294 = vmatprep.subr.mxu0 0.0
  %295 = vmatpush1.msra.mxu0 0.0
  %296 = vmatprep.subr.mxu0 0.0
  %297 = vmatpush1.msra.mxu0 0.0
  %298 = vmatprep.subr.mxu0 0.0
  %299 = vmatpush1.msra.mxu0 0.0
  %300 = vmatprep.subr.mxu0 0.0
  %301 = vmatpush1.msra.mxu0 0.0
  %302 = vmatprep.subr.mxu0 0.0
  %303 = vmatpush1.msra.mxu0 0.0
  %304 = vmatprep.subr.mxu0 0.0
  %305 = vmatpush1.msra.mxu0 0.0
  %306 = vmatprep.subr.mxu0 0.0
  %307 = vmatpush1.msra.mxu0 0.0
  %308 = vmatprep.subr.mxu0 0.0
  %309 = vmatpush1.msra.mxu0 0.0
  %310 = vmatprep.subr.mxu0 0.0
  %311 = vmatpush1.msra.mxu0 0.0
  %312 = vmatprep.subr.mxu0 0.0
  %313 = vmatpush1.msra.mxu0 0.0
  %314 = vmatprep.subr.mxu0 0.0
  %315 = vmatpush1.msra.mxu0 0.0
  %316 = vmatprep.subr.mxu0 0.0
  %317 = vmatpush1.msra.mxu0 0.0
  %318 = vmatprep.subr.mxu0 0.0
  %319 = vmatpush1.msra.mxu0 0.0
  %320 = vmatprep.subr.mxu0 0.0
  %321 = vmatpush1.msra.mxu0 0.0
  %322 = vmatprep.subr.mxu0 0.0
  %323 = vmatpush1.msra.mxu0 0.0
  %324 = vmatprep.subr.mxu0 0.0
  %325 = vmatpush1.msra.mxu0 0.0
  %326 = vmatprep.subr.mxu0 0.0
  %327 = vmatpush1.msra.mxu0 0.0
  %328 = vmatprep.subr.mxu0 0.0
  %329 = vmatpush1.msra.mxu0 0.0
  %330 = vmatprep.subr.mxu0 0.0
  %331 = vmatpush1.msra.mxu0 0.0
  %332 = vmatprep.subr.mxu0 0.0
  %333 = vmatpush1.msra.mxu0 0.0
  %334 = vmatprep.subr.mxu0 0.0
  %335 = vmatpush1.msra.mxu0 0.0
  %336 = vmatprep.subr.mxu0 0.0
  %337 = vmatpush1.msra.mxu0 0.0
  %338 = vmatprep.subr.mxu0 0.0
  %339 = vmatpush1.msra.mxu0 0.0
  %340 = vmatprep.subr.mxu0 0.0
  %341 = vmatpush1.msra.mxu0 0.0
  %342 = vmatprep.mubr.f32.mxu0 0.0
  %343 = vmatmul.mubr.f32.gmra.mrb[0].mxu0 %v276
  %v344 = vpop.f32.mrb[0].mxu0
  %v345 = vadd.f32 0.0, %v344
  %v346 = vpop.f32.mrb[0].mxu0
  %347 = vdwg.mxu0
  %s348 = scalar_lea.vmem %s3, 8
  %349 = vst.msk [vmem:[%s348] sm:$0xff] %vm17, %v345
  %s350 = scalar_lea.vmem %s0, 16
  %v351 = vld [vmem:[%s350] sm:$0xff]
  %s352 = scalar_lea.vmem %s1, 16
  %v353 = vld [vmem:[%s352] sm:$0xff]
  %s354 = scalar_lea.vmem %s2, 16
  %v355 = vld [vmem:[%s354] sm:$0xff]
  %v357 = vsel %vm17, %v351, 0
  %v360 = vsel %vm17, %v353, 0
  %362 = vmatprep.subr.mxu0 0.0
  %363 = vmatpush1.xpose.msra.mxu0 %v360
  %364 = vmatprep.subr.mxu0 0.0
  %365 = vmatpush1.xpose.msra.mxu0 0.0
  %366 = vmatprep.subr.mxu0 0.0
  %367 = vmatpush1.xpose.msra.mxu0 0.0
  %368 = vmatprep.subr.mxu0 0.0
  %369 = vmatpush1.xpose.msra.mxu0 0.0
  %370 = vmatprep.subr.mxu0 0.0
  %371 = vmatpush1.xpose.msra.mxu0 0.0
  %372 = vmatprep.subr.mxu0 0.0
  %373 = vmatpush1.xpose.msra.mxu0 0.0
  %374 = vmatprep.subr.mxu0 0.0
  %375 = vmatpush1.xpose.msra.mxu0 0.0
  %376 = vmatprep.subr.mxu0 0.0
  %377 = vmatpush1.xpose.msra.mxu0 0.0
  %378 = vmatprep.subr.mxu0 0.0
  %379 = vmatpush1.xpose.msra.mxu0 0.0
  %380 = vmatprep.subr.mxu0 0.0
  %381 = vmatpush1.xpose.msra.mxu0 0.0
  %382 = vmatprep.subr.mxu0 0.0
  %383 = vmatpush1.xpose.msra.mxu0 0.0
  %384 = vmatprep.subr.mxu0 0.0
  %385 = vmatpush1.xpose.msra.mxu0 0.0
  %386 = vmatprep.subr.mxu0 0.0
  %387 = vmatpush1.xpose.msra.mxu0 0.0
  %388 = vmatprep.subr.mxu0 0.0
  %389 = vmatpush1.xpose.msra.mxu0 0.0
  %390 = vmatprep.subr.mxu0 0.0
  %391 = vmatpush1.xpose.msra.mxu0 0.0
  %392 = vmatprep.subr.mxu0 0.0
  %393 = vmatpush1.xpose.msra.mxu0 0.0
  %394 = vmatprep.subr.mxu0 0.0
  %395 = vmatpush1.xpose.msra.mxu0 0.0
  %396 = vmatprep.subr.mxu0 0.0
  %397 = vmatpush1.xpose.msra.mxu0 0.0
  %398 = vmatprep.subr.mxu0 0.0
  %399 = vmatpush1.xpose.msra.mxu0 0.0
  %400 = vmatprep.subr.mxu0 0.0
  %401 = vmatpush1.xpose.msra.mxu0 0.0
  %402 = vmatprep.subr.mxu0 0.0
  %403 = vmatpush1.xpose.msra.mxu0 0.0
  %404 = vmatprep.subr.mxu0 0.0
  %405 = vmatpush1.xpose.msra.mxu0 0.0
  %406 = vmatprep.subr.mxu0 0.0
  %407 = vmatpush1.xpose.msra.mxu0 0.0
  %408 = vmatprep.subr.mxu0 0.0
  %409 = vmatpush1.xpose.msra.mxu0 0.0
  %410 = vmatprep.subr.mxu0 0.0
  %411 = vmatpush1.xpose.msra.mxu0 0.0
  %412 = vmatprep.subr.mxu0 0.0
  %413 = vmatpush1.xpose.msra.mxu0 0.0
  %414 = vmatprep.subr.mxu0 0.0
  %415 = vmatpush1.xpose.msra.mxu0 0.0
  %416 = vmatprep.subr.mxu0 0.0
  %417 = vmatpush1.xpose.msra.mxu0 0.0
  %418 = vmatprep.subr.mxu0 0.0
  %419 = vmatpush1.xpose.msra.mxu0 0.0
  %420 = vmatprep.subr.mxu0 0.0
  %421 = vmatpush1.xpose.msra.mxu0 0.0
  %422 = vmatprep.subr.mxu0 0.0
  %423 = vmatpush1.xpose.msra.mxu0 0.0
  %424 = vmatprep.subr.mxu0 0.0
  %425 = vmatpush1.xpose.msra.mxu0 0.0
  %426 = vmatprep.mubr.f32.mxu0 0.0
  %427 = vmatmul.mubr.f32.gmra.mrb[0].mxu0 %v357
  %v428 = vpop.f32.mrb[0].mxu0
  %v429 = vadd.f32 0.0, %v428
  %v430 = vpop.f32.mrb[0].mxu0
  %431 = vdwg.mxu0
  %v432 = vmul.f32 %v429, 0.2236068
  %v433 = vsel %vm95, %v432, -inf
  %434 = vmax.xlane.f32.xlu0 %v433
  %v435 = vpop.xlane.xlu0 %434
  %v436 = vsub.f32 %v432, %v435
  %v437 = vmul.f32 %v436, 1.442695
  %v438 = vpow.pop %v437
  %v439 = vsel %vm95, %v438, 0.0
  %440 = vadd.xlane.f32.xlu0 %v439
  %v441 = vpop.xlane.xlu0 %440
  %v442 = vrcp.pop %v441
  %v443 = vmul.f32 %v438, %v442
  %v445 = vsel %vm95, %v443, 0
  %447 = vmatprep.subr.mxu0 0.0
  %448 = vmatpush1.msra.mxu0 %v355
  %449 = vmatprep.subr.mxu0 0.0
  %450 = vmatpush1.msra.mxu0 0.0
  %451 = vmatprep.subr.mxu0 0.0
  %452 = vmatpush1.msra.mxu0 0.0
  %453 = vmatprep.subr.mxu0 0.0
  %454 = vmatpush1.msra.mxu0 0.0
  %455 = vmatprep.subr.mxu0 0.0
  %456 = vmatpush1.msra.mxu0 0.0
  %457 = vmatprep.subr.mxu0 0.0
  %458 = vmatpush1.msra.mxu0 0.0
  %459 = vmatprep.subr.mxu0 0.0
  %460 = vmatpush1.msra.mxu0 0.0
  %461 = vmatprep.subr.mxu0 0.0
  %462 = vmatpush1.msra.mxu0 0.0
  %463 = vmatprep.subr.mxu0 0.0
  %464 = vmatpush1.msra.mxu0 0.0
  %465 = vmatprep.subr.mxu0 0.0
  %466 = vmatpush1.msra.mxu0 0.0
  %467 = vmatprep.subr.mxu0 0.0
  %468 = vmatpush1.msra.mxu0 0.0
  %469 = vmatprep.subr.mxu0 0.0
  %470 = vmatpush1.msra.mxu0 0.0
  %471 = vmatprep.subr.mxu0 0.0
  %472 = vmatpush1.msra.mxu0 0.0
  %473 = vmatprep.subr.mxu0 0.0
  %474 = vmatpush1.msra.mxu0 0.0
  %475 = vmatprep.subr.mxu0 0.0
  %476 = vmatpush1.msra.mxu0 0.0
  %477 = vmatprep.subr.mxu0 0.0
  %478 = vmatpush1.msra.mxu0 0.0
  %479 = vmatprep.subr.mxu0 0.0
  %480 = vmatpush1.msra.mxu0 0.0
  %481 = vmatprep.subr.mxu0 0.0
  %482 = vmatpush1.msra.mxu0 0.0
  %483 = vmatprep.subr.mxu0 0.0
  %484 = vmatpush1.msra.mxu0 0.0
  %485 = vmatprep.subr.mxu0 0.0
  %486 = vmatpush1.msra.mxu0 0.0
  %487 = vmatprep.subr.mxu0 0.0
  %488 = vmatpush1.msra.mxu0 0.0
  %489 = vmatprep.subr.mxu0 0.0
  %490 = vmatpush1.msra.mxu0 0.0
  %491 = vmatprep.subr.mxu0 0.0
  %492 = vmatpush1.msra.mxu0 0.0
  %493 = vmatprep.subr.mxu0 0.0
  %494 = vmatpush1.msra.mxu0 0.0
  %495 = vmatprep.subr.mxu0 0.0
  %496 = vmatpush1.msra.mxu0 0.0
  %497 = vmatprep.subr.mxu0 0.0
  %498 = vmatpush1.msra.mxu0 0.0
  %499 = vmatprep.subr.mxu0 0.0
  %500 = vmatpush1.msra.mxu0 0.0
  %501 = vmatprep.subr.mxu0 0.0
  %502 = vmatpush1.msra.mxu0 0.0
  %503 = vmatprep.subr.mxu0 0.0
  %504 = vmatpush1.msra.mxu0 0.0
  %505 = vmatprep.subr.mxu0 0.0
  %506 = vmatpush1.msra.mxu0 0.0
  %507 = vmatprep.subr.mxu0 0.0
  %508 = vmatpush1.msra.mxu0 0.0
  %509 = vmatprep.subr.mxu0 0.0
  %510 = vmatpush1.msra.mxu0 0.0
  %511 = vmatprep.mubr.f32.mxu0 0.0
  %512 = vmatmul.mubr.f32.gmra.mrb[0].mxu0 %v445
  %v513 = vpop.f32.mrb[0].mxu0
  %v514 = vadd.f32 0.0, %v513
  %v515 = vpop.f32.mrb[0].mxu0
  %516 = vdwg.mxu0
  %s517 = scalar_lea.vmem %s3, 16
  %518 = vst.msk [vmem:[%s517] sm:$0xff] %vm17, %v514
  %s519 = scalar_lea.vmem %s0, 24
  %v520 = vld [vmem:[%s519] sm:$0xff]
  %s521 = scalar_lea.vmem %s1, 24
  %v522 = vld [vmem:[%s521] sm:$0xff]
  %s523 = scalar_lea.vmem %s2, 24
  %v524 = vld [vmem:[%s523] sm:$0xff]
  %v526 = vsel %vm17, %v520, 0
  %v529 = vsel %vm17, %v522, 0
  %531 = vmatprep.subr.mxu0 0.0
  %532 = vmatpush1.xpose.msra.mxu0 %v529
  %533 = vmatprep.subr.mxu0 0.0
  %534 = vmatpush1.xpose.msra.mxu0 0.0
  %535 = vmatprep.subr.mxu0 0.0
  %536 = vmatpush1.xpose.msra.mxu0 0.0
  %537 = vmatprep.subr.mxu0 0.0
  %538 = vmatpush1.xpose.msra.mxu0 0.0
  %539 = vmatprep.subr.mxu0 0.0
  %540 = vmatpush1.xpose.msra.mxu0 0.0
  %541 = vmatprep.subr.mxu0 0.0
  %542 = vmatpush1.xpose.msra.mxu0 0.0
  %543 = vmatprep.subr.mxu0 0.0
  %544 = vmatpush1.xpose.msra.mxu0 0.0
  %545 = vmatprep.subr.mxu0 0.0
  %546 = vmatpush1.xpose.msra.mxu0 0.0
  %547 = vmatprep.subr.mxu0 0.0
  %548 = vmatpush1.xpose.msra.mxu0 0.0
  %549 = vmatprep.subr.mxu0 0.0
  %550 = vmatpush1.xpose.msra.mxu0 0.0
  %551 = vmatprep.subr.mxu0 0.0
  %552 = vmatpush1.xpose.msra.mxu0 0.0
  %553 = vmatprep.subr.mxu0 0.0
  %554 = vmatpush1.xpose.msra.mxu0 0.0
  %555 = vmatprep.subr.mxu0 0.0
  %556 = vmatpush1.xpose.msra.mxu0 0.0
  %557 = vmatprep.subr.mxu0 0.0
  %558 = vmatpush1.xpose.msra.mxu0 0.0
  %559 = vmatprep.subr.mxu0 0.0
  %560 = vmatpush1.xpose.msra.mxu0 0.0
  %561 = vmatprep.subr.mxu0 0.0
  %562 = vmatpush1.xpose.msra.mxu0 0.0
  %563 = vmatprep.subr.mxu0 0.0
  %564 = vmatpush1.xpose.msra.mxu0 0.0
  %565 = vmatprep.subr.mxu0 0.0
  %566 = vmatpush1.xpose.msra.mxu0 0.0
  %567 = vmatprep.subr.mxu0 0.0
  %568 = vmatpush1.xpose.msra.mxu0 0.0
  %569 = vmatprep.subr.mxu0 0.0
  %570 = vmatpush1.xpose.msra.mxu0 0.0
  %571 = vmatprep.subr.mxu0 0.0
  %572 = vmatpush1.xpose.msra.mxu0 0.0
  %573 = vmatprep.subr.mxu0 0.0
  %574 = vmatpush1.xpose.msra.mxu0 0.0
  %575 = vmatprep.subr.mxu0 0.0
  %576 = vmatpush1.xpose.msra.mxu0 0.0
  %577 = vmatprep.subr.mxu0 0.0
  %578 = vmatpush1.xpose.msra.mxu0 0.0
  %579 = vmatprep.subr.mxu0 0.0
  %580 = vmatpush1.xpose.msra.mxu0 0.0
  %581 = vmatprep.subr.mxu0 0.0
  %582 = vmatpush1.xpose.msra.mxu0 0.0
  %583 = vmatprep.subr.mxu0 0.0
  %584 = vmatpush1.xpose.msra.mxu0 0.0
  %585 = vmatprep.subr.mxu0 0.0
  %586 = vmatpush1.xpose.msra.mxu0 0.0
  %587 = vmatprep.subr.mxu0 0.0
  %588 = vmatpush1.xpose.msra.mxu0 0.0
  %589 = vmatprep.subr.mxu0 0.0
  %590 = vmatpush1.xpose.msra.mxu0 0.0
  %591 = vmatprep.subr.mxu0 0.0
  %592 = vmatpush1.xpose.msra.mxu0 0.0
  %593 = vmatprep.subr.mxu0 0.0
  %594 = vmatpush1.xpose.msra.mxu0 0.0
  %595 = vmatprep.mubr.f32.mxu0 0.0
  %596 = vmatmul.mubr.f32.gmra.mrb[0].mxu0 %v526
  %v597 = vpop.f32.mrb[0].mxu0
  %v598 = vadd.f32 0.0, %v597
  %v599 = vpop.f32.mrb[0].mxu0
  %600 = vdwg.mxu0
  %v601 = vmul.f32 %v598, 0.2236068
  %v602 = vsel %vm95, %v601, -inf
  %603 = vmax.xlane.f32.xlu0 %v602
  %v604 = vpop.xlane.xlu0 %603
  %v605 = vsub.f32 %v601, %v604
  %v606 = vmul.f32 %v605, 1.442695
  %v607 = vpow.pop %v606
  %v608 = vsel %vm95, %v607, 0.0
  %609 = vadd.xlane.f32.xlu0 %v608
  %v610 = vpop.xlane.xlu0 %609
  %v611 = vrcp.pop %v610
  %v612 = vmul.f32 %v607, %v611
  %v614 = vsel %vm95, %v612, 0
  %616 = vmatprep.subr.mxu0 0.0
  %617 = vmatpush1.msra.mxu0 %v524
  %618 = vmatprep.subr.mxu0 0.0
  %619 = vmatpush1.msra.mxu0 0.0
  %620 = vmatprep.subr.mxu0 0.0
  %621 = vmatpush1.msra.mxu0 0.0
  %622 = vmatprep.subr.mxu0 0.0
  %623 = vmatpush1.msra.mxu0 0.0
  %624 = vmatprep.subr.mxu0 0.0
  %625 = vmatpush1.msra.mxu0 0.0
  %626 = vmatprep.subr.mxu0 0.0
  %627 = vmatpush1.msra.mxu0 0.0
  %628 = vmatprep.subr.mxu0 0.0
  %629 = vmatpush1.msra.mxu0 0.0
  %630 = vmatprep.subr.mxu0 0.0
  %631 = vmatpush1.msra.mxu0 0.0
  %632 = vmatprep.subr.mxu0 0.0
  %633 = vmatpush1.msra.mxu0 0.0
  %634 = vmatprep.subr.mxu0 0.0
  %635 = vmatpush1.msra.mxu0 0.0
  %636 = vmatprep.subr.mxu0 0.0
  %637 = vmatpush1.msra.mxu0 0.0
  %638 = vmatprep.subr.mxu0 0.0
  %639 = vmatpush1.msra.mxu0 0.0
  %640 = vmatprep.subr.mxu0 0.0
  %641 = vmatpush1.msra.mxu0 0.0
  %642 = vmatprep.subr.mxu0 0.0
  %643 = vmatpush1.msra.mxu0 0.0
  %644 = vmatprep.subr.mxu0 0.0
  %645 = vmatpush1.msra.mxu0 0.0
  %646 = vmatprep.subr.mxu0 0.0
  %647 = vmatpush1.msra.mxu0 0.0
  %648 = vmatprep.subr.mxu0 0.0
  %649 = vmatpush1.msra.mxu0 0.0
  %650 = vmatprep.subr.mxu0 0.0
  %651 = vmatpush1.msra.mxu0 0.0
  %652 = vmatprep.subr.mxu0 0.0
  %653 = vmatpush1.msra.mxu0 0.0
  %654 = vmatprep.subr.mxu0 0.0
  %655 = vmatpush1.msra.mxu0 0.0
  %656 = vmatprep.subr.mxu0 0.0
  %657 = vmatpush1.msra.mxu0 0.0
  %658 = vmatprep.subr.mxu0 0.0
  %659 = vmatpush1.msra.mxu0 0.0
  %660 = vmatprep.subr.mxu0 0.0
  %661 = vmatpush1.msra.mxu0 0.0
  %662 = vmatprep.subr.mxu0 0.0
  %663 = vmatpush1.msra.mxu0 0.0
  %664 = vmatprep.subr.mxu0 0.0
  %665 = vmatpush1.msra.mxu0 0.0
  %666 = vmatprep.subr.mxu0 0.0
  %667 = vmatpush1.msra.mxu0 0.0
  %668 = vmatprep.subr.mxu0 0.0
  %669 = vmatpush1.msra.mxu0 0.0
  %670 = vmatprep.subr.mxu0 0.0
  %671 = vmatpush1.msra.mxu0 0.0
  %672 = vmatprep.subr.mxu0 0.0
  %673 = vmatpush1.msra.mxu0 0.0
  %674 = vmatprep.subr.mxu0 0.0
  %675 = vmatpush1.msra.mxu0 0.0
  %676 = vmatprep.subr.mxu0 0.0
  %677 = vmatpush1.msra.mxu0 0.0
  %678 = vmatprep.subr.mxu0 0.0
  %679 = vmatpush1.msra.mxu0 0.0
  %680 = vmatprep.mubr.f32.mxu0 0.0
  %681 = vmatmul.mubr.f32.gmra.mrb[0].mxu0 %v614
  %v682 = vpop.f32.mrb[0].mxu0
  %v683 = vadd.f32 0.0, %v682
  %v684 = vpop.f32.mrb[0].mxu0
  %685 = vdwg.mxu0
  %s686 = scalar_lea.vmem %s3, 24
  %687 = vst.msk [vmem:[%s686] sm:$0xff] %vm17, %v683
  // Predicated region
  $region14: #{decoder_forward.8} parent=0 // pred_check
    _
  $region15: #{decoder_forward.8} parent=0 // pred_check_branch
    %689 = sbr.rel (0) target = $region17
  $region16: #{decoder_forward.8} parent=0 // pred_region
    _
  $region17: #{decoder_forward.8} parent=0 // pred_fallthru
    _
  // Predicated region
  $region18: #{decoder_forward.8} parent=0 // pred_check
    _
  $region19: #{decoder_forward.8} parent=0 // pred_check_branch
    %691 = sbr.rel (0) target = $region21
  $region20: #{decoder_forward.8} parent=0 // pred_region
    _
  $region21: #{decoder_forward.8} parent=0 // pred_fallthru
    _

// kernel: decoder_forward.13
$region0: #{decoder_forward.13}
  #allocation0 [shape = 'u32[]', space=smem, size = 0x4, offset = 0x4, fixed_abs, tag = 'smem constant byte address 0x4 - core index']
  #allocation1 [shape = 'u32[144,128]{1,0:T(1,128)}', space=vmem, size = 0x12000, scoped, tag = 'internal scratch']
  %s0 = inlined_call_operand.vmem [shape: f32[16,20], index: 0, kind: input, shape index: {}]
  %s1 = inlined_call_operand.vmem [shape: f32[20,2048], index: 1, kind: input, shape index: {}]
  %s2 = inlined_call_operand.vmem [shape: f32[1,2048], index: 2, kind: input, shape index: {}]
  %s3 = inlined_call_operand.vmem [shape: f32[2048,20], index: 3, kind: input, shape index: {}]
  %s4 = inlined_call_operand.vmem [shape: f32[1,20], index: 4, kind: input, shape index: {}]
  %s5 = inlined_call_operand.hbm [shape: f32[16,20], index: 5, kind: output, shape index: {}]
  %s6 = sld [smem:[#allocation0]]
  $region30: #{decoder_forward.13} parent=0
    _
  %s8 = ssub.s32 1, %s6
  %s9 = scalar_select 0, %s8, %s6
  $region1: #{decoder_forward.13} parent=0
    #allocation2 [shape = 'u8[8192]{0}', space=vmem, size = 0x2000, scoped, tag = 'output window, operand 0, single buffered']
    #allocation3 [shape = 's32[1]{0}', space=sflag, size = 0x4, scoped, tag = 'scoped memory for decoder_forward.13']
    %10 = vsyncpa [#allocation3], 0
    // Predicated region
    $region2: #{decoder_forward.13} parent=1 // pred_check
      _
    $region3: #{decoder_forward.13} parent=1 // pred_check_branch
      %12 = sbr.rel (0) target = $region5
    $region4: #{decoder_forward.13} parent=1 // pred_region
      _
    $region5: #{decoder_forward.13} parent=1 // pred_fallthru
      _
    // Predicated region
    $region6: #{decoder_forward.13} parent=1 // pred_check
      _
    $region7: #{decoder_forward.13} parent=1 // pred_check_branch
      %14 = sbr.rel (0) target = $region9
    $region8: #{decoder_forward.13} parent=1 // pred_region
      _
    $region9: #{decoder_forward.13} parent=1 // pred_fallthru
      _
    // Predicated region
    $region10: #{decoder_forward.13} parent=1 // pred_check
      _
    $region11: #{decoder_forward.13} parent=1 // pred_check_branch
      %16 = sbr.rel (0) target = $region13
    $region12: #{decoder_forward.13} parent=1 // pred_region
      _
    $region13: #{decoder_forward.13} parent=1 // pred_fallthru
      _
    // Predicated region
    $region14: #{decoder_forward.13} parent=1 // pred_check
      _
    $region15: #{decoder_forward.13} parent=1 // pred_check_branch
      %18 = sbr.rel (0) target = $region17
    $region16: #{decoder_forward.13} parent=1 // pred_region
      _
    $region17: #{decoder_forward.13} parent=1 // pred_fallthru
      _
    // Predicated region
    $region18: #{decoder_forward.13} parent=1 // pred_check
      _
    $region19: #{decoder_forward.13} parent=1 // pred_check_branch
      %20 = sbr.rel (0) target = $region21
    $region20: #{decoder_forward.13} parent=1 // pred_region
      _
    $region21: #{decoder_forward.13} parent=1 // pred_fallthru
      _
    %v21 = vld [vmem:[%s0] sm:$0xff]
    %v22 = vld [vmem:[%s0 + $0x8] sm:$0xff]
    %v23 = vld [vmem:[%s1] sm:$0xff]
    %v24 = vld [vmem:[%s1 + $0x8] sm:$0xff]
    %v25 = vld [vmem:[%s1 + $0x10] sm:$0xff]
    %v26 = vld [vmem:[%s1 + $0x18] sm:$0xff]
    %v27 = vld [vmem:[%s1 + $0x20] sm:$0xff]
    %v28 = vld [vmem:[%s1 + $0x28] sm:$0xff]
    %v29 = vld [vmem:[%s1 + $0x30] sm:$0xff]
    %v30 = vld [vmem:[%s1 + $0x38] sm:$0xff]
    %v31 = vld [vmem:[%s1 + $0x40] sm:$0xff]
    %v32 = vld [vmem:[%s1 + $0x48] sm:$0xff]
    %v33 = vld [vmem:[%s1 + $0x50] sm:$0xff]
    %v34 = vld [vmem:[%s1 + $0x58] sm:$0xff]
    %v35 = vld [vmem:[%s1 + $0x60] sm:$0xff]
    %v36 = vld [vmem:[%s1 + $0x68] sm:$0xff]
    %v37 = vld [vmem:[%s1 + $0x70] sm:$0xff]
    %v38 = vld [vmem:[%s1 + $0x78] sm:$0xff]
    %v39 = vld [vmem:[%s1 + $0x80] sm:$0xff]
    %v40 = vld [vmem:[%s1 + $0x88] sm:$0xff]
    %v41 = vld [vmem:[%s1 + $0x90] sm:$0xff]
    %v42 = vld [vmem:[%s1 + $0x98] sm:$0xff]
    %v43 = vld [vmem:[%s1 + $0xa0] sm:$0xff]
    %v44 = vld [vmem:[%s1 + $0xa8] sm:$0xff]
    %v45 = vld [vmem:[%s1 + $0xb0] sm:$0xff]
    %v46 = vld [vmem:[%s1 + $0xb8] sm:$0xff]
    %v47 = vld [vmem:[%s1 + $0xc0] sm:$0xff]
    %v48 = vld [vmem:[%s1 + $0xc8] sm:$0xff]
    %v49 = vld [vmem:[%s1 + $0xd0] sm:$0xff]
    %v50 = vld [vmem:[%s1 + $0xd8] sm:$0xff]
    %v51 = vld [vmem:[%s1 + $0xe0] sm:$0xff]
    %v52 = vld [vmem:[%s1 + $0xe8] sm:$0xff]
    %v53 = vld [vmem:[%s1 + $0xf0] sm:$0xff]
    %v54 = vld [vmem:[%s1 + $0xf8] sm:$0xff]
    %v55 = vld [vmem:[%s1 + $0x100] sm:$0xf]
    %v56 = vld [vmem:[%s1 + $0x108] sm:$0xf]
    %v57 = vld [vmem:[%s1 + $0x110] sm:$0xf]
    %v58 = vld [vmem:[%s1 + $0x118] sm:$0xf]
    %v59 = vld [vmem:[%s1 + $0x120] sm:$0xf]
    %v60 = vld [vmem:[%s1 + $0x128] sm:$0xf]
    %v61 = vld [vmem:[%s1 + $0x130] sm:$0xf]
    %v62 = vld [vmem:[%s1 + $0x138] sm:$0xf]
    %v63 = vld [vmem:[%s1 + $0x140] sm:$0xf]
    %v64 = vld [vmem:[%s1 + $0x148] sm:$0xf]
    %v65 = vld [vmem:[%s1 + $0x150] sm:$0xf]
    %v66 = vld [vmem:[%s1 + $0x158] sm:$0xf]
    %v67 = vld [vmem:[%s1 + $0x160] sm:$0xf]
    %v68 = vld [vmem:[%s1 + $0x168] sm:$0xf]
    %v69 = vld [vmem:[%s1 + $0x170] sm:$0xf]
    %v70 = vld [vmem:[%s1 + $0x178] sm:$0xf]
    %v71 = vld [vmem:[%s2] sm:$0xff]
    %v72 = vld [vmem:[%s2 + $0x8] sm:$0xff]
    %v75 = vlaneseq
    %v76 = vshrl.u32 %v75, 7
    %v77 = vsub.s32 0, %v76
    %v78 = vrot.slane %v71, %v77
    %v79 = vlaneseq
    %v80 = vshrl.u32 %v79, 7
    %v81 = vsub.s32 1, %v80
    %v82 = vrot.slane %v71, %v81
    %v83 = vlaneseq
    %v84 = vshrl.u32 %v83, 7
    %v85 = vsub.s32 2, %v84
    %v86 = vrot.slane %v71, %v85
    %v87 = vlaneseq
    %v88 = vshrl.u32 %v87, 7
    %v89 = vsub.s32 3, %v88
    %v90 = vrot.slane %v71, %v89
    %v91 = vlaneseq
    %v92 = vshrl.u32 %v91, 7
    %v93 = vsub.s32 4, %v92
    %v94 = vrot.slane %v71, %v93
    %v95 = vlaneseq
    %v96 = vshrl.u32 %v95, 7
    %v97 = vsub.s32 5, %v96
    %v98 = vrot.slane %v71, %v97
    %v99 = vlaneseq
    %v100 = vshrl.u32 %v99, 7
    %v101 = vsub.s32 6, %v100
    %v102 = vrot.slane %v71, %v101
    %v103 = vlaneseq
    %v104 = vshrl.u32 %v103, 7
    %v105 = vsub.s32 7, %v104
    %v106 = vrot.slane %v71, %v105
    %v107 = vlaneseq
    %v108 = vshrl.u32 %v107, 7
    %v109 = vsub.s32 0, %v108
    %v110 = vrot.slane %v72, %v109
    %v111 = vlaneseq
    %v112 = vshrl.u32 %v111, 7
    %v113 = vsub.s32 1, %v112
    %v114 = vrot.slane %v72, %v113
    %v115 = vlaneseq
    %v116 = vshrl.u32 %v115, 7
    %v117 = vsub.s32 2, %v116
    %v118 = vrot.slane %v72, %v117
    %v119 = vlaneseq
    %v120 = vshrl.u32 %v119, 7
    %v121 = vsub.s32 3, %v120
    %v122 = vrot.slane %v72, %v121
    %v123 = vlaneseq
    %v124 = vshrl.u32 %v123, 7
    %v125 = vsub.s32 4, %v124
    %v126 = vrot.slane %v72, %v125
    %v127 = vlaneseq
    %v128 = vshrl.u32 %v127, 7
    %v129 = vsub.s32 5, %v128
    %v130 = vrot.slane %v72, %v129
    %v131 = vlaneseq
    %v132 = vshrl.u32 %v131, 7
    %v133 = vsub.s32 6, %v132
    %v134 = vrot.slane %v72, %v133
    %v135 = vlaneseq
    %v136 = vshrl.u32 %v135, 7
    %v137 = vsub.s32 7, %v136
    %v138 = vrot.slane %v72, %v137
    %vm155 = vcmask 162816
    %v157 = vsel %vm155, %v21, 0
    %v160 = vsel %vm155, %v22, 0
    %vm162 = vcmask 1043456
    %v164 = vsel %vm162, %v55, 0
    %v167 = vsel %vm162, %v56, 0
    %v170 = vsel %vm162, %v57, 0
    %v173 = vsel %vm162, %v58, 0
    %v176 = vsel %vm162, %v59, 0
    %v179 = vsel %vm162, %v60, 0
    %v182 = vsel %vm162, %v61, 0
    %v185 = vsel %vm162, %v62, 0
    %v188 = vsel %vm162, %v63, 0
    %v191 = vsel %vm162, %v64, 0
    %v194 = vsel %vm162, %v65, 0
    %v197 = vsel %vm162, %v66, 0
    %v200 = vsel %vm162, %v67, 0
    %v203 = vsel %vm162, %v68, 0
    %v206 = vsel %vm162, %v69, 0
    %v209 = vsel %vm162, %v70, 0
    %211 = vmatprep.subr.mxu0 %v24
    %212 = vmatpush1.msra.mxu0 %v23
    %213 = vmatprep.subr.mxu0 %v40
    %214 = vmatpush1.msra.mxu0 %v39
    %215 = vmatprep.subr.mxu0 %v167
    %216 = vmatpush1.msra.mxu0 %v164
    %217 = vmatprep.subr.mxu0 0.0
    %218 = vmatpush1.msra.mxu0 0.0
    %219 = vmatprep.subr.mxu0 0.0
    %220 = vmatpush1.msra.mxu0 0.0
    %221 = vmatprep.subr.mxu0 0.0
    %222 = vmatpush1.msra.mxu0 0.0
    %223 = vmatprep.subr.mxu0 0.0
    %224 = vmatpush1.msra.mxu0 0.0
    %225 = vmatprep.subr.mxu0 0.0
    %226 = vmatpush1.msra.mxu0 0.0
    %227 = vmatprep.subr.mxu0 0.0
    %228 = vmatpush1.msra.mxu0 0.0
    %229 = vmatprep.subr.mxu0 0.0
    %230 = vmatpush1.msra.mxu0 0.0
    %231 = vmatprep.subr.mxu0 0.0
    %232 = vmatpush1.msra.mxu0 0.0
    %233 = vmatprep.subr.mxu0 0.0
    %234 = vmatpush1.msra.mxu0 0.0
    %235 = vmatprep.subr.mxu0 0.0
    %236 = vmatpush1.msra.mxu0 0.0
    %237 = vmatprep.subr.mxu0 0.0
    %238 = vmatpush1.msra.mxu0 0.0
    %239 = vmatprep.subr.mxu0 0.0
    %240 = vmatpush1.msra.mxu0 0.0
    %241 = vmatprep.subr.mxu0 0.0
    %242 = vmatpush1.msra.mxu0 0.0
    %243 = vmatprep.subr.mxu0 0.0
    %244 = vmatpush1.msra.mxu0 0.0
    %245 = vmatprep.subr.mxu0 0.0
    %246 = vmatpush1.msra.mxu0 0.0
    %247 = vmatprep.subr.mxu0 0.0
    %248 = vmatpush1.msra.mxu0 0.0
    %249 = vmatprep.subr.mxu0 0.0
    %250 = vmatpush1.msra.mxu0 0.0
    %251 = vmatprep.subr.mxu0 0.0
    %252 = vmatpush1.msra.mxu0 0.0
    %253 = vmatprep.subr.mxu0 0.0
    %254 = vmatpush1.msra.mxu0 0.0
    %255 = vmatprep.subr.mxu0 0.0
    %256 = vmatpush1.msra.mxu0 0.0
    %257 = vmatprep.subr.mxu0 0.0
    %258 = vmatpush1.msra.mxu0 0.0
    %259 = vmatprep.subr.mxu0 0.0
    %260 = vmatpush1.msra.mxu0 0.0
    %261 = vmatprep.subr.mxu0 0.0
    %262 = vmatpush1.msra.mxu0 0.0
    %263 = vmatprep.subr.mxu0 0.0
    %264 = vmatpush1.msra.mxu0 0.0
    %265 = vmatprep.subr.mxu0 0.0
    %266 = vmatpush1.msra.mxu0 0.0
    %267 = vmatprep.subr.mxu0 0.0
    %268 = vmatpush1.msra.mxu0 0.0
    %269 = vmatprep.subr.mxu0 0.0
    %270 = vmatpush1.msra.mxu0 0.0
    %271 = vmatprep.subr.mxu0 0.0
    %272 = vmatpush1.msra.mxu0 0.0
    %273 = vmatprep.subr.mxu0 0.0
    %274 = vmatpush1.msra.mxu0 0.0
    %275 = vmatprep.mubr.f32.mxu0 0.0
    %276 = vmatmul.mubr.f32.gmra.mrb[0].mxu0 %v157
    %v277 = vpop.f32.mrb[0].mxu0
    %v278 = vadd.f32 %v78, %v277
    %v279 = vpop.f32.mrb[0].mxu0
    %v280 = vadd.f32 %v82, %v279
    %281 = vmatprep.mubr.f32.mxu0 0.0
    %282 = vmatmul.mubr.f32.gmra.mrb[0].mxu0 %v160
    %v283 = vpop.f32.mrb[0].mxu0
    %v284 = vadd.f32 %v78, %v283
    %v285 = vpop.f32.mrb[0].mxu0
    %v286 = vadd.f32 %v82, %v285
    %287 = vdwg.mxu0
    %288 = vmatprep.subr.mxu0 %v26
    %289 = vmatpush1.msra.mxu0 %v25
    %290 = vmatprep.subr.mxu0 %v42
    %291 = vmatpush1.msra.mxu0 %v41
    %292 = vmatprep.subr.mxu0 %v173
    %293 = vmatpush1.msra.mxu0 %v170
    %294 = vmatprep.subr.mxu0 0.0
    %295 = vmatpush1.msra.mxu0 0.0
    %296 = vmatprep.subr.mxu0 0.0
    %297 = vmatpush1.msra.mxu0 0.0
    %298 = vmatprep.subr.mxu0 0.0
    %299 = vmatpush1.msra.mxu0 0.0
    %300 = vmatprep.subr.mxu0 0.0
    %301 = vmatpush1.msra.mxu0 0.0
    %302 = vmatprep.subr.mxu0 0.0
    %303 = vmatpush1.msra.mxu0 0.0
    %304 = vmatprep.subr.mxu0 0.0
    %305 = vmatpush1.msra.mxu0 0.0
    %306 = vmatprep.subr.mxu0 0.0
    %307 = vmatpush1.msra.mxu0 0.0
    %308 = vmatprep.subr.mxu0 0.0
    %309 = vmatpush1.msra.mxu0 0.0
    %310 = vmatprep.subr.mxu0 0.0
    %311 = vmatpush1.msra.mxu0 0.0
    %312 = vmatprep.subr.mxu0 0.0
    %313 = vmatpush1.msra.mxu0 0.0
    %314 = vmatprep.subr.mxu0 0.0
    %315 = vmatpush1.msra.mxu0 0.0
    %316 = vmatprep.subr.mxu0 0.0
    %317 = vmatpush1.msra.mxu0 0.0
    %318 = vmatprep.subr.mxu0 0.0
    %319 = vmatpush1.msra.mxu0 0.0
    %320 = vmatprep.subr.mxu0 0.0
    %321 = vmatpush1.msra.mxu0 0.0
    %322 = vmatprep.subr.mxu0 0.0
    %323 = vmatpush1.msra.mxu0 0.0
    %324 = vmatprep.subr.mxu0 0.0
    %325 = vmatpush1.msra.mxu0 0.0
    %326 = vmatprep.subr.mxu0 0.0
    %327 = vmatpush1.msra.mxu0 0.0
    %328 = vmatprep.subr.mxu0 0.0
    %329 = vmatpush1.msra.mxu0 0.0
    %330 = vmatprep.subr.mxu0 0.0
    %331 = vmatpush1.msra.mxu0 0.0
    %332 = vmatprep.subr.mxu0 0.0
    %333 = vmatpush1.msra.mxu0 0.0
    %334 = vmatprep.subr.mxu0 0.0
    %335 = vmatpush1.msra.mxu0 0.0
    %336 = vmatprep.subr.mxu0 0.0
    %337 = vmatpush1.msra.mxu0 0.0
    %338 = vmatprep.subr.mxu0 0.0
    %339 = vmatpush1.msra.mxu0 0.0
    %340 = vmatprep.subr.mxu0 0.0
    %341 = vmatpush1.msra.mxu0 0.0
    %342 = vmatprep.subr.mxu0 0.0
    %343 = vmatpush1.msra.mxu0 0.0
    %344 = vmatprep.subr.mxu0 0.0
    %345 = vmatpush1.msra.mxu0 0.0
    %346 = vmatprep.subr.mxu0 0.0
    %347 = vmatpush1.msra.mxu0 0.0
    %348 = vmatprep.subr.mxu0 0.0
    %349 = vmatpush1.msra.mxu0 0.0
    %350 = vmatprep.subr.mxu0 0.0
    %351 = vmatpush1.msra.mxu0 0.0
    %352 = vmatprep.mubr.f32.mxu0 0.0
    %353 = vmatmul.mubr.f32.gmra.mrb[0].mxu0 %v157
    %v354 = vpop.f32.mrb[0].mxu0
    %v355 = vadd.f32 %v86, %v354
    %v356 = vpop.f32.mrb[0].mxu0
    %v357 = vadd.f32 %v90, %v356
    %358 = vmatprep.mubr.f32.mxu0 0.0
    %359 = vmatmul.mubr.f32.gmra.mrb[0].mxu0 %v160
    %v360 = vpop.f32.mrb[0].mxu0
    %v361 = vadd.f32 %v86, %v360
    %v362 = vpop.f32.mrb[0].mxu0
    %v363 = vadd.f32 %v90, %v362
    %364 = vdwg.mxu0
    %365 = vmatprep.subr.mxu0 %v28
    %366 = vmatpush1.msra.mxu0 %v27
    %367 = vmatprep.subr.mxu0 %v44
    %368 = vmatpush1.msra.mxu0 %v43
    %369 = vmatprep.subr.mxu0 %v179
    %370 = vmatpush1.msra.mxu0 %v176
    %371 = vmatprep.subr.mxu0 0.0
    %372 = vmatpush1.msra.mxu0 0.0
    %373 = vmatprep.subr.mxu0 0.0
    %374 = vmatpush1.msra.mxu0 0.0
    %375 = vmatprep.subr.mxu0 0.0
    %376 = vmatpush1.msra.mxu0 0.0
    %377 = vmatprep.subr.mxu0 0.0
    %378 = vmatpush1.msra.mxu0 0.0
    %379 = vmatprep.subr.mxu0 0.0
    %380 = vmatpush1.msra.mxu0 0.0
    %381 = vmatprep.subr.mxu0 0.0
    %382 = vmatpush1.msra.mxu0 0.0
    %383 = vmatprep.subr.mxu0 0.0
    %384 = vmatpush1.msra.mxu0 0.0
    %385 = vmatprep.subr.mxu0 0.0
    %386 = vmatpush1.msra.mxu0 0.0
    %387 = vmatprep.subr.mxu0 0.0
    %388 = vmatpush1.msra.mxu0 0.0
    %389 = vmatprep.subr.mxu0 0.0
    %390 = vmatpush1.msra.mxu0 0.0
    %391 = vmatprep.subr.mxu0 0.0
    %392 = vmatpush1.msra.mxu0 0.0
    %393 = vmatprep.subr.mxu0 0.0
    %394 = vmatpush1.msra.mxu0 0.0
    %395 = vmatprep.subr.mxu0 0.0
    %396 = vmatpush1.msra.mxu0 0.0
    %397 = vmatprep.subr.mxu0 0.0
    %398 = vmatpush1.msra.mxu0 0.0
    %399 = vmatprep.subr.mxu0 0.0
    %400 = vmatpush1.msra.mxu0 0.0
    %401 = vmatprep.subr.mxu0 0.0
    %402 = vmatpush1.msra.mxu0 0.0
    %403 = vmatprep.subr.mxu0 0.0
    %404 = vmatpush1.msra.mxu0 0.0
    %405 = vmatprep.subr.mxu0 0.0
    %406 = vmatpush1.msra.mxu0 0.0
    %407 = vmatprep.subr.mxu0 0.0
    %408 = vmatpush1.msra.mxu0 0.0
    %409 = vmatprep.subr.mxu0 0.0
    %410 = vmatpush1.msra.mxu0 0.0
    %411 = vmatprep.subr.mxu0 0.0
    %412 = vmatpush1.msra.mxu0 0.0
    %413 = vmatprep.subr.mxu0 0.0
    %414 = vmatpush1.msra.mxu0 0.0
    %415 = vmatprep.subr.mxu0 0.0
    %416 = vmatpush1.msra.mxu0 0.0
    %417 = vmatprep.subr.mxu0 0.0
    %418 = vmatpush1.msra.mxu0 0.0
    %419 = vmatprep.subr.mxu0 0.0
    %420 = vmatpush1.msra.mxu0 0.0
    %421 = vmatprep.subr.mxu0 0.0
    %422 = vmatpush1.msra.mxu0 0.0
    %423 = vmatprep.subr.mxu0 0.0
    %424 = vmatpush1.msra.mxu0 0.0
    %425 = vmatprep.subr.mxu0 0.0
    %426 = vmatpush1.msra.mxu0 0.0
    %427 = vmatprep.subr.mxu0 0.0
    %428 = vmatpush1.msra.mxu0 0.0
    %429 = vmatprep.mubr.f32.mxu0 0.0
    %430 = vmatmul.mubr.f32.gmra.mrb[0].mxu0 %v157
    %v431 = vpop.f32.mrb[0].mxu0
    %v432 = vadd.f32 %v94, %v431
    %v433 = vpop.f32.mrb[0].mxu0
    %v434 = vadd.f32 %v98, %v433
    %435 = vmatprep.mubr.f32.mxu0 0.0
    %436 = vmatmul.mubr.f32.gmra.mrb[0].mxu0 %v160
    %v437 = vpop.f32.mrb[0].mxu0
    %v438 = vadd.f32 %v94, %v437
    %v439 = vpop.f32.mrb[0].mxu0
    %v440 = vadd.f32 %v98, %v439
    %441 = vdwg.mxu0
    %442 = vmatprep.subr.mxu0 %v30
    %443 = vmatpush1.msra.mxu0 %v29
    %444 = vmatprep.subr.mxu0 %v46
    %445 = vmatpush1.msra.mxu0 %v45
    %446 = vmatprep.subr.mxu0 %v185
    %447 = vmatpush1.msra.mxu0 %v182
    %448 = vmatprep.subr.mxu0 0.0
    %449 = vmatpush1.msra.mxu0 0.0
    %450 = vmatprep.subr.mxu0 0.0
    %451 = vmatpush1.msra.mxu0 0.0
    %452 = vmatprep.subr.mxu0 0.0
    %453 = vmatpush1.msra.mxu0 0.0
    %454 = vmatprep.subr.mxu0 0.0
    %455 = vmatpush1.msra.mxu0 0.0
    %456 = vmatprep.subr.mxu0 0.0
    %457 = vmatpush1.msra.mxu0 0.0
    %458 = vmatprep.subr.mxu0 0.0
    %459 = vmatpush1.msra.mxu0 0.0
    %460 = vmatprep.subr.mxu0 0.0
    %461 = vmatpush1.msra.mxu0 0.0
    %462 = vmatprep.subr.mxu0 0.0
    %463 = vmatpush1.msra.mxu0 0.0
    %464 = vmatprep.subr.mxu0 0.0
    %465 = vmatpush1.msra.mxu0 0.0
    %466 = vmatprep.subr.mxu0 0.0
    %467 = vmatpush1.msra.mxu0 0.0
    %468 = vmatprep.subr.mxu0 0.0
    %469 = vmatpush1.msra.mxu0 0.0
    %470 = vmatprep.subr.mxu0 0.0
    %471 = vmatpush1.msra.mxu0 0.0
    %472 = vmatprep.subr.mxu0 0.0
    %473 = vmatpush1.msra.mxu0 0.0
    %474 = vmatprep.subr.mxu0 0.0
    %475 = vmatpush1.msra.mxu0 0.0
    %476 = vmatprep.subr.mxu0 0.0
    %477 = vmatpush1.msra.mxu0 0.0
    %478 = vmatprep.subr.mxu0 0.0
    %479 = vmatpush1.msra.mxu0 0.0
    %480 = vmatprep.subr.mxu0 0.0
    %481 = vmatpush1.msra.mxu0 0.0
    %482 = vmatprep.subr.mxu0 0.0
    %483 = vmatpush1.msra.mxu0 0.0
    %484 = vmatprep.subr.mxu0 0.0
    %485 = vmatpush1.msra.mxu0 0.0
    %486 = vmatprep.subr.mxu0 0.0
    %487 = vmatpush1.msra.mxu0 0.0
    %488 = vmatprep.subr.mxu0 0.0
    %489 = vmatpush1.msra.mxu0 0.0
    %490 = vmatprep.subr.mxu0 0.0
    %491 = vmatpush1.msra.mxu0 0.0
    %492 = vmatprep.subr.mxu0 0.0
    %493 = vmatpush1.msra.mxu0 0.0
    %494 = vmatprep.subr.mxu0 0.0
    %495 = vmatpush1.msra.mxu0 0.0
    %496 = vmatprep.subr.mxu0 0.0
    %497 = vmatpush1.msra.mxu0 0.0
    %498 = vmatprep.subr.mxu0 0.0
    %499 = vmatpush1.msra.mxu0 0.0
    %500 = vmatprep.subr.mxu0 0.0
    %501 = vmatpush1.msra.mxu0 0.0
    %502 = vmatprep.subr.mxu0 0.0
    %503 = vmatpush1.msra.mxu0 0.0
    %504 = vmatprep.subr.mxu0 0.0
    %505 = vmatpush1.msra.mxu0 0.0
    %506 = vmatprep.mubr.f32.mxu0 0.0
    %507 = vmatmul.mubr.f32.gmra.mrb[0].mxu0 %v157
    %v508 = vpop.f32.mrb[0].mxu0
    %v509 = vadd.f32 %v102, %v508
    %v510 = vpop.f32.mrb[0].mxu0
    %v511 = vadd.f32 %v106, %v510
    %512 = vmatprep.mubr.f32.mxu0 0.0
    %513 = vmatmul.mubr.f32.gmra.mrb[0].mxu0 %v160
    %v514 = vpop.f32.mrb[0].mxu0
    %v515 = vadd.f32 %v102, %v514
    %v516 = vpop.f32.mrb[0].mxu0
    %v517 = vadd.f32 %v106, %v516
    %518 = vdwg.mxu0
    %519 = vmatprep.subr.mxu0 %v32
    %520 = vmatpush1.msra.mxu0 %v31
    %521 = vmatprep.subr.mxu0 %v48
    %522 = vmatpush1.msra.mxu0 %v47
    %523 = vmatprep.subr.mxu0 %v191
    %524 = vmatpush1.msra.mxu0 %v188
    %525 = vmatprep.subr.mxu0 0.0
    %526 = vmatpush1.msra.mxu0 0.0
    %527 = vmatprep.subr.mxu0 0.0
    %528 = vmatpush1.msra.mxu0 0.0
    %529 = vmatprep.subr.mxu0 0.0
    %530 = vmatpush1.msra.mxu0 0.0
    %531 = vmatprep.subr.mxu0 0.0
    %532 = vmatpush1.msra.mxu0 0.0
    %533 = vmatprep.subr.mxu0 0.0
    %534 = vmatpush1.msra.mxu0 0.0
    %535 = vmatprep.subr.mxu0 0.0
    %536 = vmatpush1.msra.mxu0 0.0
    %537 = vmatprep.subr.mxu0 0.0
    %538 = vmatpush1.msra.mxu0 0.0
    %539 = vmatprep.subr.mxu0 0.0
    %540 = vmatpush1.msra.mxu0 0.0
    %541 = vmatprep.subr.mxu0 0.0
    %542 = vmatpush1.msra.mxu0 0.0
    %543 = vmatprep.subr.mxu0 0.0
    %544 = vmatpush1.msra.mxu0 0.0
    %545 = vmatprep.subr.mxu0 0.0
    %546 = vmatpush1.msra.mxu0 0.0
    %547 = vmatprep.subr.mxu0 0.0
    %548 = vmatpush1.msra.mxu0 0.0
    %549 = vmatprep.subr.mxu0 0.0
    %550 = vmatpush1.msra.mxu0 0.0
    %551 = vmatprep.subr.mxu0 0.0
    %552 = vmatpush1.msra.mxu0 0.0
    %553 = vmatprep.subr.mxu0 0.0
    %554 = vmatpush1.msra.mxu0 0.0
    %555 = vmatprep.subr.mxu0 0.0
    %556 = vmatpush1.msra.mxu0 0.0
    %557 = vmatprep.subr.mxu0 0.0
    %558 = vmatpush1.msra.mxu0 0.0
    %559 = vmatprep.subr.mxu0 0.0
    %560 = vmatpush1.msra.mxu0 0.0
    %561 = vmatprep.subr.mxu0 0.0
    %562 = vmatpush1.msra.mxu0 0.0
    %563 = vmatprep.subr.mxu0 0.0
    %564 = vmatpush1.msra.mxu0 0.0
    %565 = vmatprep.subr.mxu0 0.0
    %566 = vmatpush1.msra.mxu0 0.0
    %567 = vmatprep.subr.mxu0 0.0
    %568 = vmatpush1.msra.mxu0 0.0
    %569 = vmatprep.subr.mxu0 0.0
    %570 = vmatpush1.msra.mxu0 0.0
    %571 = vmatprep.subr.mxu0 0.0
    %572 = vmatpush1.msra.mxu0 0.0
    %573 = vmatprep.subr.mxu0 0.0
    %574 = vmatpush1.msra.mxu0 0.0
    %575 = vmatprep.subr.mxu0 0.0
    %576 = vmatpush1.msra.mxu0 0.0
    %577 = vmatprep.subr.mxu0 0.0
    %578 = vmatpush1.msra.mxu0 0.0
    %579 = vmatprep.subr.mxu0 0.0
    %580 = vmatpush1.msra.mxu0 0.0
    %581 = vmatprep.subr.mxu0 0.0
    %582 = vmatpush1.msra.mxu0 0.0
    %583 = vmatprep.mubr.f32.mxu0 0.0
    %584 = vmatmul.mubr.f32.gmra.mrb[0].mxu0 %v157
    %v585 = vpop.f32.mrb[0].mxu0
    %v586 = vadd.f32 %v110, %v585
    %v587 = vpop.f32.mrb[0].mxu0
    %v588 = vadd.f32 %v114, %v587
    %589 = vmatprep.mubr.f32.mxu0 0.0
    %590 = vmatmul.mubr.f32.gmra.mrb[0].mxu0 %v160
    %v591 = vpop.f32.mrb[0].mxu0
    %v592 = vadd.f32 %v110, %v591
    %v593 = vpop.f32.mrb[0].mxu0
    %v594 = vadd.f32 %v114, %v593
    %595 = vdwg.mxu0
    %596 = vmatprep.subr.mxu0 %v34
    %597 = vmatpush1.msra.mxu0 %v33
    %598 = vmatprep.subr.mxu0 %v50
    %599 = vmatpush1.msra.mxu0 %v49
    %600 = vmatprep.subr.mxu0 %v197
    %601 = vmatpush1.msra.mxu0 %v194
    %602 = vmatprep.subr.mxu0 0.0
    %603 = vmatpush1.msra.mxu0 0.0
    %604 = vmatprep.subr.mxu0 0.0
    %605 = vmatpush1.msra.mxu0 0.0
    %606 = vmatprep.subr.mxu0 0.0
    %607 = vmatpush1.msra.mxu0 0.0
    %608 = vmatprep.subr.mxu0 0.0
    %609 = vmatpush1.msra.mxu0 0.0
    %610 = vmatprep.subr.mxu0 0.0
    %611 = vmatpush1.msra.mxu0 0.0
    %612 = vmatprep.subr.mxu0 0.0
    %613 = vmatpush1.msra.mxu0 0.0
    %614 = vmatprep.subr.mxu0 0.0
    %615 = vmatpush1.msra.mxu0 0.0
    %616 = vmatprep.subr.mxu0 0.0
    %617 = vmatpush1.msra.mxu0 0.0
    %618 = vmatprep.subr.mxu0 0.0
    %619 = vmatpush1.msra.mxu0 0.0
    %620 = vmatprep.subr.mxu0 0.0
    %621 = vmatpush1.msra.mxu0 0.0
    %622 = vmatprep.subr.mxu0 0.0
    %623 = vmatpush1.msra.mxu0 0.0
    %624 = vmatprep.subr.mxu0 0.0
    %625 = vmatpush1.msra.mxu0 0.0
    %626 = vmatprep.subr.mxu0 0.0
    %627 = vmatpush1.msra.mxu0 0.0
    %628 = vmatprep.subr.mxu0 0.0
    %629 = vmatpush1.msra.mxu0 0.0
    %630 = vmatprep.subr.mxu0 0.0
    %631 = vmatpush1.msra.mxu0 0.0
    %632 = vmatprep.subr.mxu0 0.0
    %633 = vmatpush1.msra.mxu0 0.0
    %634 = vmatprep.subr.mxu0 0.0
    %635 = vmatpush1.msra.mxu0 0.0
    %636 = vmatprep.subr.mxu0 0.0
    %637 = vmatpush1.msra.mxu0 0.0
    %638 = vmatprep.subr.mxu0 0.0
    %639 = vmatpush1.msra.mxu0 0.0
    %640 = vmatprep.subr.mxu0 0.0
    %641 = vmatpush1.msra.mxu0 0.0
    %642 = vmatprep.subr.mxu0 0.0
    %643 = vmatpush1.msra.mxu0 0.0
    %644 = vmatprep.subr.mxu0 0.0
    %645 = vmatpush1.msra.mxu0 0.0
    %646 = vmatprep.subr.mxu0 0.0
    %647 = vmatpush1.msra.mxu0 0.0
    %648 = vmatprep.subr.mxu0 0.0
    %649 = vmatpush1.msra.mxu0 0.0
    %650 = vmatprep.subr.mxu0 0.0
    %651 = vmatpush1.msra.mxu0 0.0
    %652 = vmatprep.subr.mxu0 0.0
    %653 = vmatpush1.msra.mxu0 0.0
    %654 = vmatprep.subr.mxu0 0.0
    %655 = vmatpush1.msra.mxu0 0.0
    %656 = vmatprep.subr.mxu0 0.0
    %657 = vmatpush1.msra.mxu0 0.0
    %658 = vmatprep.subr.mxu0 0.0
    %659 = vmatpush1.msra.mxu0 0.0
    %660 = vmatprep.mubr.f32.mxu0 0.0
    %661 = vmatmul.mubr.f32.gmra.mrb[0].mxu0 %v157
    %v662 = vpop.f32.mrb[0].mxu0
    %v663 = vadd.f32 %v118, %v662
    %v664 = vpop.f32.mrb[0].mxu0
    %v665 = vadd.f32 %v122, %v664
    %666 = vmatprep.mubr.f32.mxu0 0.0
    %667 = vmatmul.mubr.f32.gmra.mrb[0].mxu0 %v160
    %v668 = vpop.f32.mrb[0].mxu0
    %v669 = vadd.f32 %v118, %v668
    %v670 = vpop.f32.mrb[0].mxu0
    %v671 = vadd.f32 %v122, %v670
    %672 = vdwg.mxu0
    %673 = vmatprep.subr.mxu0 %v36
    %674 = vmatpush1.msra.mxu0 %v35
    %675 = vmatprep.subr.mxu0 %v52
    %676 = vmatpush1.msra.mxu0 %v51
    %677 = vmatprep.subr.mxu0 %v203
    %678 = vmatpush1.msra.mxu0 %v200
    %679 = vmatprep.subr.mxu0 0.0
    %680 = vmatpush1.msra.mxu0 0.0
    %681 = vmatprep.subr.mxu0 0.0
    %682 = vmatpush1.msra.mxu0 0.0
    %683 = vmatprep.subr.mxu0 0.0
    %684 = vmatpush1.msra.mxu0 0.0
    %685 = vmatprep.subr.mxu0 0.0
    %686 = vmatpush1.msra.mxu0 0.0
    %687 = vmatprep.subr.mxu0 0.0
    %688 = vmatpush1.msra.mxu0 0.0
    %689 = vmatprep.subr.mxu0 0.0
    %690 = vmatpush1.msra.mxu0 0.0
    %691 = vmatprep.subr.mxu0 0.0
    %692 = vmatpush1.msra.mxu0 0.0
    %693 = vmatprep.subr.mxu0 0.0
    %694 = vmatpush1.msra.mxu0 0.0
    %695 = vmatprep.subr.mxu0 0.0
    %696 = vmatpush1.msra.mxu0 0.0
    %697 = vmatprep.subr.mxu0 0.0
    %698 = vmatpush1.msra.mxu0 0.0
    %699 = vmatprep.subr.mxu0 0.0
    %700 = vmatpush1.msra.mxu0 0.0
    %701 = vmatprep.subr.mxu0 0.0
    %702 = vmatpush1.msra.mxu0 0.0
    %703 = vmatprep.subr.mxu0 0.0
    %704 = vmatpush1.msra.mxu0 0.0
    %705 = vmatprep.subr.mxu0 0.0
    %706 = vmatpush1.msra.mxu0 0.0
    %707 = vmatprep.subr.mxu0 0.0
    %708 = vmatpush1.msra.mxu0 0.0
    %709 = vmatprep.subr.mxu0 0.0
    %710 = vmatpush1.msra.mxu0 0.0
    %711 = vmatprep.subr.mxu0 0.0
    %712 = vmatpush1.msra.mxu0 0.0
    %713 = vmatprep.subr.mxu0 0.0
    %714 = vmatpush1.msra.mxu0 0.0
    %715 = vmatprep.subr.mxu0 0.0
    %716 = vmatpush1.msra.mxu0 0.0
    %717 = vmatprep.subr.mxu0 0.0
    %718 = vmatpush1.msra.mxu0 0.0
    %719 = vmatprep.subr.mxu0 0.0
    %720 = vmatpush1.msra.mxu0 0.0
    %721 = vmatprep.subr.mxu0 0.0
    %722 = vmatpush1.msra.mxu0 0.0
    %723 = vmatprep.subr.mxu0 0.0
    %724 = vmatpush1.msra.mxu0 0.0
    %725 = vmatprep.subr.mxu0 0.0
    %726 = vmatpush1.msra.mxu0 0.0
    %727 = vmatprep.subr.mxu0 0.0
    %728 = vmatpush1.msra.mxu0 0.0
    %729 = vmatprep.subr.mxu0 0.0
    %730 = vmatpush1.msra.mxu0 0.0
    %731 = vmatprep.subr.mxu0 0.0
    %732 = vmatpush1.msra.mxu0 0.0
    %733 = vmatprep.subr.mxu0 0.0
    %734 = vmatpush1.msra.mxu0 0.0
    %735 = vmatprep.subr.mxu0 0.0
    %736 = vmatpush1.msra.mxu0 0.0
    %737 = vmatprep.mubr.f32.mxu0 0.0
    %738 = vmatmul.mubr.f32.gmra.mrb[0].mxu0 %v157
    %v739 = vpop.f32.mrb[0].mxu0
    %v740 = vadd.f32 %v126, %v739
    %v741 = vpop.f32.mrb[0].mxu0
    %v742 = vadd.f32 %v130, %v741
    %743 = vmatprep.mubr.f32.mxu0 0.0
    %744 = vmatmul.mubr.f32.gmra.mrb[0].mxu0 %v160
    %v745 = vpop.f32.mrb[0].mxu0
    %v746 = vadd.f32 %v126, %v745
    %v747 = vpop.f32.mrb[0].mxu0
    %v748 = vadd.f32 %v130, %v747
    %749 = vdwg.mxu0
    %750 = vmatprep.subr.mxu0 %v38
    %751 = vmatpush1.msra.mxu0 %v37
    %752 = vmatprep.subr.mxu0 %v54
    %753 = vmatpush1.msra.mxu0 %v53
    %754 = vmatprep.subr.mxu0 %v209
    %755 = vmatpush1.msra.mxu0 %v206
    %756 = vmatprep.subr.mxu0 0.0
    %757 = vmatpush1.msra.mxu0 0.0
    %758 = vmatprep.subr.mxu0 0.0
    %759 = vmatpush1.msra.mxu0 0.0
    %760 = vmatprep.subr.mxu0 0.0
    %761 = vmatpush1.msra.mxu0 0.0
    %762 = vmatprep.subr.mxu0 0.0
    %763 = vmatpush1.msra.mxu0 0.0
    %764 = vmatprep.subr.mxu0 0.0
    %765 = vmatpush1.msra.mxu0 0.0
    %766 = vmatprep.subr.mxu0 0.0
    %767 = vmatpush1.msra.mxu0 0.0
    %768 = vmatprep.subr.mxu0 0.0
    %769 = vmatpush1.msra.mxu0 0.0
    %770 = vmatprep.subr.mxu0 0.0
    %771 = vmatpush1.msra.mxu0 0.0
    %772 = vmatprep.subr.mxu0 0.0
    %773 = vmatpush1.msra.mxu0 0.0
    %774 = vmatprep.subr.mxu0 0.0
    %775 = vmatpush1.msra.mxu0 0.0
    %776 = vmatprep.subr.mxu0 0.0
    %777 = vmatpush1.msra.mxu0 0.0
    %778 = vmatprep.subr.mxu0 0.0
    %779 = vmatpush1.msra.mxu0 0.0
    %780 = vmatprep.subr.mxu0 0.0
    %781 = vmatpush1.msra.mxu0 0.0
    %782 = vmatprep.subr.mxu0 0.0
    %783 = vmatpush1.msra.mxu0 0.0
    %784 = vmatprep.subr.mxu0 0.0
    %785 = vmatpush1.msra.mxu0 0.0
    %786 = vmatprep.subr.mxu0 0.0
    %787 = vmatpush1.msra.mxu0 0.0
    %788 = vmatprep.subr.mxu0 0.0
    %789 = vmatpush1.msra.mxu0 0.0
    %790 = vmatprep.subr.mxu0 0.0
    %791 = vmatpush1.msra.mxu0 0.0
    %792 = vmatprep.subr.mxu0 0.0
    %793 = vmatpush1.msra.mxu0 0.0
    %794 = vmatprep.subr.mxu0 0.0
    %795 = vmatpush1.msra.mxu0 0.0
    %796 = vmatprep.subr.mxu0 0.0
    %797 = vmatpush1.msra.mxu0 0.0
    %798 = vmatprep.subr.mxu0 0.0
    %799 = vmatpush1.msra.mxu0 0.0
    %800 = vmatprep.subr.mxu0 0.0
    %801 = vmatpush1.msra.mxu0 0.0
    %802 = vmatprep.subr.mxu0 0.0
    %803 = vmatpush1.msra.mxu0 0.0
    %804 = vmatprep.subr.mxu0 0.0
    %805 = vmatpush1.msra.mxu0 0.0
    %806 = vmatprep.subr.mxu0 0.0
    %807 = vmatpush1.msra.mxu0 0.0
    %808 = vmatprep.subr.mxu0 0.0
    %809 = vmatpush1.msra.mxu0 0.0
    %810 = vmatprep.subr.mxu0 0.0
    %811 = vmatpush1.msra.mxu0 0.0
    %812 = vmatprep.subr.mxu0 0.0
    %813 = vmatpush1.msra.mxu0 0.0
    %814 = vmatprep.mubr.f32.mxu0 0.0
    %815 = vmatmul.mubr.f32.gmra.mrb[0].mxu0 %v157
    %v816 = vpop.f32.mrb[0].mxu0
    %v817 = vadd.f32 %v134, %v816
    %v818 = vpop.f32.mrb[0].mxu0
    %v819 = vadd.f32 %v138, %v818
    %820 = vmatprep.mubr.f32.mxu0 0.0
    %821 = vmatmul.mubr.f32.gmra.mrb[0].mxu0 %v160
    %v822 = vpop.f32.mrb[0].mxu0
    %v823 = vadd.f32 %v134, %v822
    %v824 = vpop.f32.mrb[0].mxu0
    %v825 = vadd.f32 %v138, %v824
    %826 = vdwg.mxu0
    %v827 = vmax.f32 %v278, 0.0
    %v828 = vmax.f32 %v280, 0.0
    %v829 = vmax.f32 %v355, 0.0
    %v830 = vmax.f32 %v357, 0.0
    %v831 = vmax.f32 %v432, 0.0
    %v832 = vmax.f32 %v434, 0.0
    %v833 = vmax.f32 %v509, 0.0
    %v834 = vmax.f32 %v511, 0.0
    %v835 = vmax.f32 %v586, 0.0
    %v836 = vmax.f32 %v588, 0.0
    %v837 = vmax.f32 %v663, 0.0
    %v838 = vmax.f32 %v665, 0.0
    %v839 = vmax.f32 %v740, 0.0
    %v840 = vmax.f32 %v742, 0.0
    %v841 = vmax.f32 %v817, 0.0
    %v842 = vmax.f32 %v819, 0.0
    %v843 = vmax.f32 %v284, 0.0
    %v844 = vmax.f32 %v286, 0.0
    %v845 = vmax.f32 %v361, 0.0
    %v846 = vmax.f32 %v363, 0.0
    %v847 = vmax.f32 %v438, 0.0
    %v848 = vmax.f32 %v440, 0.0
    %v849 = vmax.f32 %v515, 0.0
    %v850 = vmax.f32 %v517, 0.0
    %v851 = vmax.f32 %v592, 0.0
    %v852 = vmax.f32 %v594, 0.0
    %v853 = vmax.f32 %v669, 0.0
    %v854 = vmax.f32 %v671, 0.0
    %v855 = vmax.f32 %v746, 0.0
    %v856 = vmax.f32 %v748, 0.0
    %v857 = vmax.f32 %v823, 0.0
    %v858 = vmax.f32 %v825, 0.0
    %v859 = vld [vmem:[%s3] sm:$0xff]
    %v860 = vld [vmem:[%s3 + $0x8] sm:$0xff]
    %v861 = vld [vmem:[%s3 + $0x10] sm:$0xff]
    %v862 = vld [vmem:[%s3 + $0x18] sm:$0xff]
    %v863 = vld [vmem:[%s3 + $0x20] sm:$0xff]
    %v864 = vld [vmem:[%s3 + $0x28] sm:$0xff]
    %v865 = vld [vmem:[%s3 + $0x30] sm:$0xff]
    %v866 = vld [vmem:[%s3 + $0x38] sm:$0xff]
    %v867 = vld [vmem:[%s3 + $0x40] sm:$0xff]
    %v868 = vld [vmem:[%s3 + $0x48] sm:$0xff]
    %v869 = vld [vmem:[%s3 + $0x50] sm:$0xff]
    %v870 = vld [vmem:[%s3 + $0x58] sm:$0xff]
    %v871 = vld [vmem:[%s3 + $0x60] sm:$0xff]
    %v872 = vld [vmem:[%s3 + $0x68] sm:$0xff]
    %v873 = vld [vmem:[%s3 + $0x70] sm:$0xff]
    %v874 = vld [vmem:[%s3 + $0x78] sm:$0xff]
    %v875 = vld [vmem:[%s3 + $0x80] sm:$0xff]
    %v876 = vld [vmem:[%s3 + $0x88] sm:$0xff]
    %v877 = vld [vmem:[%s3 + $0x90] sm:$0xff]
    %v878 = vld [vmem:[%s3 + $0x98] sm:$0xff]
    %v879 = vld [vmem:[%s3 + $0xa0] sm:$0xff]
    %v880 = vld [vmem:[%s3 + $0xa8] sm:$0xff]
    %v881 = vld [vmem:[%s3 + $0xb0] sm:$0xff]
    %v882 = vld [vmem:[%s3 + $0xb8] sm:$0xff]
    %v883 = vld [vmem:[%s3 + $0xc0] sm:$0xff]
    %v884 = vld [vmem:[%s3 + $0xc8] sm:$0xff]
    %v885 = vld [vmem:[%s3 + $0xd0] sm:$0xff]
    %v886 = vld [vmem:[%s3 + $0xd8] sm:$0xff]
    %v887 = vld [vmem:[%s3 + $0xe0] sm:$0xff]
    %v888 = vld [vmem:[%s3 + $0xe8] sm:$0xff]
    %v889 = vld [vmem:[%s3 + $0xf0] sm:$0xff]
    %v890 = vld [vmem:[%s3 + $0xf8] sm:$0xff]
    %v891 = vld [vmem:[%s3 + $0x100] sm:$0xff]
    %v892 = vld [vmem:[%s3 + $0x108] sm:$0xff]
    %v893 = vld [vmem:[%s3 + $0x110] sm:$0xff]
    %v894 = vld [vmem:[%s3 + $0x118] sm:$0xff]
    %v895 = vld [vmem:[%s3 + $0x120] sm:$0xff]
    %v896 = vld [vmem:[%s3 + $0x128] sm:$0xff]
    %v897 = vld [vmem:[%s3 + $0x130] sm:$0xff]
    %v898 = vld [vmem:[%s3 + $0x138] sm:$0xff]
    %v899 = vld [vmem:[%s3 + $0x140] sm:$0xff]
    %v900 = vld [vmem:[%s3 + $0x148] sm:$0xff]
    %v901 = vld [vmem:[%s3 + $0x150] sm:$0xff]
    %v902 = vld [vmem:[%s3 + $0x158] sm:$0xff]
    %v903 = vld [vmem:[%s3 + $0x160] sm:$0xff]
    %v904 = vld [vmem:[%s3 + $0x168] sm:$0xff]
    %v905 = vld [vmem:[%s3 + $0x170] sm:$0xff]
    %v906 = vld [vmem:[%s3 + $0x178] sm:$0xff]
    %v907 = vld [vmem:[%s3 + $0x180] sm:$0xff]
    %v908 = vld [vmem:[%s3 + $0x188] sm:$0xff]
    %v909 = vld [vmem:[%s3 + $0x190] sm:$0xff]
    %v910 = vld [vmem:[%s3 + $0x198] sm:$0xff]
    %v911 = vld [vmem:[%s3 + $0x1a0] sm:$0xff]
    %v912 = vld [vmem:[%s3 + $0x1a8] sm:$0xff]
    %v913 = vld [vmem:[%s3 + $0x1b0] sm:$0xff]
    %v914 = vld [vmem:[%s3 + $0x1b8] sm:$0xff]
    %v915 = vld [vmem:[%s3 + $0x1c0] sm:$0xff]
    %v916 = vld [vmem:[%s3 + $0x1c8] sm:$0xff]
    %v917 = vld [vmem:[%s3 + $0x1d0] sm:$0xff]
    %v918 = vld [vmem:[%s3 + $0x1d8] sm:$0xff]
    %v919 = vld [vmem:[%s3 + $0x1e0] sm:$0xff]
    %v920 = vld [vmem:[%s3 + $0x1e8] sm:$0xff]
    %v921 = vld [vmem:[%s3 + $0x1f0] sm:$0xff]
    %v922 = vld [vmem:[%s3 + $0x1f8] sm:$0xff]
    %v923 = vld [vmem:[%s3 + $0x200] sm:$0xff]
    %v924 = vld [vmem:[%s3 + $0x208] sm:$0xff]
    %v925 = vld [vmem:[%s3 + $0x210] sm:$0xff]
    %v926 = vld [vmem:[%s3 + $0x218] sm:$0xff]
    %v927 = vld [vmem:[%s3 + $0x220] sm:$0xff]
    %v928 = vld [vmem:[%s3 + $0x228] sm:$0xff]
    %v929 = vld [vmem:[%s3 + $0x230] sm:$0xff]
    %v930 = vld [vmem:[%s3 + $0x238] sm:$0xff]
    %v931 = vld [vmem:[%s3 + $0x240] sm:$0xff]
    %v932 = vld [vmem:[%s3 + $0x248] sm:$0xff]
    %v933 = vld [vmem:[%s3 + $0x250] sm:$0xff]
    %v934 = vld [vmem:[%s3 + $0x258] sm:$0xff]
    %v935 = vld [vmem:[%s3 + $0x260] sm:$0xff]
    %v936 = vld [vmem:[%s3 + $0x268] sm:$0xff]
    %v937 = vld [vmem:[%s3 + $0x270] sm:$0xff]
    %v938 = vld [vmem:[%s3 + $0x278] sm:$0xff]
    %v939 = vld [vmem:[%s3 + $0x280] sm:$0xff]
    %v940 = vld [vmem:[%s3 + $0x288] sm:$0xff]
    %v941 = vld [vmem:[%s3 + $0x290] sm:$0xff]
    %v942 = vld [vmem:[%s3 + $0x298] sm:$0xff]
    %v943 = vld [vmem:[%s3 + $0x2a0] sm:$0xff]
    %v944 = vld [vmem:[%s3 + $0x2a8] sm:$0xff]
    %v945 = vld [vmem:[%s3 + $0x2b0] sm:$0xff]
    %v946 = vld [vmem:[%s3 + $0x2b8] sm:$0xff]
    %v947 = vld [vmem:[%s3 + $0x2c0] sm:$0xff]
    %v948 = vld [vmem:[%s3 + $0x2c8] sm:$0xff]
    %v949 = vld [vmem:[%s3 + $0x2d0] sm:$0xff]
    %v950 = vld [vmem:[%s3 + $0x2d8] sm:$0xff]
    %v951 = vld [vmem:[%s3 + $0x2e0] sm:$0xff]
    %v952 = vld [vmem:[%s3 + $0x2e8] sm:$0xff]
    %v953 = vld [vmem:[%s3 + $0x2f0] sm:$0xff]
    %v954 = vld [vmem:[%s3 + $0x2f8] sm:$0xff]
    %v955 = vld [vmem:[%s3 + $0x300] sm:$0xff]
    %v956 = vld [vmem:[%s3 + $0x308] sm:$0xff]
    %v957 = vld [vmem:[%s3 + $0x310] sm:$0xff]
    %v958 = vld [vmem:[%s3 + $0x318] sm:$0xff]
    %v959 = vld [vmem:[%s3 + $0x320] sm:$0xff]
    %v960 = vld [vmem:[%s3 + $0x328] sm:$0xff]
    %v961 = vld [vmem:[%s3 + $0x330] sm:$0xff]
    %v962 = vld [vmem:[%s3 + $0x338] sm:$0xff]
    %v963 = vld [vmem:[%s3 + $0x340] sm:$0xff]
    %v964 = vld [vmem:[%s3 + $0x348] sm:$0xff]
    %v965 = vld [vmem:[%s3 + $0x350] sm:$0xff]
    %v966 = vld [vmem:[%s3 + $0x358] sm:$0xff]
    %v967 = vld [vmem:[%s3 + $0x360] sm:$0xff]
    %v968 = vld [vmem:[%s3 + $0x368] sm:$0xff]
    %v969 = vld [vmem:[%s3 + $0x370] sm:$0xff]
    %v970 = vld [vmem:[%s3 + $0x378] sm:$0xff]
    %v971 = vld [vmem:[%s3 + $0x380] sm:$0xff]
    %v972 = vld [vmem:[%s3 + $0x388] sm:$0xff]
    %v973 = vld [vmem:[%s3 + $0x390] sm:$0xff]
    %v974 = vld [vmem:[%s3 + $0x398] sm:$0xff]
    %v975 = vld [vmem:[%s3 + $0x3a0] sm:$0xff]
    %v976 = vld [vmem:[%s3 + $0x3a8] sm:$0xff]
    %v977 = vld [vmem:[%s3 + $0x3b0] sm:$0xff]
    %v978 = vld [vmem:[%s3 + $0x3b8] sm:$0xff]
    %v979 = vld [vmem:[%s3 + $0x3c0] sm:$0xff]
    %v980 = vld [vmem:[%s3 + $0x3c8] sm:$0xff]
    %v981 = vld [vmem:[%s3 + $0x3d0] sm:$0xff]
    %v982 = vld [vmem:[%s3 + $0x3d8] sm:$0xff]
    %v983 = vld [vmem:[%s3 + $0x3e0] sm:$0xff]
    %v984 = vld [vmem:[%s3 + $0x3e8] sm:$0xff]
    %v985 = vld [vmem:[%s3 + $0x3f0] sm:$0xff]
    %v986 = vld [vmem:[%s3 + $0x3f8] sm:$0xff]
    %v987 = vld [vmem:[%s3 + $0x400] sm:$0xff]
    %v988 = vld [vmem:[%s3 + $0x408] sm:$0xff]
    %v989 = vld [vmem:[%s3 + $0x410] sm:$0xff]
    %v990 = vld [vmem:[%s3 + $0x418] sm:$0xff]
    %v991 = vld [vmem:[%s3 + $0x420] sm:$0xff]
    %v992 = vld [vmem:[%s3 + $0x428] sm:$0xff]
    %v993 = vld [vmem:[%s3 + $0x430] sm:$0xff]
    %v994 = vld [vmem:[%s3 + $0x438] sm:$0xff]
    %v995 = vld [vmem:[%s3 + $0x440] sm:$0xff]
    %v996 = vld [vmem:[%s3 + $0x448] sm:$0xff]
    %v997 = vld [vmem:[%s3 + $0x450] sm:$0xff]
    %v998 = vld [vmem:[%s3 + $0x458] sm:$0xff]
    %v999 = vld [vmem:[%s3 + $0x460] sm:$0xff]
    %v1000 = vld [vmem:[%s3 + $0x468] sm:$0xff]
    %v1001 = vld [vmem:[%s3 + $0x470] sm:$0xff]
    %v1002 = vld [vmem:[%s3 + $0x478] sm:$0xff]
    %v1003 = vld [vmem:[%s3 + $0x480] sm:$0xff]
    %v1004 = vld [vmem:[%s3 + $0x488] sm:$0xff]
    %v1005 = vld [vmem:[%s3 + $0x490] sm:$0xff]
    %v1006 = vld [vmem:[%s3 + $0x498] sm:$0xff]
    %v1007 = vld [vmem:[%s3 + $0x4a0] sm:$0xff]
    %v1008 = vld [vmem:[%s3 + $0x4a8] sm:$0xff]
    %v1009 = vld [vmem:[%s3 + $0x4b0] sm:$0xff]
    %v1010 = vld [vmem:[%s3 + $0x4b8] sm:$0xff]
    %v1011 = vld [vmem:[%s3 + $0x4c0] sm:$0xff]
    %v1012 = vld [vmem:[%s3 + $0x4c8] sm:$0xff]
    %v1013 = vld [vmem:[%s3 + $0x4d0] sm:$0xff]
    %v1014 = vld [vmem:[%s3 + $0x4d8] sm:$0xff]
    %v1015 = vld [vmem:[%s3 + $0x4e0] sm:$0xff]
    %v1016 = vld [vmem:[%s3 + $0x4e8] sm:$0xff]
    %v1017 = vld [vmem:[%s3 + $0x4f0] sm:$0xff]
    %v1018 = vld [vmem:[%s3 + $0x4f8] sm:$0xff]
    %v1019 = vld [vmem:[%s3 + $0x500] sm:$0xff]
    %v1020 = vld [vmem:[%s3 + $0x508] sm:$0xff]
    %v1021 = vld [vmem:[%s3 + $0x510] sm:$0xff]
    %v1022 = vld [vmem:[%s3 + $0x518] sm:$0xff]
    %v1023 = vld [vmem:[%s3 + $0x520] sm:$0xff]
    %v1024 = vld [vmem:[%s3 + $0x528] sm:$0xff]
    %v1025 = vld [vmem:[%s3 + $0x530] sm:$0xff]
    %v1026 = vld [vmem:[%s3 + $0x538] sm:$0xff]
    %v1027 = vld [vmem:[%s3 + $0x540] sm:$0xff]
    %v1028 = vld [vmem:[%s3 + $0x548] sm:$0xff]
    %v1029 = vld [vmem:[%s3 + $0x550] sm:$0xff]
    %v1030 = vld [vmem:[%s3 + $0x558] sm:$0xff]
    %v1031 = vld [vmem:[%s3 + $0x560] sm:$0xff]
    %v1032 = vld [vmem:[%s3 + $0x568] sm:$0xff]
    %v1033 = vld [vmem:[%s3 + $0x570] sm:$0xff]
    %v1034 = vld [vmem:[%s3 + $0x578] sm:$0xff]
    %v1035 = vld [vmem:[%s3 + $0x580] sm:$0xff]
    %v1036 = vld [vmem:[%s3 + $0x588] sm:$0xff]
    %v1037 = vld [vmem:[%s3 + $0x590] sm:$0xff]
    %v1038 = vld [vmem:[%s3 + $0x598] sm:$0xff]
    %v1039 = vld [vmem:[%s3 + $0x5a0] sm:$0xff]
    %v1040 = vld [vmem:[%s3 + $0x5a8] sm:$0xff]
    %v1041 = vld [vmem:[%s3 + $0x5b0] sm:$0xff]
    %v1042 = vld [vmem:[%s3 + $0x5b8] sm:$0xff]
    %v1043 = vld [vmem:[%s3 + $0x5c0] sm:$0xff]
    %v1044 = vld [vmem:[%s3 + $0x5c8] sm:$0xff]
    %v1045 = vld [vmem:[%s3 + $0x5d0] sm:$0xff]
    %v1046 = vld [vmem:[%s3 + $0x5d8] sm:$0xff]
    %v1047 = vld [vmem:[%s3 + $0x5e0] sm:$0xff]
    %v1048 = vld [vmem:[%s3 + $0x5e8] sm:$0xff]
    %v1049 = vld [vmem:[%s3 + $0x5f0] sm:$0xff]
    %v1050 = vld [vmem:[%s3 + $0x5f8] sm:$0xff]
    %v1051 = vld [vmem:[%s3 + $0x600] sm:$0xff]
    %v1052 = vld [vmem:[%s3 + $0x608] sm:$0xff]
    %v1053 = vld [vmem:[%s3 + $0x610] sm:$0xff]
    %v1054 = vld [vmem:[%s3 + $0x618] sm:$0xff]
    %v1055 = vld [vmem:[%s3 + $0x620] sm:$0xff]
    %v1056 = vld [vmem:[%s3 + $0x628] sm:$0xff]
    %v1057 = vld [vmem:[%s3 + $0x630] sm:$0xff]
    %v1058 = vld [vmem:[%s3 + $0x638] sm:$0xff]
    %v1059 = vld [vmem:[%s3 + $0x640] sm:$0xff]
    %v1060 = vld [vmem:[%s3 + $0x648] sm:$0xff]
    %v1061 = vld [vmem:[%s3 + $0x650] sm:$0xff]
    %v1062 = vld [vmem:[%s3 + $0x658] sm:$0xff]
    %v1063 = vld [vmem:[%s3 + $0x660] sm:$0xff]
    %v1064 = vld [vmem:[%s3 + $0x668] sm:$0xff]
    %v1065 = vld [vmem:[%s3 + $0x670] sm:$0xff]
    %v1066 = vld [vmem:[%s3 + $0x678] sm:$0xff]
    %v1067 = vld [vmem:[%s3 + $0x680] sm:$0xff]
    %v1068 = vld [vmem:[%s3 + $0x688] sm:$0xff]
    %v1069 = vld [vmem:[%s3 + $0x690] sm:$0xff]
    %v1070 = vld [vmem:[%s3 + $0x698] sm:$0xff]
    %v1071 = vld [vmem:[%s3 + $0x6a0] sm:$0xff]
    %v1072 = vld [vmem:[%s3 + $0x6a8] sm:$0xff]
    %v1073 = vld [vmem:[%s3 + $0x6b0] sm:$0xff]
    %v1074 = vld [vmem:[%s3 + $0x6b8] sm:$0xff]
    %v1075 = vld [vmem:[%s3 + $0x6c0] sm:$0xff]
    %v1076 = vld [vmem:[%s3 + $0x6c8] sm:$0xff]
    %v1077 = vld [vmem:[%s3 + $0x6d0] sm:$0xff]
    %v1078 = vld [vmem:[%s3 + $0x6d8] sm:$0xff]
    %v1079 = vld [vmem:[%s3 + $0x6e0] sm:$0xff]
    %v1080 = vld [vmem:[%s3 + $0x6e8] sm:$0xff]
    %v1081 = vld [vmem:[%s3 + $0x6f0] sm:$0xff]
    %v1082 = vld [vmem:[%s3 + $0x6f8] sm:$0xff]
    %v1083 = vld [vmem:[%s3 + $0x700] sm:$0xff]
    %v1084 = vld [vmem:[%s3 + $0x708] sm:$0xff]
    %v1085 = vld [vmem:[%s3 + $0x710] sm:$0xff]
    %v1086 = vld [vmem:[%s3 + $0x718] sm:$0xff]
    %v1087 = vld [vmem:[%s3 + $0x720] sm:$0xff]
    %v1088 = vld [vmem:[%s3 + $0x728] sm:$0xff]
    %v1089 = vld [vmem:[%s3 + $0x730] sm:$0xff]
    %v1090 = vld [vmem:[%s3 + $0x738] sm:$0xff]
    %v1091 = vld [vmem:[%s3 + $0x740] sm:$0xff]
    %v1092 = vld [vmem:[%s3 + $0x748] sm:$0xff]
    %v1093 = vld [vmem:[%s3 + $0x750] sm:$0xff]
    %v1094 = vld [vmem:[%s3 + $0x758] sm:$0xff]
    %v1095 = vld [vmem:[%s3 + $0x760] sm:$0xff]
    %v1096 = vld [vmem:[%s3 + $0x768] sm:$0xff]
    %v1097 = vld [vmem:[%s3 + $0x770] sm:$0xff]
    %v1098 = vld [vmem:[%s3 + $0x778] sm:$0xff]
    %v1099 = vld [vmem:[%s3 + $0x780] sm:$0xff]
    %v1100 = vld [vmem:[%s3 + $0x788] sm:$0xff]
    %v1101 = vld [vmem:[%s3 + $0x790] sm:$0xff]
    %v1102 = vld [vmem:[%s3 + $0x798] sm:$0xff]
    %v1103 = vld [vmem:[%s3 + $0x7a0] sm:$0xff]
    %v1104 = vld [vmem:[%s3 + $0x7a8] sm:$0xff]
    %v1105 = vld [vmem:[%s3 + $0x7b0] sm:$0xff]
    %v1106 = vld [vmem:[%s3 + $0x7b8] sm:$0xff]
    %v1107 = vld [vmem:[%s3 + $0x7c0] sm:$0xff]
    %v1108 = vld [vmem:[%s3 + $0x7c8] sm:$0xff]
    %v1109 = vld [vmem:[%s3 + $0x7d0] sm:$0xff]
    %v1110 = vld [vmem:[%s3 + $0x7d8] sm:$0xff]
    %v1111 = vld [vmem:[%s3 + $0x7e0] sm:$0xff]
    %v1112 = vld [vmem:[%s3 + $0x7e8] sm:$0xff]
    %v1113 = vld [vmem:[%s3 + $0x7f0] sm:$0xff]
    %v1114 = vld [vmem:[%s3 + $0x7f8] sm:$0xff]
    %v1115 = vld [vmem:[%s4] sm:$0x1]
    %v1117 = vlaneseq
    %v1118 = vshrl.u32 %v1117, 7
    %v1119 = vsub.s32 0, %v1118
    %v1120 = vrot.slane %v1115, %v1119
    %1122 = vmatprep.subr.mxu0 0.0
    %1123 = vmatpush1.msra.mxu0 %v859
    %1124 = vmatprep.subr.mxu0 0.0
    %1125 = vmatpush1.msra.mxu0 %v860
    %1126 = vmatprep.subr.mxu0 0.0
    %1127 = vmatpush1.msra.mxu0 %v861
    %1128 = vmatprep.subr.mxu0 0.0
    %1129 = vmatpush1.msra.mxu0 %v862
    %1130 = vmatprep.subr.mxu0 0.0
    %1131 = vmatpush1.msra.mxu0 %v863
    %1132 = vmatprep.subr.mxu0 0.0
    %1133 = vmatpush1.msra.mxu0 %v864
    %1134 = vmatprep.subr.mxu0 0.0
    %1135 = vmatpush1.msra.mxu0 %v865
    %1136 = vmatprep.subr.mxu0 0.0
    %1137 = vmatpush1.msra.mxu0 %v866
    %1138 = vmatprep.subr.mxu0 0.0
    %1139 = vmatpush1.msra.mxu0 %v867
    %1140 = vmatprep.subr.mxu0 0.0
    %1141 = vmatpush1.msra.mxu0 %v868
    %1142 = vmatprep.subr.mxu0 0.0
    %1143 = vmatpush1.msra.mxu0 %v869
    %1144 = vmatprep.subr.mxu0 0.0
    %1145 = vmatpush1.msra.mxu0 %v870
    %1146 = vmatprep.subr.mxu0 0.0
    %1147 = vmatpush1.msra.mxu0 %v871
    %1148 = vmatprep.subr.mxu0 0.0
    %1149 = vmatpush1.msra.mxu0 %v872
    %1150 = vmatprep.subr.mxu0 0.0
    %1151 = vmatpush1.msra.mxu0 %v873
    %1152 = vmatprep.subr.mxu0 0.0
    %1153 = vmatpush1.msra.mxu0 %v874
    %1154 = vmatprep.subr.mxu0 0.0
    %1155 = vmatpush1.msra.mxu0 %v875
    %1156 = vmatprep.subr.mxu0 0.0
    %1157 = vmatpush1.msra.mxu0 %v876
    %1158 = vmatprep.subr.mxu0 0.0
    %1159 = vmatpush1.msra.mxu0 %v877
    %1160 = vmatprep.subr.mxu0 0.0
    %1161 = vmatpush1.msra.mxu0 %v878
    %1162 = vmatprep.subr.mxu0 0.0
    %1163 = vmatpush1.msra.mxu0 %v879
    %1164 = vmatprep.subr.mxu0 0.0
    %1165 = vmatpush1.msra.mxu0 %v880
    %1166 = vmatprep.subr.mxu0 0.0
    %1167 = vmatpush1.msra.mxu0 %v881
    %1168 = vmatprep.subr.mxu0 0.0
    %1169 = vmatpush1.msra.mxu0 %v882
    %1170 = vmatprep.subr.mxu0 0.0
    %1171 = vmatpush1.msra.mxu0 %v883
    %1172 = vmatprep.subr.mxu0 0.0
    %1173 = vmatpush1.msra.mxu0 %v884
    %1174 = vmatprep.subr.mxu0 0.0
    %1175 = vmatpush1.msra.mxu0 %v885
    %1176 = vmatprep.subr.mxu0 0.0
    %1177 = vmatpush1.msra.mxu0 %v886
    %1178 = vmatprep.subr.mxu0 0.0
    %1179 = vmatpush1.msra.mxu0 %v887
    %1180 = vmatprep.subr.mxu0 0.0
    %1181 = vmatpush1.msra.mxu0 %v888
    %1182 = vmatprep.subr.mxu0 0.0
    %1183 = vmatpush1.msra.mxu0 %v889
    %1184 = vmatprep.subr.mxu0 0.0
    %1185 = vmatpush1.msra.mxu0 %v890
    %1186 = vmatprep.mubr.f32.mxu0 %v828
    %1187 = vmatmul.mubr.f32.gmra.mrb[0].mxu0 %v827
    %v1188 = vpop.f32.mrb[0].mxu0
    %v1189 = vadd.f32 %v1120, %v1188
    %v1190 = vpop.f32.mrb[0].mxu0
    %1191 = vmatprep.mubr.f32.mxu0 %v844
    %1192 = vmatmul.mubr.f32.gmra.mrb[0].mxu0 %v843
    %v1193 = vpop.f32.mrb[0].mxu0
    %v1194 = vadd.f32 %v1120, %v1193
    %v1195 = vpop.f32.mrb[0].mxu0
    %1196 = vdwg.mxu0
    %1197 = vmatprep.subr.mxu0 0.0
    %1198 = vmatpush1.msra.mxu0 %v891
    %1199 = vmatprep.subr.mxu0 0.0
    %1200 = vmatpush1.msra.mxu0 %v892
    %1201 = vmatprep.subr.mxu0 0.0
    %1202 = vmatpush1.msra.mxu0 %v893
    %1203 = vmatprep.subr.mxu0 0.0
    %1204 = vmatpush1.msra.mxu0 %v894
    %1205 = vmatprep.subr.mxu0 0.0
    %1206 = vmatpush1.msra.mxu0 %v895
    %1207 = vmatprep.subr.mxu0 0.0
    %1208 = vmatpush1.msra.mxu0 %v896
    %1209 = vmatprep.subr.mxu0 0.0
    %1210 = vmatpush1.msra.mxu0 %v897
    %1211 = vmatprep.subr.mxu0 0.0
    %1212 = vmatpush1.msra.mxu0 %v898
    %1213 = vmatprep.subr.mxu0 0.0
    %1214 = vmatpush1.msra.mxu0 %v899
    %1215 = vmatprep.subr.mxu0 0.0
    %1216 = vmatpush1.msra.mxu0 %v900
    %1217 = vmatprep.subr.mxu0 0.0
    %1218 = vmatpush1.msra.mxu0 %v901
    %1219 = vmatprep.subr.mxu0 0.0
    %1220 = vmatpush1.msra.mxu0 %v902
    %1221 = vmatprep.subr.mxu0 0.0
    %1222 = vmatpush1.msra.mxu0 %v903
    %1223 = vmatprep.subr.mxu0 0.0
    %1224 = vmatpush1.msra.mxu0 %v904
    %1225 = vmatprep.subr.mxu0 0.0
    %1226 = vmatpush1.msra.mxu0 %v905
    %1227 = vmatprep.subr.mxu0 0.0
    %1228 = vmatpush1.msra.mxu0 %v906
    %1229 = vmatprep.subr.mxu0 0.0
    %1230 = vmatpush1.msra.mxu0 %v907
    %1231 = vmatprep.subr.mxu0 0.0
    %1232 = vmatpush1.msra.mxu0 %v908
    %1233 = vmatprep.subr.mxu0 0.0
    %1234 = vmatpush1.msra.mxu0 %v909
    %1235 = vmatprep.subr.mxu0 0.0
    %1236 = vmatpush1.msra.mxu0 %v910
    %1237 = vmatprep.subr.mxu0 0.0
    %1238 = vmatpush1.msra.mxu0 %v911
    %1239 = vmatprep.subr.mxu0 0.0
    %1240 = vmatpush1.msra.mxu0 %v912
    %1241 = vmatprep.subr.mxu0 0.0
    %1242 = vmatpush1.msra.mxu0 %v913
    %1243 = vmatprep.subr.mxu0 0.0
    %1244 = vmatpush1.msra.mxu0 %v914
    %1245 = vmatprep.subr.mxu0 0.0
    %1246 = vmatpush1.msra.mxu0 %v915
    %1247 = vmatprep.subr.mxu0 0.0
    %1248 = vmatpush1.msra.mxu0 %v916
    %1249 = vmatprep.subr.mxu0 0.0
    %1250 = vmatpush1.msra.mxu0 %v917
    %1251 = vmatprep.subr.mxu0 0.0
    %1252 = vmatpush1.msra.mxu0 %v918
    %1253 = vmatprep.subr.mxu0 0.0
    %1254 = vmatpush1.msra.mxu0 %v919
    %1255 = vmatprep.subr.mxu0 0.0
    %1256 = vmatpush1.msra.mxu0 %v920
    %1257 = vmatprep.subr.mxu0 0.0
    %1258 = vmatpush1.msra.mxu0 %v921
    %1259 = vmatprep.subr.mxu0 0.0
    %1260 = vmatpush1.msra.mxu0 %v922
    %1261 = vmatprep.mubr.f32.mxu0 %v830
    %1262 = vmatmul.mubr.f32.gmra.mrb[0].mxu0 %v829
    %v1263 = vpop.f32.mrb[0].mxu0
    %v1264 = vadd.f32 %v1189, %v1263
    %v1265 = vpop.f32.mrb[0].mxu0
    %1266 = vmatprep.mubr.f32.mxu0 %v846
    %1267 = vmatmul.mubr.f32.gmra.mrb[0].mxu0 %v845
    %v1268 = vpop.f32.mrb[0].mxu0
    %v1269 = vadd.f32 %v1194, %v1268
    %v1270 = vpop.f32.mrb[0].mxu0
    %1271 = vdwg.mxu0
    %1272 = vmatprep.subr.mxu0 0.0
    %1273 = vmatpush1.msra.mxu0 %v923
    %1274 = vmatprep.subr.mxu0 0.0
    %1275 = vmatpush1.msra.mxu0 %v924
    %1276 = vmatprep.subr.mxu0 0.0
    %1277 = vmatpush1.msra.mxu0 %v925
    %1278 = vmatprep.subr.mxu0 0.0
    %1279 = vmatpush1.msra.mxu0 %v926
    %1280 = vmatprep.subr.mxu0 0.0
    %1281 = vmatpush1.msra.mxu0 %v927
    %1282 = vmatprep.subr.mxu0 0.0
    %1283 = vmatpush1.msra.mxu0 %v928
    %1284 = vmatprep.subr.mxu0 0.0
    %1285 = vmatpush1.msra.mxu0 %v929
    %1286 = vmatprep.subr.mxu0 0.0
    %1287 = vmatpush1.msra.mxu0 %v930
    %1288 = vmatprep.subr.mxu0 0.0
    %1289 = vmatpush1.msra.mxu0 %v931
    %1290 = vmatprep.subr.mxu0 0.0
    %1291 = vmatpush1.msra.mxu0 %v932
    %1292 = vmatprep.subr.mxu0 0.0
    %1293 = vmatpush1.msra.mxu0 %v933
    %1294 = vmatprep.subr.mxu0 0.0
    %1295 = vmatpush1.msra.mxu0 %v934
    %1296 = vmatprep.subr.mxu0 0.0
    %1297 = vmatpush1.msra.mxu0 %v935
    %1298 = vmatprep.subr.mxu0 0.0
    %1299 = vmatpush1.msra.mxu0 %v936
    %1300 = vmatprep.subr.mxu0 0.0
    %1301 = vmatpush1.msra.mxu0 %v937
    %1302 = vmatprep.subr.mxu0 0.0
    %1303 = vmatpush1.msra.mxu0 %v938
    %1304 = vmatprep.subr.mxu0 0.0
    %1305 = vmatpush1.msra.mxu0 %v939
    %1306 = vmatprep.subr.mxu0 0.0
    %1307 = vmatpush1.msra.mxu0 %v940
    %1308 = vmatprep.subr.mxu0 0.0
    %1309 = vmatpush1.msra.mxu0 %v941
    %1310 = vmatprep.subr.mxu0 0.0
    %1311 = vmatpush1.msra.mxu0 %v942
    %1312 = vmatprep.subr.mxu0 0.0
    %1313 = vmatpush1.msra.mxu0 %v943
    %1314 = vmatprep.subr.mxu0 0.0
    %1315 = vmatpush1.msra.mxu0 %v944
    %1316 = vmatprep.subr.mxu0 0.0
    %1317 = vmatpush1.msra.mxu0 %v945
    %1318 = vmatprep.subr.mxu0 0.0
    %1319 = vmatpush1.msra.mxu0 %v946
    %1320 = vmatprep.subr.mxu0 0.0
    %1321 = vmatpush1.msra.mxu0 %v947
    %1322 = vmatprep.subr.mxu0 0.0
    %1323 = vmatpush1.msra.mxu0 %v948
    %1324 = vmatprep.subr.mxu0 0.0
    %1325 = vmatpush1.msra.mxu0 %v949
    %1326 = vmatprep.subr.mxu0 0.0
    %1327 = vmatpush1.msra.mxu0 %v950
    %1328 = vmatprep.subr.mxu0 0.0
    %1329 = vmatpush1.msra.mxu0 %v951
    %1330 = vmatprep.subr.mxu0 0.0
    %1331 = vmatpush1.msra.mxu0 %v952
    %1332 = vmatprep.subr.mxu0 0.0
    %1333 = vmatpush1.msra.mxu0 %v953
    %1334 = vmatprep.subr.mxu0 0.0
    %1335 = vmatpush1.msra.mxu0 %v954
    %1336 = vmatprep.mubr.f32.mxu0 %v832
    %1337 = vmatmul.mubr.f32.gmra.mrb[0].mxu0 %v831
    %v1338 = vpop.f32.mrb[0].mxu0
    %v1339 = vadd.f32 %v1264, %v1338
    %v1340 = vpop.f32.mrb[0].mxu0
    %1341 = vmatprep.mubr.f32.mxu0 %v848
    %1342 = vmatmul.mubr.f32.gmra.mrb[0].mxu0 %v847
    %v1343 = vpop.f32.mrb[0].mxu0
    %v1344 = vadd.f32 %v1269, %v1343
    %v1345 = vpop.f32.mrb[0].mxu0
    %1346 = vdwg.mxu0
    %1347 = vmatprep.subr.mxu0 0.0
    %1348 = vmatpush1.msra.mxu0 %v955
    %1349 = vmatprep.subr.mxu0 0.0
    %1350 = vmatpush1.msra.mxu0 %v956
    %1351 = vmatprep.subr.mxu0 0.0
    %1352 = vmatpush1.msra.mxu0 %v957
    %1353 = vmatprep.subr.mxu0 0.0
    %1354 = vmatpush1.msra.mxu0 %v958
    %1355 = vmatprep.subr.mxu0 0.0
    %1356 = vmatpush1.msra.mxu0 %v959
    %1357 = vmatprep.subr.mxu0 0.0
    %1358 = vmatpush1.msra.mxu0 %v960
    %1359 = vmatprep.subr.mxu0 0.0
    %1360 = vmatpush1.msra.mxu0 %v961
    %1361 = vmatprep.subr.mxu0 0.0
    %1362 = vmatpush1.msra.mxu0 %v962
    %1363 = vmatprep.subr.mxu0 0.0
    %1364 = vmatpush1.msra.mxu0 %v963
    %1365 = vmatprep.subr.mxu0 0.0
    %1366 = vmatpush1.msra.mxu0 %v964
    %1367 = vmatprep.subr.mxu0 0.0
    %1368 = vmatpush1.msra.mxu0 %v965
    %1369 = vmatprep.subr.mxu0 0.0
    %1370 = vmatpush1.msra.mxu0 %v966
    %1371 = vmatprep.subr.mxu0 0.0
    %1372 = vmatpush1.msra.mxu0 %v967
    %1373 = vmatprep.subr.mxu0 0.0
    %1374 = vmatpush1.msra.mxu0 %v968
    %1375 = vmatprep.subr.mxu0 0.0
    %1376 = vmatpush1.msra.mxu0 %v969
    %1377 = vmatprep.subr.mxu0 0.0
    %1378 = vmatpush1.msra.mxu0 %v970
    %1379 = vmatprep.subr.mxu0 0.0
    %1380 = vmatpush1.msra.mxu0 %v971
    %1381 = vmatprep.subr.mxu0 0.0
    %1382 = vmatpush1.msra.mxu0 %v972
    %1383 = vmatprep.subr.mxu0 0.0
    %1384 = vmatpush1.msra.mxu0 %v973
    %1385 = vmatprep.subr.mxu0 0.0
    %1386 = vmatpush1.msra.mxu0 %v974
    %1387 = vmatprep.subr.mxu0 0.0
    %1388 = vmatpush1.msra.mxu0 %v975
    %1389 = vmatprep.subr.mxu0 0.0
    %1390 = vmatpush1.msra.mxu0 %v976
    %1391 = vmatprep.subr.mxu0 0.0
    %1392 = vmatpush1.msra.mxu0 %v977
    %1393 = vmatprep.subr.mxu0 0.0
    %1394 = vmatpush1.msra.mxu0 %v978
    %1395 = vmatprep.subr.mxu0 0.0
    %1396 = vmatpush1.msra.mxu0 %v979
    %1397 = vmatprep.subr.mxu0 0.0
    %1398 = vmatpush1.msra.mxu0 %v980
    %1399 = vmatprep.subr.mxu0 0.0
    %1400 = vmatpush1.msra.mxu0 %v981
    %1401 = vmatprep.subr.mxu0 0.0
    %1402 = vmatpush1.msra.mxu0 %v982
    %1403 = vmatprep.subr.mxu0 0.0
    %1404 = vmatpush1.msra.mxu0 %v983
    %1405 = vmatprep.subr.mxu0 0.0
    %1406 = vmatpush1.msra.mxu0 %v984
    %1407 = vmatprep.subr.mxu0 0.0
    %1408 = vmatpush1.msra.mxu0 %v985
    %1409 = vmatprep.subr.mxu0 0.0
    %1410 = vmatpush1.msra.mxu0 %v986
    %1411 = vmatprep.mubr.f32.mxu0 %v834
    %1412 = vmatmul.mubr.f32.gmra.mrb[0].mxu0 %v833
    %v1413 = vpop.f32.mrb[0].mxu0
    %v1414 = vadd.f32 %v1339, %v1413
    %v1415 = vpop.f32.mrb[0].mxu0
    %1416 = vmatprep.mubr.f32.mxu0 %v850
    %1417 = vmatmul.mubr.f32.gmra.mrb[0].mxu0 %v849
    %v1418 = vpop.f32.mrb[0].mxu0
    %v1419 = vadd.f32 %v1344, %v1418
    %v1420 = vpop.f32.mrb[0].mxu0
    %1421 = vdwg.mxu0
    %1422 = vmatprep.subr.mxu0 0.0
    %1423 = vmatpush1.msra.mxu0 %v987
    %1424 = vmatprep.subr.mxu0 0.0
    %1425 = vmatpush1.msra.mxu0 %v988
    %1426 = vmatprep.subr.mxu0 0.0
    %1427 = vmatpush1.msra.mxu0 %v989
    %1428 = vmatprep.subr.mxu0 0.0
    %1429 = vmatpush1.msra.mxu0 %v990
    %1430 = vmatprep.subr.mxu0 0.0
    %1431 = vmatpush1.msra.mxu0 %v991
    %1432 = vmatprep.subr.mxu0 0.0
    %1433 = vmatpush1.msra.mxu0 %v992
    %1434 = vmatprep.subr.mxu0 0.0
    %1435 = vmatpush1.msra.mxu0 %v993
    %1436 = vmatprep.subr.mxu0 0.0
    %1437 = vmatpush1.msra.mxu0 %v994
    %1438 = vmatprep.subr.mxu0 0.0
    %1439 = vmatpush1.msra.mxu0 %v995
    %1440 = vmatprep.subr.mxu0 0.0
    %1441 = vmatpush1.msra.mxu0 %v996
    %1442 = vmatprep.subr.mxu0 0.0
    %1443 = vmatpush1.msra.mxu0 %v997
    %1444 = vmatprep.subr.mxu0 0.0
    %1445 = vmatpush1.msra.mxu0 %v998
    %1446 = vmatprep.subr.mxu0 0.0
    %1447 = vmatpush1.msra.mxu0 %v999
    %1448 = vmatprep.subr.mxu0 0.0
    %1449 = vmatpush1.msra.mxu0 %v1000
    %1450 = vmatprep.subr.mxu0 0.0
    %1451 = vmatpush1.msra.mxu0 %v1001
    %1452 = vmatprep.subr.mxu0 0.0
    %1453 = vmatpush1.msra.mxu0 %v1002
    %1454 = vmatprep.subr.mxu0 0.0
    %1455 = vmatpush1.msra.mxu0 %v1003
    %1456 = vmatprep.subr.mxu0 0.0
    %1457 = vmatpush1.msra.mxu0 %v1004
    %1458 = vmatprep.subr.mxu0 0.0
    %1459 = vmatpush1.msra.mxu0 %v1005
    %1460 = vmatprep.subr.mxu0 0.0
    %1461 = vmatpush1.msra.mxu0 %v1006
    %1462 = vmatprep.subr.mxu0 0.0
    %1463 = vmatpush1.msra.mxu0 %v1007
    %1464 = vmatprep.subr.mxu0 0.0
    %1465 = vmatpush1.msra.mxu0 %v1008
    %1466 = vmatprep.subr.mxu0 0.0
    %1467 = vmatpush1.msra.mxu0 %v1009
    %1468 = vmatprep.subr.mxu0 0.0
    %1469 = vmatpush1.msra.mxu0 %v1010
    %1470 = vmatprep.subr.mxu0 0.0
    %1471 = vmatpush1.msra.mxu0 %v1011
    %1472 = vmatprep.subr.mxu0 0.0
    %1473 = vmatpush1.msra.mxu0 %v1012
    %1474 = vmatprep.subr.mxu0 0.0
    %1475 = vmatpush1.msra.mxu0 %v1013
    %1476 = vmatprep.subr.mxu0 0.0
    %1477 = vmatpush1.msra.mxu0 %v1014
    %1478 = vmatprep.subr.mxu0 0.0
    %1479 = vmatpush1.msra.mxu0 %v1015
    %1480 = vmatprep.subr.mxu0 0.0
    %1481 = vmatpush1.msra.mxu0 %v1016
    %1482 = vmatprep.subr.mxu0 0.0
    %1483 = vmatpush1.msra.mxu0 %v1017
    %1484 = vmatprep.subr.mxu0 0.0
    %1485 = vmatpush1.msra.mxu0 %v1018
    %1486 = vmatprep.mubr.f32.mxu0 %v836
    %1487 = vmatmul.mubr.f32.gmra.mrb[0].mxu0 %v835
    %v1488 = vpop.f32.mrb[0].mxu0
    %v1489 = vadd.f32 %v1414, %v1488
    %v1490 = vpop.f32.mrb[0].mxu0
    %1491 = vmatprep.mubr.f32.mxu0 %v852
    %1492 = vmatmul.mubr.f32.gmra.mrb[0].mxu0 %v851
    %v1493 = vpop.f32.mrb[0].mxu0
    %v1494 = vadd.f32 %v1419, %v1493
    %v1495 = vpop.f32.mrb[0].mxu0
    %1496 = vdwg.mxu0
    %1497 = vmatprep.subr.mxu0 0.0
    %1498 = vmatpush1.msra.mxu0 %v1019
    %1499 = vmatprep.subr.mxu0 0.0
    %1500 = vmatpush1.msra.mxu0 %v1020
    %1501 = vmatprep.subr.mxu0 0.0
    %1502 = vmatpush1.msra.mxu0 %v1021
    %1503 = vmatprep.subr.mxu0 0.0
    %1504 = vmatpush1.msra.mxu0 %v1022
    %1505 = vmatprep.subr.mxu0 0.0
    %1506 = vmatpush1.msra.mxu0 %v1023
    %1507 = vmatprep.subr.mxu0 0.0
    %1508 = vmatpush1.msra.mxu0 %v1024
    %1509 = vmatprep.subr.mxu0 0.0
    %1510 = vmatpush1.msra.mxu0 %v1025
    %1511 = vmatprep.subr.mxu0 0.0
    %1512 = vmatpush1.msra.mxu0 %v1026
    %1513 = vmatprep.subr.mxu0 0.0
    %1514 = vmatpush1.msra.mxu0 %v1027
    %1515 = vmatprep.subr.mxu0 0.0
    %1516 = vmatpush1.msra.mxu0 %v1028
    %1517 = vmatprep.subr.mxu0 0.0
    %1518 = vmatpush1.msra.mxu0 %v1029
    %1519 = vmatprep.subr.mxu0 0.0
    %1520 = vmatpush1.msra.mxu0 %v1030
    %1521 = vmatprep.subr.mxu0 0.0
    %1522 = vmatpush1.msra.mxu0 %v1031
    %1523 = vmatprep.subr.mxu0 0.0
    %1524 = vmatpush1.msra.mxu0 %v1032
    %1525 = vmatprep.subr.mxu0 0.0
    %1526 = vmatpush1.msra.mxu0 %v1033
    %1527 = vmatprep.subr.mxu0 0.0
    %1528 = vmatpush1.msra.mxu0 %v1034
    %1529 = vmatprep.subr.mxu0 0.0
    %1530 = vmatpush1.msra.mxu0 %v1035
    %1531 = vmatprep.subr.mxu0 0.0
    %1532 = vmatpush1.msra.mxu0 %v1036
    %1533 = vmatprep.subr.mxu0 0.0
    %1534 = vmatpush1.msra.mxu0 %v1037
    %1535 = vmatprep.subr.mxu0 0.0
    %1536 = vmatpush1.msra.mxu0 %v1038
    %1537 = vmatprep.subr.mxu0 0.0
    %1538 = vmatpush1.msra.mxu0 %v1039
    %1539 = vmatprep.subr.mxu0 0.0
    %1540 = vmatpush1.msra.mxu0 %v1040
    %1541 = vmatprep.subr.mxu0 0.0
    %1542 = vmatpush1.msra.mxu0 %v1041
    %1543 = vmatprep.subr.mxu0 0.0
    %1544 = vmatpush1.msra.mxu0 %v1042
    %1545 = vmatprep.subr.mxu0 0.0
    %1546 = vmatpush1.msra.mxu0 %v1043
    %1547 = vmatprep.subr.mxu0 0.0
    %1548 = vmatpush1.msra.mxu0 %v1044
    %1549 = vmatprep.subr.mxu0 0.0
    %1550 = vmatpush1.msra.mxu0 %v1045
    %1551 = vmatprep.subr.mxu0 0.0
    %1552 = vmatpush1.msra.mxu0 %v1046
    %1553 = vmatprep.subr.mxu0 0.0
    %1554 = vmatpush1.msra.mxu0 %v1047
    %1555 = vmatprep.subr.mxu0 0.0
    %1556 = vmatpush1.msra.mxu0 %v1048
    %1557 = vmatprep.subr.mxu0 0.0
    %1558 = vmatpush1.msra.mxu0 %v1049
    %1559 = vmatprep.subr.mxu0 0.0
    %1560 = vmatpush1.msra.mxu0 %v1050
    %1561 = vmatprep.mubr.f32.mxu0 %v838
    %1562 = vmatmul.mubr.f32.gmra.mrb[0].mxu0 %v837
    %v1563 = vpop.f32.mrb[0].mxu0
    %v1564 = vadd.f32 %v1489, %v1563
    %v1565 = vpop.f32.mrb[0].mxu0
    %1566 = vmatprep.mubr.f32.mxu0 %v854
    %1567 = vmatmul.mubr.f32.gmra.mrb[0].mxu0 %v853
    %v1568 = vpop.f32.mrb[0].mxu0
    %v1569 = vadd.f32 %v1494, %v1568
    %v1570 = vpop.f32.mrb[0].mxu0
    %1571 = vdwg.mxu0
    %1572 = vmatprep.subr.mxu0 0.0
    %1573 = vmatpush1.msra.mxu0 %v1051
    %1574 = vmatprep.subr.mxu0 0.0
    %1575 = vmatpush1.msra.mxu0 %v1052
    %1576 = vmatprep.subr.mxu0 0.0
    %1577 = vmatpush1.msra.mxu0 %v1053
    %1578 = vmatprep.subr.mxu0 0.0
    %1579 = vmatpush1.msra.mxu0 %v1054
    %1580 = vmatprep.subr.mxu0 0.0
    %1581 = vmatpush1.msra.mxu0 %v1055
    %1582 = vmatprep.subr.mxu0 0.0
    %1583 = vmatpush1.msra.mxu0 %v1056
    %1584 = vmatprep.subr.mxu0 0.0
    %1585 = vmatpush1.msra.mxu0 %v1057
    %1586 = vmatprep.subr.mxu0 0.0
    %1587 = vmatpush1.msra.mxu0 %v1058
    %1588 = vmatprep.subr.mxu0 0.0
    %1589 = vmatpush1.msra.mxu0 %v1059
    %1590 = vmatprep.subr.mxu0 0.0
    %1591 = vmatpush1.msra.mxu0 %v1060
    %1592 = vmatprep.subr.mxu0 0.0
    %1593 = vmatpush1.msra.mxu0 %v1061
    %1594 = vmatprep.subr.mxu0 0.0
    %1595 = vmatpush1.msra.mxu0 %v1062
    %1596 = vmatprep.subr.mxu0 0.0
    %1597 = vmatpush1.msra.mxu0 %v1063
    %1598 = vmatprep.subr.mxu0 0.0
    %1599 = vmatpush1.msra.mxu0 %v1064
    %1600 = vmatprep.subr.mxu0 0.0
    %1601 = vmatpush1.msra.mxu0 %v1065
    %1602 = vmatprep.subr.mxu0 0.0
    %1603 = vmatpush1.msra.mxu0 %v1066
    %1604 = vmatprep.subr.mxu0 0.0
    %1605 = vmatpush1.msra.mxu0 %v1067
    %1606 = vmatprep.subr.mxu0 0.0
    %1607 = vmatpush1.msra.mxu0 %v1068
    %1608 = vmatprep.subr.mxu0 0.0
    %1609 = vmatpush1.msra.mxu0 %v1069
    %1610 = vmatprep.subr.mxu0 0.0
    %1611 = vmatpush1.msra.mxu0 %v1070
    %1612 = vmatprep.subr.mxu0 0.0
    %1613 = vmatpush1.msra.mxu0 %v1071
    %1614 = vmatprep.subr.mxu0 0.0
    %1615 = vmatpush1.msra.mxu0 %v1072
    %1616 = vmatprep.subr.mxu0 0.0
    %1617 = vmatpush1.msra.mxu0 %v1073
    %1618 = vmatprep.subr.mxu0 0.0
    %1619 = vmatpush1.msra.mxu0 %v1074
    %1620 = vmatprep.subr.mxu0 0.0
    %1621 = vmatpush1.msra.mxu0 %v1075
    %1622 = vmatprep.subr.mxu0 0.0
    %1623 = vmatpush1.msra.mxu0 %v1076
    %1624 = vmatprep.subr.mxu0 0.0
    %1625 = vmatpush1.msra.mxu0 %v1077
    %1626 = vmatprep.subr.mxu0 0.0
    %1627 = vmatpush1.msra.mxu0 %v1078
    %1628 = vmatprep.subr.mxu0 0.0
    %1629 = vmatpush1.msra.mxu0 %v1079
    %1630 = vmatprep.subr.mxu0 0.0
    %1631 = vmatpush1.msra.mxu0 %v1080
    %1632 = vmatprep.subr.mxu0 0.0
    %1633 = vmatpush1.msra.mxu0 %v1081
    %1634 = vmatprep.subr.mxu0 0.0
    %1635 = vmatpush1.msra.mxu0 %v1082
    %1636 = vmatprep.mubr.f32.mxu0 %v840
    %1637 = vmatmul.mubr.f32.gmra.mrb[0].mxu0 %v839
    %v1638 = vpop.f32.mrb[0].mxu0
    %v1639 = vadd.f32 %v1564, %v1638
    %v1640 = vpop.f32.mrb[0].mxu0
    %1641 = vmatprep.mubr.f32.mxu0 %v856
    %1642 = vmatmul.mubr.f32.gmra.mrb[0].mxu0 %v855
    %v1643 = vpop.f32.mrb[0].mxu0
    %v1644 = vadd.f32 %v1569, %v1643
    %v1645 = vpop.f32.mrb[0].mxu0
    %1646 = vdwg.mxu0
    %1647 = vmatprep.subr.mxu0 0.0
    %1648 = vmatpush1.msra.mxu0 %v1083
    %1649 = vmatprep.subr.mxu0 0.0
    %1650 = vmatpush1.msra.mxu0 %v1084
    %1651 = vmatprep.subr.mxu0 0.0
    %1652 = vmatpush1.msra.mxu0 %v1085
    %1653 = vmatprep.subr.mxu0 0.0
    %1654 = vmatpush1.msra.mxu0 %v1086
    %1655 = vmatprep.subr.mxu0 0.0
    %1656 = vmatpush1.msra.mxu0 %v1087
    %1657 = vmatprep.subr.mxu0 0.0
    %1658 = vmatpush1.msra.mxu0 %v1088
    %1659 = vmatprep.subr.mxu0 0.0
    %1660 = vmatpush1.msra.mxu0 %v1089
    %1661 = vmatprep.subr.mxu0 0.0
    %1662 = vmatpush1.msra.mxu0 %v1090
    %1663 = vmatprep.subr.mxu0 0.0
    %1664 = vmatpush1.msra.mxu0 %v1091
    %1665 = vmatprep.subr.mxu0 0.0
    %1666 = vmatpush1.msra.mxu0 %v1092
    %1667 = vmatprep.subr.mxu0 0.0
    %1668 = vmatpush1.msra.mxu0 %v1093
    %1669 = vmatprep.subr.mxu0 0.0
    %1670 = vmatpush1.msra.mxu0 %v1094
    %1671 = vmatprep.subr.mxu0 0.0
    %1672 = vmatpush1.msra.mxu0 %v1095
    %1673 = vmatprep.subr.mxu0 0.0
    %1674 = vmatpush1.msra.mxu0 %v1096
    %1675 = vmatprep.subr.mxu0 0.0
    %1676 = vmatpush1.msra.mxu0 %v1097
    %1677 = vmatprep.subr.mxu0 0.0
    %1678 = vmatpush1.msra.mxu0 %v1098
    %1679 = vmatprep.subr.mxu0 0.0
    %1680 = vmatpush1.msra.mxu0 %v1099
    %1681 = vmatprep.subr.mxu0 0.0
    %1682 = vmatpush1.msra.mxu0 %v1100
    %1683 = vmatprep.subr.mxu0 0.0
    %1684 = vmatpush1.msra.mxu0 %v1101
    %1685 = vmatprep.subr.mxu0 0.0
    %1686 = vmatpush1.msra.mxu0 %v1102
    %1687 = vmatprep.subr.mxu0 0.0
    %1688 = vmatpush1.msra.mxu0 %v1103
    %1689 = vmatprep.subr.mxu0 0.0
    %1690 = vmatpush1.msra.mxu0 %v1104
    %1691 = vmatprep.subr.mxu0 0.0
    %1692 = vmatpush1.msra.mxu0 %v1105
    %1693 = vmatprep.subr.mxu0 0.0
    %1694 = vmatpush1.msra.mxu0 %v1106
    %1695 = vmatprep.subr.mxu0 0.0
    %1696 = vmatpush1.msra.mxu0 %v1107
    %1697 = vmatprep.subr.mxu0 0.0
    %1698 = vmatpush1.msra.mxu0 %v1108
    %1699 = vmatprep.subr.mxu0 0.0
    %1700 = vmatpush1.msra.mxu0 %v1109
    %1701 = vmatprep.subr.mxu0 0.0
    %1702 = vmatpush1.msra.mxu0 %v1110
    %1703 = vmatprep.subr.mxu0 0.0
    %1704 = vmatpush1.msra.mxu0 %v1111
    %1705 = vmatprep.subr.mxu0 0.0
    %1706 = vmatpush1.msra.mxu0 %v1112
    %1707 = vmatprep.subr.mxu0 0.0
    %1708 = vmatpush1.msra.mxu0 %v1113
    %1709 = vmatprep.subr.mxu0 0.0
    %1710 = vmatpush1.msra.mxu0 %v1114
    %1711 = vmatprep.mubr.f32.mxu0 %v842
    %1712 = vmatmul.mubr.f32.gmra.mrb[0].mxu0 %v841
    %v1713 = vpop.f32.mrb[0].mxu0
    %v1714 = vadd.f32 %v1639, %v1713
    %v1715 = vpop.f32.mrb[0].mxu0
    %1716 = vmatprep.mubr.f32.mxu0 %v858
    %1717 = vmatmul.mubr.f32.gmra.mrb[0].mxu0 %v857
    %v1718 = vpop.f32.mrb[0].mxu0
    %v1719 = vadd.f32 %v1644, %v1718
    %v1720 = vpop.f32.mrb[0].mxu0
    %1721 = vdwg.mxu0
    %v1722 = vadd.f32 %v21, %v1714
    %v1723 = vadd.f32 %v22, %v1719
    %v1724 = vsel %vm155, %v1722, 0.0
    %1725 = vadd.xlane.f32.xlu0 %v1724
    %v1726 = vpop.xlane.xlu0 %1725
    %v1727 = vrot.slane %v1726, 4
    %v1728 = vadd.f32 %v1726, %v1727
    %v1729 = vrot.slane %v1728, 2
    %v1730 = vadd.f32 %v1728, %v1729
    %v1731 = vrot.slane %v1730, 1
    %v1732 = vadd.f32 %v1730, %v1731
    %s1733 = vtos %v1732
    %v1734 = vrcp.pop 160.0
    %s1735 = vtos %v1734
    %s1736 = smul.f32 %s1733, %s1735
    %v1737 = vstv %s1736
    %v1738 = vsub.f32 %v1722, %v1737
    %v1739 = vmul.f32 %v1738, %v1738
    %v1740 = vsel %vm155, %v1739, 0.0
    %1741 = vadd.xlane.f32.xlu0 %v1740
    %v1742 = vpop.xlane.xlu0 %1741
    %v1743 = vrot.slane %v1742, 4
    %v1744 = vadd.f32 %v1742, %v1743
    %v1745 = vrot.slane %v1744, 2
    %v1746 = vadd.f32 %v1744, %v1745
    %v1747 = vrot.slane %v1746, 1
    %v1748 = vadd.f32 %v1746, %v1747
    %s1749 = vtos %v1748
    %v1750 = vrcp.pop 160.0
    %s1751 = vtos %v1750
    %s1752 = smul.f32 %s1749, %s1751
    %s1753 = sadd.f32 %s1752, 1e-05
    %v1754 = vstv %s1753
    %v1755 = vrsqrt.pop %v1754
    %s1756 = vtos %v1755
    %v1757 = vstv %s1756
    %v1758 = vmul.f32 %v1738, %v1757
    %1759 = vst.msk [vmem:[#allocation2] sm:$0xff] %vm155, %v1758
    %v1760 = vsel %vm155, %v1723, 0.0
    %1761 = vadd.xlane.f32.xlu0 %v1760
    %v1762 = vpop.xlane.xlu0 %1761
    %v1763 = vrot.slane %v1762, 4
    %v1764 = vadd.f32 %v1762, %v1763
    %v1765 = vrot.slane %v1764, 2
    %v1766 = vadd.f32 %v1764, %v1765
    %v1767 = vrot.slane %v1766, 1
    %v1768 = vadd.f32 %v1766, %v1767
    %s1769 = vtos %v1768
    %v1770 = vrcp.pop 160.0
    %s1771 = vtos %v1770
    %s1772 = smul.f32 %s1769, %s1771
    %v1773 = vstv %s1772
    %v1774 = vsub.f32 %v1723, %v1773
    %v1775 = vmul.f32 %v1774, %v1774
    %v1776 = vsel %vm155, %v1775, 0.0
    %1777 = vadd.xlane.f32.xlu0 %v1776
    %v1778 = vpop.xlane.xlu0 %1777
    %v1779 = vrot.slane %v1778, 4
    %v1780 = vadd.f32 %v1778, %v1779
    %v1781 = vrot.slane %v1780, 2
    %v1782 = vadd.f32 %v1780, %v1781
    %v1783 = vrot.slane %v1782, 1
    %v1784 = vadd.f32 %v1782, %v1783
    %s1785 = vtos %v1784
    %v1786 = vrcp.pop 160.0
    %s1787 = vtos %v1786
    %s1788 = smul.f32 %s1785, %s1787
    %s1789 = sadd.f32 %s1788, 1e-05
    %v1790 = vstv %s1789
    %v1791 = vrsqrt.pop %v1790
    %s1792 = vtos %v1791
    %v1793 = vstv %s1792
    %v1794 = vmul.f32 %v1774, %v1793
    %1795 = vst.msk [vmem:[#allocation2 + $0x8] sm:$0xff] %vm155, %v1794
    // Predicated region
    $region22: #{decoder_forward.13} parent=1 // pred_check
      _
    $region23: #{decoder_forward.13} parent=1 // pred_check_branch
      %1797 = sbr.rel (0) target = $region25
    $region24: #{decoder_forward.13} parent=1 // pred_region
      %s1799 = ssub.s32 256, 256
      %1800 = vsyncadd [#allocation3], %s1799
      %s1801 = sshll.u32 [#allocation2], 4
      %s1802 = int_to_ptr.vmem [resolvable:$true] %s1801
      %1807 = dma.vmem_to_hbm [thread:$0]  %s1802, 256, %s5, [#allocation3], 128, 128, 8
    $region25: #{decoder_forward.13} parent=1 // pred_fallthru
      _
    // Predicated region
    $region26: #{decoder_forward.13} parent=1 // pred_check
      _
    $region27: #{decoder_forward.13} parent=1 // pred_check_branch
      %1809 = sbr.rel (0) target = $region29
    $region28: #{decoder_forward.13} parent=1 // pred_region
      %1810 = dma.done [#allocation3], 256
    $region29: #{decoder_forward.13} parent=1 // pred_fallthru
      _
    %1811 = vsyncpa [#allocation3], 1

</llo_original>
